<compile_context>
chip_gen: v7x
topology: tpu7x:2x2x1
jax: 0.10.0
libtpu: 0.0.40
codegen_flags: <defaults>
</compile_context>

<pallas_src>
import jax
import jax.numpy as jnp
from jax.experimental import pallas as pl
from jax.experimental.pallas import tpu as pltpu

MULT_FACTOR = 256  # self.mult_factor in the PyTorch module


def _round_up(x, m):
    return (x + m - 1) // m * m


def build_norm_adj(edge_index, num_nodes):
    """Dense GCN normalization: D^{-1/2} (A + I) D^{-1/2}, A[dst, src] = 1 per edge.

    Matches torch_geometric GCNConv's gcn_norm (add_self_loops=True, improved=False,
    unit edge weights). NOTE: adds self loops unconditionally; if edge_index already
    contains self loops this double-counts them (fine for skeleton graphs).
    """
    src = edge_index[0]
    dst = edge_index[1]
    a = jnp.zeros((num_nodes, num_nodes), jnp.float32).at[dst, src].add(1.0)
    a = a + jnp.eye(num_nodes, dtype=jnp.float32)  # self loops
    deg = jnp.sum(a, axis=1)
    dinv = jnp.where(deg > 0, 1.0 / jnp.sqrt(deg), 0.0)
    return dinv[:, None] * a * dinv[None, :]


def vgcn_encoder_kernel(a_ref, x_ref, w1_ref, b1_ref, w2_ref, b2_ref,
                        wcat_ref, bcat_ref, out_ref):
    """One grid step = F frames stacked along the sublane (M) axis.

    a_ref  : [M, M]       bf16  block-diagonal I_F (x) A_norm  (M = F * n_pad)
    x_ref  : [M, in_pad]  bf16  stacked node features for F frames
    out_ref: [M, head_pad] f32  columns [0:C)=mu, [C:2C)=logstd
    All dots run with M rows (128/256), bf16 MXU operands, f32 accumulation.
    """
    a = a_ref[...]

    # conv1: relu(A @ (X @ W1) + b1)
    t1 = jnp.dot(x_ref[...], w1_ref[...], preferred_element_type=jnp.float32)
    h1 = jnp.dot(a, t1.astype(jnp.bfloat16), preferred_element_type=jnp.float32)
    h1 = jnp.maximum(h1 + b1_ref[...], 0.0)

    # conv2: relu(A @ (H1 @ W2) + b2)
    t2 = jnp.dot(h1.astype(jnp.bfloat16), w2_ref[...],
                 preferred_element_type=jnp.float32)
    h2 = jnp.dot(a, t2.astype(jnp.bfloat16), preferred_element_type=jnp.float32)
    h2 = jnp.maximum(h2 + b2_ref[...], 0.0)

    # fused heads (natural GCNConv order): A @ (H2 @ [W_mu|W_logstd]) + [b_mu|b_logstd]
    t3 = jnp.dot(h2.astype(jnp.bfloat16), wcat_ref[...],
                 preferred_element_type=jnp.float32)
    out_ref[...] = jnp.dot(a, t3.astype(jnp.bfloat16),
                           preferred_element_type=jnp.float32) + bcat_ref[...]


def init_params(key, in_channels, out_channels):
    """Deterministic glorot-uniform weights, zero biases (GCNConv reset_parameters)."""
    hidden = MULT_FACTOR * out_channels

    def glorot(k, shape):
        limit = jnp.sqrt(6.0 / (shape[0] + shape[1]))
        return jax.random.uniform(k, shape, jnp.float32, -limit, limit)

    k1, k2, k3, k4 = jax.random.split(key, 4)
    return {
        "w1": glorot(k1, (in_channels, hidden)),
        "b1": jnp.zeros((hidden,), jnp.float32),
        "w2": glorot(k2, (hidden, hidden)),
        "b2": jnp.zeros((hidden,), jnp.float32),
        "w_mu": glorot(k3, (hidden, out_channels)),
        "b_mu": jnp.zeros((out_channels,), jnp.float32),
        "w_logstd": glorot(k4, (hidden, out_channels)),
        "b_logstd": jnp.zeros((out_channels,), jnp.float32),
    }


def prepare(params, edge_index, num_nodes, out_channels, frames_per_step=8):
    """One-time prep (hoisted out of the per-forward path): block-diagonal normalized
    adjacency I_F (x) A, padded/bf16-cast weights, fused mu/logstd head.

    frames_per_step=8 gives M=256 tiles (v6e/v7x MXU height); use 4 for M=128 on v5e.
    """
    hidden = MULT_FACTOR * out_channels
    in_channels = params["w1"].shape[0]
    n_pad = _round_up(num_nodes, 8)
    in_pad = _round_up(in_channels, 16)            # bf16 sublane packing
    hid_pad = _round_up(hidden, 128)
    head_pad = _round_up(2 * out_channels, 128)
    f = frames_per_step
    m = f * n_pad

    a = build_norm_adj(edge_index, num_nodes)
    a_pad = jnp.zeros((n_pad, n_pad), jnp.float32).at[:num_nodes, :num_nodes].set(a)
    a_blk = jnp.kron(jnp.eye(f, dtype=jnp.float32), a_pad).astype(jnp.bfloat16)

    w1 = jnp.zeros((in_pad, hid_pad), jnp.bfloat16)
    w1 = w1.at[:in_channels, :hidden].set(params["w1"].astype(jnp.bfloat16))
    b1 = jnp.zeros((1, hid_pad), jnp.float32).at[0, :hidden].set(params["b1"])
    w2 = jnp.zeros((hid_pad, hid_pad), jnp.bfloat16)
    w2 = w2.at[:hidden, :hidden].set(params["w2"].astype(jnp.bfloat16))
    b2 = jnp.zeros((1, hid_pad), jnp.float32).at[0, :hidden].set(params["b2"])

    # fused head: columns [0:C) = mu, [C:2C) = logstd, padded once to 128 lanes
    wcat = jnp.zeros((hid_pad, head_pad), jnp.bfloat16)
    wcat = wcat.at[:hidden, :out_channels].set(params["w_mu"].astype(jnp.bfloat16))
    wcat = wcat.at[:hidden, out_channels:2 * out_channels].set(
        params["w_logstd"].astype(jnp.bfloat16))
    bcat = jnp.zeros((1, head_pad), jnp.float32)
    bcat = bcat.at[0, :out_channels].set(params["b_mu"])
    bcat = bcat.at[0, out_channels:2 * out_channels].set(params["b_logstd"])

    return dict(a_blk=a_blk, w1=w1, b1=b1, w2=w2, b2=b2, wcat=wcat, bcat=bcat,
                frames_per_step=f, n_pad=n_pad, in_pad=in_pad,
                hid_pad=hid_pad, head_pad=head_pad, m=m)


def variational_gcn_encoder(x, prep, num_nodes, out_channels):
    """x: [N, in_channels] or [B, N, in_channels] (B frames of the same skeleton)."""
    squeeze = (x.ndim == 2)
    if squeeze:
        x = x[None]
    b, _, c_in = x.shape
    f = prep["frames_per_step"]
    n_pad, in_pad = prep["n_pad"], prep["in_pad"]
    head_pad, m = prep["head_pad"], prep["m"]
    hid_pad = prep["hid_pad"]

    g = -(-b // f)            # grid steps (frame-tiles)
    b_pad = g * f

    # Pad nodes/channels/frames and stack F frames along the sublane axis.
    xp = jnp.zeros((b_pad, n_pad, in_pad), jnp.bfloat16)
    xp = xp.at[:b, :num_nodes, :c_in].set(x.astype(jnp.bfloat16))
    x_stack = xp.reshape(b_pad * n_pad, in_pad)      # [G*M, in_pad]

    def resident(shape):
        return pl.BlockSpec(shape, lambda i: (0,) * len(shape))

    out = pl.pallas_call(
        vgcn_encoder_kernel,
        out_shape=jax.ShapeDtypeStruct((b_pad * n_pad, head_pad), jnp.float32),
        grid=(g,),
        in_specs=[
            resident((m, m)),                             # block-diag A (bf16)
            pl.BlockSpec((m, in_pad), lambda i: (i, 0)),  # stacked X per frame-tile
            resident((in_pad, hid_pad)),                  # W1 (bf16)
            resident((1, hid_pad)),                       # b1
            resident((hid_pad, hid_pad)),                 # W2 (bf16)
            resident((1, hid_pad)),                       # b2
            resident((hid_pad, head_pad)),                # [W_mu | W_logstd]
            resident((1, head_pad)),                      # [b_mu | b_logstd]
        ],
        out_specs=pl.BlockSpec((m, head_pad), lambda i: (i, 0)),
        compiler_params=pltpu.CompilerParams(
            dimension_semantics=("parallel",)),  # v7x: frame-tiles split across both TCs
    )(prep["a_blk"], x_stack, prep["w1"], prep["b1"], prep["w2"], prep["b2"],
      prep["wcat"], prep["bcat"])

    out = out.reshape(b_pad, n_pad, head_pad)
    mu = out[:b, :num_nodes, :out_channels]
    logstd = out[:b, :num_nodes, out_channels:2 * out_channels]
    if squeeze:
        mu, logstd = mu[0], logstd[0]
    return mu, logstd


def reference_forward(x, edge_index, params):
    """Pure-JAX f32 reference with identical dense-GCN semantics."""
    a = build_norm_adj(edge_index, x.shape[-2])

    def one(xb):
        h = jax.nn.relu(a @ (xb @ params["w1"]) + params["b1"])
        h = jax.nn.relu(a @ (h @ params["w2"]) + params["b2"])
        mu = a @ (h @ params["w_mu"]) + params["b_mu"]
        ls = a @ (h @ params["w_logstd"]) + params["b_logstd"]
        return mu, ls

    if x.ndim == 2:
        return one(x)
    return jax.vmap(one)(x)


if __name__ == "__main__":
    in_channels = 4       # per-joint input features
    out_channels = 2      # latent dim; hidden = 256 * 2 = 512
    num_nodes = 26        # skeleton joints
    batch = 16            # frames sharing the same skeleton topology
    frames_per_step = 8   # M = 8 * 32 = 256 (v6e/v7x MXU height); use 4 on v5e

    key = jax.random.PRNGKey(0)
    kx, kp = jax.random.split(key)

    x = jax.random.normal(kx, (batch, num_nodes, in_channels), jnp.float32)

    # undirected chain graph 0-1-2-...-25 (both directions), like a skeleton path
    fwd = jnp.arange(num_nodes - 1)
    src = jnp.concatenate([fwd, fwd + 1])
    dst = jnp.concatenate([fwd + 1, fwd])
    edge_index = jnp.stack([src, dst]).astype(jnp.int32)  # [2, E]

    params = init_params(kp, in_channels, out_channels)
    prep = prepare(params, edge_index, num_nodes, out_channels,
                   frames_per_step=frames_per_step)

    mu, logstd = variational_gcn_encoder(x, prep, num_nodes, out_channels)
    jax.block_until_ready((mu, logstd))

    mu_ref, ls_ref = reference_forward(x, edge_index, params)
    assert mu.shape == (batch, num_nodes, out_channels)
    assert logstd.shape == (batch, num_nodes, out_channels)
    # bf16 MXU operands with f32 accumulation -> slightly looser tolerance than f32.
    assert jnp.allclose(mu, mu_ref, rtol=5e-2, atol=2e-2)
    assert jnp.allclose(logstd, ls_ref, rtol=5e-2, atol=2e-2)

    print("KERNEL_OK")
</pallas_src>

<mosaic_0001>
module attributes {stable_mosaic.version = 11 : i64} {
  func.func @vgcn_encoder_kernel(%arg0: i32, %arg1: memref<256x256xbf16, #tpu.memory_space<vmem>>, %arg2: memref<256x16xbf16, #tpu.memory_space<vmem>>, %arg3: memref<16x512xbf16, #tpu.memory_space<vmem>>, %arg4: memref<1x512xf32, #tpu.memory_space<vmem>>, %arg5: memref<512x512xbf16, #tpu.memory_space<vmem>>, %arg6: memref<1x512xf32, #tpu.memory_space<vmem>>, %arg7: memref<512x128xbf16, #tpu.memory_space<vmem>>, %arg8: memref<1x128xf32, #tpu.memory_space<vmem>>, %arg9: memref<256x128xf32, #tpu.memory_space<vmem>>) attributes {dimension_semantics = [#tpu.dimension_semantics<parallel>], iteration_bounds = array<i64: 2>, scalar_prefetch = 0 : i64, scratch_operands = 0 : i64, tpu.core_type = #tpu.core_type<tc>, window_params = [{pipeline_mode = #tpu.pipeline_mode<synchronous>, transform_indices = @transform_0, window_bounds = array<i64: 256, 256>}, {transform_indices = @transform_1, window_bounds = array<i64: 256, 16>}, {pipeline_mode = #tpu.pipeline_mode<synchronous>, transform_indices = @transform_2, window_bounds = array<i64: 16, 512>}, {pipeline_mode = #tpu.pipeline_mode<synchronous>, transform_indices = @transform_3, window_bounds = array<i64: 1, 512>}, {pipeline_mode = #tpu.pipeline_mode<synchronous>, transform_indices = @transform_4, window_bounds = array<i64: 512, 512>}, {pipeline_mode = #tpu.pipeline_mode<synchronous>, transform_indices = @transform_5, window_bounds = array<i64: 1, 512>}, {pipeline_mode = #tpu.pipeline_mode<synchronous>, transform_indices = @transform_6, window_bounds = array<i64: 512, 128>}, {pipeline_mode = #tpu.pipeline_mode<synchronous>, transform_indices = @transform_7, window_bounds = array<i64: 1, 128>}, {transform_indices = @transform_8, window_bounds = array<i64: 256, 128>}]} {
    %c0 = arith.constant 0 : index
    %c0_0 = arith.constant 0 : index
    %0 = vector.load %arg1[%c0, %c0_0] : memref<256x256xbf16, #tpu.memory_space<vmem>>, vector<256x256xbf16>
    %c0_1 = arith.constant 0 : index
    %c0_2 = arith.constant 0 : index
    %1 = vector.load %arg2[%c0_1, %c0_2] : memref<256x16xbf16, #tpu.memory_space<vmem>>, vector<256x16xbf16>
    %c0_3 = arith.constant 0 : index
    %c0_4 = arith.constant 0 : index
    %2 = vector.load %arg3[%c0_3, %c0_4] : memref<16x512xbf16, #tpu.memory_space<vmem>>, vector<16x512xbf16>
    %cst = arith.constant dense<0.000000e+00> : vector<256x512xf32>
    %3 = tpu.matmul %1, %2, %cst {dimension_numbers = #tpu.dot_dimension_numbers<[1], [0], [0], [1], [0, 0, 1, 1], [], []>} : vector<256x16xbf16>, vector<16x512xbf16>, vector<256x512xf32> -> vector<256x512xf32>
    %4 = arith.truncf %3 : vector<256x512xf32> to vector<256x512xbf16>
    %cst_5 = arith.constant dense<0.000000e+00> : vector<256x512xf32>
    %5 = tpu.matmul %0, %4, %cst_5 {dimension_numbers = #tpu.dot_dimension_numbers<[1], [0], [0], [1], [0, 0, 1, 1], [], []>} : vector<256x256xbf16>, vector<256x512xbf16>, vector<256x512xf32> -> vector<256x512xf32>
    %c0_6 = arith.constant 0 : index
    %c0_7 = arith.constant 0 : index
    %6 = vector.load %arg4[%c0_6, %c0_7] : memref<1x512xf32, #tpu.memory_space<vmem>>, vector<1x512xf32>
    %7 = vector.broadcast %6 : vector<1x512xf32> to vector<256x512xf32>
    %8 = arith.addf %5, %7 : vector<256x512xf32>
    %cst_8 = arith.constant 0.000000e+00 : f32
    %9 = vector.broadcast %cst_8 : f32 to vector<256x512xf32>
    %10 = arith.maximumf %8, %9 : vector<256x512xf32>
    %11 = arith.truncf %10 : vector<256x512xf32> to vector<256x512xbf16>
    %c0_9 = arith.constant 0 : index
    %c0_10 = arith.constant 0 : index
    %12 = vector.load %arg5[%c0_9, %c0_10] : memref<512x512xbf16, #tpu.memory_space<vmem>>, vector<512x512xbf16>
    %cst_11 = arith.constant dense<0.000000e+00> : vector<256x512xf32>
    %13 = tpu.matmul %11, %12, %cst_11 {dimension_numbers = #tpu.dot_dimension_numbers<[1], [0], [0], [1], [0, 0, 1, 1], [], []>} : vector<256x512xbf16>, vector<512x512xbf16>, vector<256x512xf32> -> vector<256x512xf32>
    %14 = arith.truncf %13 : vector<256x512xf32> to vector<256x512xbf16>
    %cst_12 = arith.constant dense<0.000000e+00> : vector<256x512xf32>
    %15 = tpu.matmul %0, %14, %cst_12 {dimension_numbers = #tpu.dot_dimension_numbers<[1], [0], [0], [1], [0, 0, 1, 1], [], []>} : vector<256x256xbf16>, vector<256x512xbf16>, vector<256x512xf32> -> vector<256x512xf32>
    %c0_13 = arith.constant 0 : index
    %c0_14 = arith.constant 0 : index
    %16 = vector.load %arg6[%c0_13, %c0_14] : memref<1x512xf32, #tpu.memory_space<vmem>>, vector<1x512xf32>
    %17 = vector.broadcast %16 : vector<1x512xf32> to vector<256x512xf32>
    %18 = arith.addf %15, %17 : vector<256x512xf32>
    %cst_15 = arith.constant 0.000000e+00 : f32
    %19 = vector.broadcast %cst_15 : f32 to vector<256x512xf32>
    %20 = arith.maximumf %18, %19 : vector<256x512xf32>
    %21 = arith.truncf %20 : vector<256x512xf32> to vector<256x512xbf16>
    %c0_16 = arith.constant 0 : index
    %c0_17 = arith.constant 0 : index
    %22 = vector.load %arg7[%c0_16, %c0_17] : memref<512x128xbf16, #tpu.memory_space<vmem>>, vector<512x128xbf16>
    %cst_18 = arith.constant dense<0.000000e+00> : vector<256x128xf32>
    %23 = tpu.matmul %21, %22, %cst_18 {dimension_numbers = #tpu.dot_dimension_numbers<[1], [0], [0], [1], [0, 0, 1, 1], [], []>} : vector<256x512xbf16>, vector<512x128xbf16>, vector<256x128xf32> -> vector<256x128xf32>
    %24 = arith.truncf %23 : vector<256x128xf32> to vector<256x128xbf16>
    %cst_19 = arith.constant dense<0.000000e+00> : vector<256x128xf32>
    %25 = tpu.matmul %0, %24, %cst_19 {dimension_numbers = #tpu.dot_dimension_numbers<[1], [0], [0], [1], [0, 0, 1, 1], [], []>} : vector<256x256xbf16>, vector<256x128xbf16>, vector<256x128xf32> -> vector<256x128xf32>
    %c0_20 = arith.constant 0 : index
    %c0_21 = arith.constant 0 : index
    %26 = vector.load %arg8[%c0_20, %c0_21] : memref<1x128xf32, #tpu.memory_space<vmem>>, vector<1x128xf32>
    %27 = vector.broadcast %26 : vector<1x128xf32> to vector<256x128xf32>
    %28 = arith.addf %25, %27 : vector<256x128xf32>
    %c0_22 = arith.constant 0 : index
    %c0_23 = arith.constant 0 : index
    %29 = vector.load %arg9[%c0_22, %c0_23] : memref<256x128xf32, #tpu.memory_space<vmem>>, vector<256x128xf32>
    tpu.vector_store %arg9[%c0_22, %c0_23], %28 {strides = array<i32>} : memref<256x128xf32, #tpu.memory_space<vmem>>, vector<256x128xf32>,
    return
  }
  func.func @transform_0(%arg0: i32) -> (i32, i32) {
    %c0_i32 = arith.constant 0 : i32
    %c0_i32_0 = arith.constant 0 : i32
    %c0_i32_1 = arith.constant 0 : i32
    return %c0_i32, %c0_i32_0 : i32, i32
  }
  func.func @transform_1(%arg0: i32) -> (i32, i32) {
    %c0_i32 = arith.constant 0 : i32
    %c0_i32_0 = arith.constant 0 : i32
    return %arg0, %c0_i32 : i32, i32
  }
  func.func @transform_2(%arg0: i32) -> (i32, i32) {
    %c0_i32 = arith.constant 0 : i32
    %c0_i32_0 = arith.constant 0 : i32
    %c0_i32_1 = arith.constant 0 : i32
    return %c0_i32, %c0_i32_0 : i32, i32
  }
  func.func @transform_3(%arg0: i32) -> (i32, i32) {
    %c0_i32 = arith.constant 0 : i32
    %c0_i32_0 = arith.constant 0 : i32
    %c0_i32_1 = arith.constant 0 : i32
    return %c0_i32, %c0_i32_0 : i32, i32
  }
  func.func @transform_4(%arg0: i32) -> (i32, i32) {
    %c0_i32 = arith.constant 0 : i32
    %c0_i32_0 = arith.constant 0 : i32
    %c0_i32_1 = arith.constant 0 : i32
    return %c0_i32, %c0_i32_0 : i32, i32
  }
  func.func @transform_5(%arg0: i32) -> (i32, i32) {
    %c0_i32 = arith.constant 0 : i32
    %c0_i32_0 = arith.constant 0 : i32
    %c0_i32_1 = arith.constant 0 : i32
    return %c0_i32, %c0_i32_0 : i32, i32
  }
  func.func @transform_6(%arg0: i32) -> (i32, i32) {
    %c0_i32 = arith.constant 0 : i32
    %c0_i32_0 = arith.constant 0 : i32
    %c0_i32_1 = arith.constant 0 : i32
    return %c0_i32, %c0_i32_0 : i32, i32
  }
  func.func @transform_7(%arg0: i32) -> (i32, i32) {
    %c0_i32 = arith.constant 0 : i32
    %c0_i32_0 = arith.constant 0 : i32
    %c0_i32_1 = arith.constant 0 : i32
    return %c0_i32, %c0_i32_0 : i32, i32
  }
  func.func @transform_8(%arg0: i32) -> (i32, i32) {
    %c0_i32 = arith.constant 0 : i32
    %c0_i32_0 = arith.constant 0 : i32
    return %arg0, %c0_i32 : i32, i32
  }
}

</mosaic_0001>

<llo_original>
// kernel: tpu_custom_call.1
$region0: #{tpu_custom_call.1}
  #allocation0 [shape = 'u32[]', space=smem, size = 0x4, offset = 0x4, fixed_abs, tag = 'smem constant byte address 0x4 - core index']
  #allocation1 [shape = 'u32[144,128]{1,0:T(1,128)}', space=vmem, size = 0x12000, scoped, tag = 'internal scratch']
  %s0 = inlined_call_operand.vmem [shape: bf16[256,256], index: 0, kind: input, shape index: {}]
  %s1 = inlined_call_operand.vmem [shape: bf16[512,16], index: 1, kind: input, shape index: {}]
  %s2 = inlined_call_operand.vmem [shape: bf16[16,512], index: 2, kind: input, shape index: {}]
  %s3 = inlined_call_operand.vmem [shape: f32[1,512], index: 3, kind: input, shape index: {}]
  %s4 = inlined_call_operand.hbm [shape: bf16[512,512], index: 4, kind: input, shape index: {}]
  %s5 = inlined_call_operand.vmem [shape: f32[1,512], index: 5, kind: input, shape index: {}]
  %s6 = inlined_call_operand.hbm [shape: bf16[512,128], index: 6, kind: input, shape index: {}]
  %s7 = inlined_call_operand.vmem [shape: f32[1,128], index: 7, kind: input, shape index: {}]
  %s8 = inlined_call_operand.hbm [shape: f32[512,128], index: 8, kind: output, shape index: {}]
  %s9 = sld [smem:[#allocation0]]
  $region73: #{tpu_custom_call.1} parent=0
    _
  %s11 = ssub.s32 1, %s9
  %s12 = scalar_select 0, %s11, %s9
  $region1: #{tpu_custom_call.1} parent=0
    #allocation2 [shape = 'u8[524288]{0}', space=vmem, size = 0x80000, scoped, tag = 'input window, operand 4, single buffered']
    #allocation3 [shape = 's32[2]{0}', space=sflag, size = 0x8, scoped, tag = 'scoped memory for tpu_custom_call.1']
    #allocation4 [shape = 's32[2]{0}', space=sflag, size = 0x8, scoped, tag = 'scoped memory for tpu_custom_call.1']
    #allocation5 [shape = 'u8[131072]{0}', space=vmem, size = 0x20000, scoped, tag = 'input window, operand 6, single buffered']
    #allocation6 [shape = 's32[1]{0}', space=sflag, size = 0x4, scoped, tag = 'scoped memory for tpu_custom_call.1']
    #allocation7 [shape = 'u8[262144]{0}', space=vmem, size = 0x40000, scoped, tag = 'output window, operand 0']
    %13 = vsyncpa [#allocation3], 0
    %14 = vsyncpa [#allocation6], 0
    %15 = vsyncpa [#allocation4], 0
    %s16 = scalar_lea.sflag [#allocation4], 1
    %17 = vsyncpa %s16, 0
    loop: start=0, step=1, limit=4
    $region2: #{tpu_custom_call.1} parent=1 // loop_pre_header
      _
    $region3: #{tpu_custom_call.1} parent=1 // loop_header
      %s19 = sphi 0, %s23
      %p20 = scmp.ge.s32.totalorder %s19, 4
      %s27 = sphi 0, %s27
      %s29 = sphi 0, %s27
      %s30 = sphi 0, %s29
      %s44 = sphi 0, %s30
      %s50 = sphi 0, %s52
      %s53 = sphi 0, %s50
      %s54 = sphi 0, %s53
      %s70 = sphi 0, %s54
      %s74 = sphi 0, %s74
      %s76 = sphi 0, %s74
      %s77 = sphi 0, %s76
      %s91 = sphi 0, %s77
      %s95 = sphi 0, %s95
      %s97 = sphi 0, %s95
      %s98 = sphi 0, %s97
      %s112 = sphi 0, %s98
      %s116 = sphi 0, %s116
      %s118 = sphi 0, %s116
      %s119 = sphi 0, %s118
      %s133 = sphi 0, %s119
      %s137 = sphi 0, %s137
      %s139 = sphi 0, %s137
      %s140 = sphi 0, %s139
      %s154 = sphi 0, %s140
      %s158 = sphi 0, %s158
      %s160 = sphi 0, %s158
      %s161 = sphi 0, %s160
      %s175 = sphi 0, %s161
      %s179 = sphi 0, %s179
      %s181 = sphi 0, %s179
      %s182 = sphi 0, %s181
      %s196 = sphi 0, %s182
      %s202 = sphi 0, %s204
      %s205 = sphi 0, %s202
      %s206 = sphi 0, %s205
      %s222 = sphi 0, %s206
    $region4: #{tpu_custom_call.1} parent=1 // loop_header_branch
      %22 = sbr.rel (%p20) target = $region8
    $region5: #{tpu_custom_call.1} parent=1 // loop_body
      %s24 = ssub.s32 %s19, 1
      %s25 = ssub.s32 %s19, 2
      %s26 = sadd.s32 %s19, 1
      %s28 = sadd.s32 %s27, 1
      %p31 = scmp.eq.s32.totalorder %s19, 1
      %p32 = scmp.ne.s32.totalorder %s27, %s29
      %p33 = scmp.eq.s32.totalorder %s19, 0
      %p34 = por %p32, %p33
      %p35 = scmp.ne.s32.totalorder %s27, %s29
      %p36 = scmp.eq.s32.totalorder %s24, 1
      %p37 = por %p35, %p36
      %p38 = scmp.ne.s32.totalorder %s29, %s30
      %p39 = scmp.eq.s32.totalorder %s24, 0
      %p40 = por %p38, %p39
      %p41 = scmp.ne.s32.totalorder %s29, %s30
      %p42 = scmp.eq.s32.totalorder %s25, 1
      %p43 = por %p41, %p42
      %p45 = scmp.ne.s32.totalorder %s30, %s44
      %p46 = scmp.eq.s32.totalorder %s25, 0
      %p47 = por %p45, %p46
      %s48 = ssub.s32 %s19, %s26
      %p49 = scmp.eq.s32.totalorder %s48, 0
      %s51 = sadd.s32 %s50, 1
      %s52 = scalar_select %p49, %s50, %s51
      %p55 = pneg %p49
      %p56 = scmp.eq.s32.totalorder %s19, 1
      %p57 = por %p55, %p56
      %p58 = scmp.ne.s32.totalorder %s50, %s53
      %p59 = scmp.eq.s32.totalorder %s19, 0
      %p60 = por %p58, %p59
      %p61 = scmp.ne.s32.totalorder %s50, %s53
      %p62 = scmp.eq.s32.totalorder %s24, 1
      %p63 = por %p61, %p62
      %p64 = scmp.ne.s32.totalorder %s53, %s54
      %p65 = scmp.eq.s32.totalorder %s24, 0
      %p66 = por %p64, %p65
      %p67 = scmp.ne.s32.totalorder %s53, %s54
      %p68 = scmp.eq.s32.totalorder %s25, 1
      %p69 = por %p67, %p68
      %p71 = scmp.ne.s32.totalorder %s54, %s70
      %p72 = scmp.eq.s32.totalorder %s25, 0
      %p73 = por %p71, %p72
      %s75 = sadd.s32 %s74, 1
      %p78 = scmp.eq.s32.totalorder %s19, 1
      %p79 = scmp.ne.s32.totalorder %s74, %s76
      %p80 = scmp.eq.s32.totalorder %s19, 0
      %p81 = por %p79, %p80
      %p82 = scmp.ne.s32.totalorder %s74, %s76
      %p83 = scmp.eq.s32.totalorder %s24, 1
      %p84 = por %p82, %p83
      %p85 = scmp.ne.s32.totalorder %s76, %s77
      %p86 = scmp.eq.s32.totalorder %s24, 0
      %p87 = por %p85, %p86
      %p88 = scmp.ne.s32.totalorder %s76, %s77
      %p89 = scmp.eq.s32.totalorder %s25, 1
      %p90 = por %p88, %p89
      %p92 = scmp.ne.s32.totalorder %s77, %s91
      %p93 = scmp.eq.s32.totalorder %s25, 0
      %p94 = por %p92, %p93
      %s96 = sadd.s32 %s95, 1
      %p99 = scmp.eq.s32.totalorder %s19, 1
      %p100 = scmp.ne.s32.totalorder %s95, %s97
      %p101 = scmp.eq.s32.totalorder %s19, 0
      %p102 = por %p100, %p101
      %p103 = scmp.ne.s32.totalorder %s95, %s97
      %p104 = scmp.eq.s32.totalorder %s24, 1
      %p105 = por %p103, %p104
      %p106 = scmp.ne.s32.totalorder %s97, %s98
      %p107 = scmp.eq.s32.totalorder %s24, 0
      %p108 = por %p106, %p107
      %p109 = scmp.ne.s32.totalorder %s97, %s98
      %p110 = scmp.eq.s32.totalorder %s25, 1
      %p111 = por %p109, %p110
      %p113 = scmp.ne.s32.totalorder %s98, %s112
      %p114 = scmp.eq.s32.totalorder %s25, 0
      %p115 = por %p113, %p114
      %s117 = sadd.s32 %s116, 1
      %p120 = scmp.eq.s32.totalorder %s19, 1
      %p121 = scmp.ne.s32.totalorder %s116, %s118
      %p122 = scmp.eq.s32.totalorder %s19, 0
      %p123 = por %p121, %p122
      %p124 = scmp.ne.s32.totalorder %s116, %s118
      %p125 = scmp.eq.s32.totalorder %s24, 1
      %p126 = por %p124, %p125
      %p127 = scmp.ne.s32.totalorder %s118, %s119
      %p128 = scmp.eq.s32.totalorder %s24, 0
      %p129 = por %p127, %p128
      %p130 = scmp.ne.s32.totalorder %s118, %s119
      %p131 = scmp.eq.s32.totalorder %s25, 1
      %p132 = por %p130, %p131
      %p134 = scmp.ne.s32.totalorder %s119, %s133
      %p135 = scmp.eq.s32.totalorder %s25, 0
      %p136 = por %p134, %p135
      %s138 = sadd.s32 %s137, 1
      %p141 = scmp.eq.s32.totalorder %s19, 1
      %p142 = scmp.ne.s32.totalorder %s137, %s139
      %p143 = scmp.eq.s32.totalorder %s19, 0
      %p144 = por %p142, %p143
      %p145 = scmp.ne.s32.totalorder %s137, %s139
      %p146 = scmp.eq.s32.totalorder %s24, 1
      %p147 = por %p145, %p146
      %p148 = scmp.ne.s32.totalorder %s139, %s140
      %p149 = scmp.eq.s32.totalorder %s24, 0
      %p150 = por %p148, %p149
      %p151 = scmp.ne.s32.totalorder %s139, %s140
      %p152 = scmp.eq.s32.totalorder %s25, 1
      %p153 = por %p151, %p152
      %p155 = scmp.ne.s32.totalorder %s140, %s154
      %p156 = scmp.eq.s32.totalorder %s25, 0
      %p157 = por %p155, %p156
      %s159 = sadd.s32 %s158, 1
      %p162 = scmp.eq.s32.totalorder %s19, 1
      %p163 = scmp.ne.s32.totalorder %s158, %s160
      %p164 = scmp.eq.s32.totalorder %s19, 0
      %p165 = por %p163, %p164
      %p166 = scmp.ne.s32.totalorder %s158, %s160
      %p167 = scmp.eq.s32.totalorder %s24, 1
      %p168 = por %p166, %p167
      %p169 = scmp.ne.s32.totalorder %s160, %s161
      %p170 = scmp.eq.s32.totalorder %s24, 0
      %p171 = por %p169, %p170
      %p172 = scmp.ne.s32.totalorder %s160, %s161
      %p173 = scmp.eq.s32.totalorder %s25, 1
      %p174 = por %p172, %p173
      %p176 = scmp.ne.s32.totalorder %s161, %s175
      %p177 = scmp.eq.s32.totalorder %s25, 0
      %p178 = por %p176, %p177
      %s180 = sadd.s32 %s179, 1
      %p183 = scmp.eq.s32.totalorder %s19, 1
      %p184 = scmp.ne.s32.totalorder %s179, %s181
      %p185 = scmp.eq.s32.totalorder %s19, 0
      %p186 = por %p184, %p185
      %p187 = scmp.ne.s32.totalorder %s179, %s181
      %p188 = scmp.eq.s32.totalorder %s24, 1
      %p189 = por %p187, %p188
      %p190 = scmp.ne.s32.totalorder %s181, %s182
      %p191 = scmp.eq.s32.totalorder %s24, 0
      %p192 = por %p190, %p191
      %p193 = scmp.ne.s32.totalorder %s181, %s182
      %p194 = scmp.eq.s32.totalorder %s25, 1
      %p195 = por %p193, %p194
      %p197 = scmp.ne.s32.totalorder %s182, %s196
      %p198 = scmp.eq.s32.totalorder %s25, 0
      %p199 = por %p197, %p198
      %s200 = ssub.s32 %s19, %s26
      %p201 = scmp.eq.s32.totalorder %s200, 0
      %s203 = sadd.s32 %s202, 1
      %s204 = scalar_select %p201, %s202, %s203
      %p207 = pneg %p201
      %p208 = scmp.eq.s32.totalorder %s19, 1
      %p209 = por %p207, %p208
      %p210 = scmp.ne.s32.totalorder %s202, %s205
      %p211 = scmp.eq.s32.totalorder %s19, 0
      %p212 = por %p210, %p211
      %p213 = scmp.ne.s32.totalorder %s202, %s205
      %p214 = scmp.eq.s32.totalorder %s24, 1
      %p215 = por %p213, %p214
      %p216 = scmp.ne.s32.totalorder %s205, %s206
      %p217 = scmp.eq.s32.totalorder %s24, 0
      %p218 = por %p216, %p217
      %p219 = scmp.ne.s32.totalorder %s205, %s206
      %p220 = scmp.eq.s32.totalorder %s25, 1
      %p221 = por %p219, %p220
      %p223 = scmp.ne.s32.totalorder %s206, %s222
      %p224 = scmp.eq.s32.totalorder %s25, 0
      %p225 = por %p223, %p224
      %p226 = scmp.le.s32.totalorder 1, %s19
      %p227 = scmp.lt.s32.totalorder %s19, 3
      %p228 = pnand %p226, %p227
      %p229 = pneg %p228
      // Predicated region
      $region9: #{tpu_custom_call.1} parent=5 // pred_check
        _
      $region10: #{tpu_custom_call.1} parent=5 // pred_check_branch
        %231 = sbr.rel (%p228) target = $region12
      $region11: #{tpu_custom_call.1} parent=5 // pred_region
        %s232 = ssub.s32 %s19, 1
        // Predicated region
        $region13: #{tpu_custom_call.1} parent=11 // pred_check
          %p233 = pneg %p40
        $region14: #{tpu_custom_call.1} parent=11 // pred_check_branch
          %235 = sbr.rel (%p233) target = $region16
        $region15: #{tpu_custom_call.1} parent=11 // pred_region
          _
        $region16: #{tpu_custom_call.1} parent=11 // pred_fallthru
          _
        // Predicated region
        $region17: #{tpu_custom_call.1} parent=11 // pred_check
          %p236 = pneg %p87
        $region18: #{tpu_custom_call.1} parent=11 // pred_check_branch
          %238 = sbr.rel (%p236) target = $region20
        $region19: #{tpu_custom_call.1} parent=11 // pred_region
          _
        $region20: #{tpu_custom_call.1} parent=11 // pred_fallthru
          _
        // Predicated region
        $region21: #{tpu_custom_call.1} parent=11 // pred_check
          %p239 = pneg %p108
        $region22: #{tpu_custom_call.1} parent=11 // pred_check_branch
          %241 = sbr.rel (%p239) target = $region24
        $region23: #{tpu_custom_call.1} parent=11 // pred_region
          _
        $region24: #{tpu_custom_call.1} parent=11 // pred_fallthru
          _
        // Predicated region
        $region25: #{tpu_custom_call.1} parent=11 // pred_check
          %p242 = pneg %p129
        $region26: #{tpu_custom_call.1} parent=11 // pred_check_branch
          %244 = sbr.rel (%p242) target = $region28
        $region27: #{tpu_custom_call.1} parent=11 // pred_region
          %s246 = ssub.s32 16384, 16384
          %247 = vsyncadd [#allocation3], %s246
          %s248 = sshll.u32 [#allocation2], 4
          %s249 = int_to_ptr.vmem [resolvable:$true] %s248
          %254 = dma.hbm_to_vmem [thread:$0]  %s4, 16384, %s249, [#allocation3], 256, 256, 16
        $region28: #{tpu_custom_call.1} parent=11 // pred_fallthru
          _
        // Predicated region
        $region29: #{tpu_custom_call.1} parent=11 // pred_check
          %p255 = pneg %p150
        $region30: #{tpu_custom_call.1} parent=11 // pred_check_branch
          %257 = sbr.rel (%p255) target = $region32
        $region31: #{tpu_custom_call.1} parent=11 // pred_region
          _
        $region32: #{tpu_custom_call.1} parent=11 // pred_fallthru
          _
        // Predicated region
        $region33: #{tpu_custom_call.1} parent=11 // pred_check
          %p258 = pneg %p171
        $region34: #{tpu_custom_call.1} parent=11 // pred_check_branch
          %260 = sbr.rel (%p258) target = $region36
        $region35: #{tpu_custom_call.1} parent=11 // pred_region
          %s262 = ssub.s32 4096, 4096
          %263 = vsyncadd [#allocation6], %s262
          %s264 = sshll.u32 [#allocation5], 4
          %s265 = int_to_ptr.vmem [resolvable:$true] %s264
          %270 = dma.hbm_to_vmem [thread:$0]  %s6, 4096, %s265, [#allocation6], 64, 64, 4
        $region36: #{tpu_custom_call.1} parent=11 // pred_fallthru
          _
        // Predicated region
        $region37: #{tpu_custom_call.1} parent=11 // pred_check
          %p271 = pneg %p192
        $region38: #{tpu_custom_call.1} parent=11 // pred_check_branch
          %273 = sbr.rel (%p271) target = $region40
        $region39: #{tpu_custom_call.1} parent=11 // pred_region
          _
        $region40: #{tpu_custom_call.1} parent=11 // pred_fallthru
          _
      $region12: #{tpu_custom_call.1} parent=5 // pred_fallthru
        _
      %p274 = scmp.lt.s32.totalorder %s19, 2
      // Predicated region
      $region41: #{tpu_custom_call.1} parent=5 // pred_check
        %p275 = pneg %p274
      $region42: #{tpu_custom_call.1} parent=5 // pred_check_branch
        %277 = sbr.rel (%p275) target = $region44
      $region43: #{tpu_custom_call.1} parent=5 // pred_region
        // Predicated region
        $region45: #{tpu_custom_call.1} parent=43 // pred_check
          %p278 = pneg %p60
        $region46: #{tpu_custom_call.1} parent=43 // pred_check_branch
          %280 = sbr.rel (%p278) target = $region48
        $region47: #{tpu_custom_call.1} parent=43 // pred_region
          %s281 = smul.u32 32, %s19
          %p282 = scmp.lt.s32.totalorder %s281, 63
          %s283 = scalar_select %p282, %s281, 63
          %s284 = smul.addr %s283, 4
          %s285 = scalar_lea.vmem %s1, %s284
          %s286 = smul.u32 32, %s19
        $region48: #{tpu_custom_call.1} parent=43 // pred_fallthru
          _
      $region44: #{tpu_custom_call.1} parent=5 // pred_fallthru
        _
      %p287 = scmp.le.s32.totalorder 1, %s19
      %p288 = scmp.lt.s32.totalorder %s19, 3
      %p289 = pnand %p287, %p288
      %p290 = pneg %p289
      // Predicated region
      $region49: #{tpu_custom_call.1} parent=5 // pred_check
        _
      $region50: #{tpu_custom_call.1} parent=5 // pred_check_branch
        %292 = sbr.rel (%p289) target = $region52
      $region51: #{tpu_custom_call.1} parent=5 // pred_region
        %s293 = ssub.s32 %s19, 1
        // Predicated region
        $region53: #{tpu_custom_call.1} parent=51 // pred_check
          %p294 = pneg %p129
        $region54: #{tpu_custom_call.1} parent=51 // pred_check_branch
          %296 = sbr.rel (%p294) target = $region56
        $region55: #{tpu_custom_call.1} parent=51 // pred_region
          %297 = dma.done [#allocation3], 16384
        $region56: #{tpu_custom_call.1} parent=51 // pred_fallthru
          _
        // Predicated region
        $region57: #{tpu_custom_call.1} parent=51 // pred_check
          %p298 = pneg %p171
        $region58: #{tpu_custom_call.1} parent=51 // pred_check_branch
          %300 = sbr.rel (%p298) target = $region60
        $region59: #{tpu_custom_call.1} parent=51 // pred_region
          %301 = dma.done [#allocation6], 4096
        $region60: #{tpu_custom_call.1} parent=51 // pred_fallthru
          _
        %p302 = pneg %p40
        %p303 = pneg %p37
        %s304 = smul.u32 32, %s24
        %p305 = scmp.lt.s32.totalorder %s304, 63
        %s306 = scalar_select %p305, %s304, 63
        %s307 = smul.addr %s306, 4
        %s308 = scalar_lea.vmem %s1, %s307
        %p309 = pneg %p66
        %p310 = pneg %p63
        %p311 = pneg %p87
        %p312 = pneg %p84
        %p313 = pneg %p108
        %p314 = pneg %p105
        %p315 = pneg %p129
        %p316 = pneg %p126
        %p317 = pneg %p150
        %p318 = pneg %p147
        %p319 = pneg %p171
        %p320 = pneg %p168
        %p321 = pneg %p192
        %p322 = pneg %p189
        %p323 = pneg %p218
        %p324 = pneg %p215
        %s325 = sand.u32 %s205, 1
        %s326 = scalar_lea.sflag [#allocation4], %s325
        %s327 = sand.u32 %s205, 1
        %s328 = smul.addr %s327, 256
        %s329 = scalar_lea.vmem [#allocation7], %s328
        %s330 = smul.u32 32, %s24
        %p331 = scmp.lt.s32.totalorder %s330, 63
        %s332 = scalar_select %p331, %s330, 63
        %s333 = smul.addr %s332, 4
        %s334 = scalar_lea.vmem %s1, %s333
        %s335 = smul.u32 32, %s24
        %s336 = smul.u32 32, %s24
        %v338 = vld [vmem:[%s0] sm:$0xff]
        %v339 = vld [vmem:[%s0 + $0x8] sm:$0xff]
        %v340 = vld [vmem:[%s0 + $0x10] sm:$0xff]
        %v341 = vld [vmem:[%s0 + $0x18] sm:$0xff]
        %v342 = vld [vmem:[%s0 + $0x20] sm:$0xff]
        %v343 = vld [vmem:[%s0 + $0x28] sm:$0xff]
        %v344 = vld [vmem:[%s0 + $0x30] sm:$0xff]
        %v345 = vld [vmem:[%s0 + $0x38] sm:$0xff]
        %v346 = vld [vmem:[%s0 + $0x40] sm:$0xff]
        %v347 = vld [vmem:[%s0 + $0x48] sm:$0xff]
        %v348 = vld [vmem:[%s0 + $0x50] sm:$0xff]
        %v349 = vld [vmem:[%s0 + $0x58] sm:$0xff]
        %v350 = vld [vmem:[%s0 + $0x60] sm:$0xff]
        %v351 = vld [vmem:[%s0 + $0x68] sm:$0xff]
        %v352 = vld [vmem:[%s0 + $0x70] sm:$0xff]
        %v353 = vld [vmem:[%s0 + $0x78] sm:$0xff]
        %v354 = vld [vmem:[%s0 + $0x80] sm:$0xff]
        %v355 = vld [vmem:[%s0 + $0x88] sm:$0xff]
        %v356 = vld [vmem:[%s0 + $0x90] sm:$0xff]
        %v357 = vld [vmem:[%s0 + $0x98] sm:$0xff]
        %v358 = vld [vmem:[%s0 + $0xa0] sm:$0xff]
        %v359 = vld [vmem:[%s0 + $0xa8] sm:$0xff]
        %v360 = vld [vmem:[%s0 + $0xb0] sm:$0xff]
        %v361 = vld [vmem:[%s0 + $0xb8] sm:$0xff]
        %v362 = vld [vmem:[%s0 + $0xc0] sm:$0xff]
        %v363 = vld [vmem:[%s0 + $0xc8] sm:$0xff]
        %v364 = vld [vmem:[%s0 + $0xd0] sm:$0xff]
        %v365 = vld [vmem:[%s0 + $0xd8] sm:$0xff]
        %v366 = vld [vmem:[%s0 + $0xe0] sm:$0xff]
        %v367 = vld [vmem:[%s0 + $0xe8] sm:$0xff]
        %v368 = vld [vmem:[%s0 + $0xf0] sm:$0xff]
        %v369 = vld [vmem:[%s0 + $0xf8] sm:$0xff]
        %v370 = vld [vmem:[%s334] sm:$0xf]
        %v371 = vld [vmem:[%s334 + $0x4] sm:$0xf]
        %v372 = vld [vmem:[%s334 + $0x8] sm:$0xf]
        %v373 = vld [vmem:[%s334 + $0xc] sm:$0xf]
        %v374 = vld [vmem:[%s334 + $0x10] sm:$0xf]
        %v375 = vld [vmem:[%s334 + $0x14] sm:$0xf]
        %v376 = vld [vmem:[%s334 + $0x18] sm:$0xf]
        %v377 = vld [vmem:[%s334 + $0x1c] sm:$0xf]
        %v378 = vld [vmem:[%s334 + $0x20] sm:$0xf]
        %v379 = vld [vmem:[%s334 + $0x24] sm:$0xf]
        %v380 = vld [vmem:[%s334 + $0x28] sm:$0xf]
        %v381 = vld [vmem:[%s334 + $0x2c] sm:$0xf]
        %v382 = vld [vmem:[%s334 + $0x30] sm:$0xf]
        %v383 = vld [vmem:[%s334 + $0x34] sm:$0xf]
        %v384 = vld [vmem:[%s334 + $0x38] sm:$0xf]
        %v385 = vld [vmem:[%s334 + $0x3c] sm:$0xf]
        %v386 = vld [vmem:[%s334 + $0x40] sm:$0xf]
        %v387 = vld [vmem:[%s334 + $0x44] sm:$0xf]
        %v388 = vld [vmem:[%s334 + $0x48] sm:$0xf]
        %v389 = vld [vmem:[%s334 + $0x4c] sm:$0xf]
        %v390 = vld [vmem:[%s334 + $0x50] sm:$0xf]
        %v391 = vld [vmem:[%s334 + $0x54] sm:$0xf]
        %v392 = vld [vmem:[%s334 + $0x58] sm:$0xf]
        %v393 = vld [vmem:[%s334 + $0x5c] sm:$0xf]
        %v394 = vld [vmem:[%s334 + $0x60] sm:$0xf]
        %v395 = vld [vmem:[%s334 + $0x64] sm:$0xf]
        %v396 = vld [vmem:[%s334 + $0x68] sm:$0xf]
        %v397 = vld [vmem:[%s334 + $0x6c] sm:$0xf]
        %v398 = vld [vmem:[%s334 + $0x70] sm:$0xf]
        %v399 = vld [vmem:[%s334 + $0x74] sm:$0xf]
        %v400 = vld [vmem:[%s334 + $0x78] sm:$0xf]
        %v401 = vld [vmem:[%s334 + $0x7c] sm:$0xf]
        %v402 = vld [vmem:[%s2] sm:$0xff]
        %v403 = vld [vmem:[%s2 + $0x8] sm:$0xff]
        %v404 = vld [vmem:[%s2 + $0x10] sm:$0xff]
        %v405 = vld [vmem:[%s2 + $0x18] sm:$0xff]
        %v438 = vunpack.c.l.b16 %v370
        %v439 = vunpack.c.l.b16 %v371
        %v440 = vunpack.c.l.b16 %v372
        %v441 = vunpack.c.l.b16 %v373
        %v442 = vunpack.c.l.b16 %v374
        %v443 = vunpack.c.l.b16 %v375
        %v444 = vunpack.c.l.b16 %v376
        %v445 = vunpack.c.l.b16 %v377
        %v446 = vunpack.c.l.b16 %v378
        %v447 = vunpack.c.l.b16 %v379
        %v448 = vunpack.c.l.b16 %v380
        %v449 = vunpack.c.l.b16 %v381
        %v450 = vunpack.c.l.b16 %v382
        %v451 = vunpack.c.l.b16 %v383
        %v452 = vunpack.c.l.b16 %v384
        %v453 = vunpack.c.l.b16 %v385
        %v454 = vunpack.c.l.b16 %v386
        %v455 = vunpack.c.l.b16 %v387
        %v456 = vunpack.c.l.b16 %v388
        %v457 = vunpack.c.l.b16 %v389
        %v458 = vunpack.c.l.b16 %v390
        %v459 = vunpack.c.l.b16 %v391
        %v460 = vunpack.c.l.b16 %v392
        %v461 = vunpack.c.l.b16 %v393
        %v462 = vunpack.c.l.b16 %v394
        %v463 = vunpack.c.l.b16 %v395
        %v464 = vunpack.c.l.b16 %v396
        %v465 = vunpack.c.l.b16 %v397
        %v466 = vunpack.c.l.b16 %v398
        %v467 = vunpack.c.l.b16 %v399
        %v468 = vunpack.c.l.b16 %v400
        %v469 = vunpack.c.l.b16 %v401
        %v470 = vpack.c.b16 %v439, %v438
        %v471 = vpack.c.b16 %v441, %v440
        %v472 = vpack.c.b16 %v443, %v442
        %v473 = vpack.c.b16 %v445, %v444
        %v474 = vpack.c.b16 %v447, %v446
        %v475 = vpack.c.b16 %v449, %v448
        %v476 = vpack.c.b16 %v451, %v450
        %v477 = vpack.c.b16 %v453, %v452
        %v478 = vpack.c.b16 %v455, %v454
        %v479 = vpack.c.b16 %v457, %v456
        %v480 = vpack.c.b16 %v459, %v458
        %v481 = vpack.c.b16 %v461, %v460
        %v482 = vpack.c.b16 %v463, %v462
        %v483 = vpack.c.b16 %v465, %v464
        %v484 = vpack.c.b16 %v467, %v466
        %v485 = vpack.c.b16 %v469, %v468
        %v490 = vunpack.c.l.b16 %v402
        %v491 = vunpack.c.h.b16 %v402
        %v492 = vunpack.c.l.b16 %v403
        %v493 = vunpack.c.h.b16 %v403
        %v494 = vunpack.c.l.b16 %v404
        %v495 = vunpack.c.h.b16 %v404
        %v496 = vunpack.c.l.b16 %v405
        %v497 = vunpack.c.h.b16 %v405
        %v498 = vpack.c.b16 %v494, %v490
        %v499 = vpack.c.b16 %v495, %v491
        %v500 = vpack.c.b16 %v496, %v492
        %v501 = vpack.c.b16 %v497, %v493
        %vm506 = vcmask 130048
        %v508 = vsel %vm506, %v470, 0
        %v511 = vsel %vm506, %v471, 0
        %v514 = vsel %vm506, %v472, 0
        %v517 = vsel %vm506, %v473, 0
        %v520 = vsel %vm506, %v474, 0
        %v523 = vsel %vm506, %v475, 0
        %v526 = vsel %vm506, %v476, 0
        %v529 = vsel %vm506, %v477, 0
        %v532 = vsel %vm506, %v478, 0
        %v535 = vsel %vm506, %v479, 0
        %v538 = vsel %vm506, %v480, 0
        %v541 = vsel %vm506, %v481, 0
        %v544 = vsel %vm506, %v482, 0
        %v547 = vsel %vm506, %v483, 0
        %v550 = vsel %vm506, %v484, 0
        %v553 = vsel %vm506, %v485, 0
        %555 = vmatprep.subr.bf16.mxu0 %v499
        %556 = vmatpush1.bf16.msra.mxu0 %v498
        %557 = vmatprep.subr.bf16.mxu0 0
        %558 = vmatpush1.bf16.msra.mxu0 0
        %559 = vmatprep.subr.bf16.mxu0 0
        %560 = vmatpush1.bf16.msra.mxu0 0
        %561 = vmatprep.subr.bf16.mxu0 0
        %562 = vmatpush1.bf16.msra.mxu0 0
        %563 = vmatprep.subr.bf16.mxu0 0
        %564 = vmatpush1.bf16.msra.mxu0 0
        %565 = vmatprep.subr.bf16.mxu0 0
        %566 = vmatpush1.bf16.msra.mxu0 0
        %567 = vmatprep.subr.bf16.mxu0 0
        %568 = vmatpush1.bf16.msra.mxu0 0
        %569 = vmatprep.subr.bf16.mxu0 0
        %570 = vmatpush1.bf16.msra.mxu0 0
        %571 = vmatprep.subr.bf16.mxu0 0
        %572 = vmatpush1.bf16.msra.mxu0 0
        %573 = vmatprep.subr.bf16.mxu0 0
        %574 = vmatpush1.bf16.msra.mxu0 0
        %575 = vmatprep.subr.bf16.mxu0 0
        %576 = vmatpush1.bf16.msra.mxu0 0
        %577 = vmatprep.subr.bf16.mxu0 0
        %578 = vmatpush1.bf16.msra.mxu0 0
        %579 = vmatprep.subr.bf16.mxu0 0
        %580 = vmatpush1.bf16.msra.mxu0 0
        %581 = vmatprep.subr.bf16.mxu0 0
        %582 = vmatpush1.bf16.msra.mxu0 0
        %583 = vmatprep.subr.bf16.mxu0 0
        %584 = vmatpush1.bf16.msra.mxu0 0
        %585 = vmatprep.subr.bf16.mxu0 0
        %586 = vmatpush1.bf16.msra.mxu0 0
        %587 = vmatprep.mubr.bf16.mxu0 0
        %588 = vmatmul.mubr.bf16.gmra.mrb[0].mxu0 %v508
        %v589 = vpop.f32.mrb[0].mxu0
        %v590 = vadd.f32 0.0, %v589
        %v591 = vpop.f32.mrb[0].mxu0
        %v592 = vadd.f32 0.0, %v591
        %v593 = vpop.f32.mrb[0].mxu0
        %v594 = vadd.f32 0.0, %v593
        %v595 = vpop.f32.mrb[0].mxu0
        %v596 = vadd.f32 0.0, %v595
        %597 = vmatprep.mubr.bf16.mxu0 0
        %598 = vmatmul.mubr.bf16.gmra.mrb[0].mxu0 %v511
        %v599 = vpop.f32.mrb[0].mxu0
        %v600 = vadd.f32 0.0, %v599
        %v601 = vpop.f32.mrb[0].mxu0
        %v602 = vadd.f32 0.0, %v601
        %v603 = vpop.f32.mrb[0].mxu0
        %v604 = vadd.f32 0.0, %v603
        %v605 = vpop.f32.mrb[0].mxu0
        %v606 = vadd.f32 0.0, %v605
        %607 = vmatprep.mubr.bf16.mxu0 0
        %608 = vmatmul.mubr.bf16.gmra.mrb[0].mxu0 %v514
        %v609 = vpop.f32.mrb[0].mxu0
        %v610 = vadd.f32 0.0, %v609
        %v611 = vpop.f32.mrb[0].mxu0
        %v612 = vadd.f32 0.0, %v611
        %v613 = vpop.f32.mrb[0].mxu0
        %v614 = vadd.f32 0.0, %v613
        %v615 = vpop.f32.mrb[0].mxu0
        %v616 = vadd.f32 0.0, %v615
        %617 = vmatprep.mubr.bf16.mxu0 0
        %618 = vmatmul.mubr.bf16.gmra.mrb[0].mxu0 %v517
        %v619 = vpop.f32.mrb[0].mxu0
        %v620 = vadd.f32 0.0, %v619
        %v621 = vpop.f32.mrb[0].mxu0
        %v622 = vadd.f32 0.0, %v621
        %v623 = vpop.f32.mrb[0].mxu0
        %v624 = vadd.f32 0.0, %v623
        %v625 = vpop.f32.mrb[0].mxu0
        %v626 = vadd.f32 0.0, %v625
        %627 = vmatprep.mubr.bf16.mxu0 0
        %628 = vmatmul.mubr.bf16.gmra.mrb[0].mxu0 %v520
        %v629 = vpop.f32.mrb[0].mxu0
        %v630 = vadd.f32 0.0, %v629
        %v631 = vpop.f32.mrb[0].mxu0
        %v632 = vadd.f32 0.0, %v631
        %v633 = vpop.f32.mrb[0].mxu0
        %v634 = vadd.f32 0.0, %v633
        %v635 = vpop.f32.mrb[0].mxu0
        %v636 = vadd.f32 0.0, %v635
        %637 = vmatprep.mubr.bf16.mxu0 0
        %638 = vmatmul.mubr.bf16.gmra.mrb[0].mxu0 %v523
        %v639 = vpop.f32.mrb[0].mxu0
        %v640 = vadd.f32 0.0, %v639
        %v641 = vpop.f32.mrb[0].mxu0
        %v642 = vadd.f32 0.0, %v641
        %v643 = vpop.f32.mrb[0].mxu0
        %v644 = vadd.f32 0.0, %v643
        %v645 = vpop.f32.mrb[0].mxu0
        %v646 = vadd.f32 0.0, %v645
        %647 = vmatprep.mubr.bf16.mxu0 0
        %648 = vmatmul.mubr.bf16.gmra.mrb[0].mxu0 %v526
        %v649 = vpop.f32.mrb[0].mxu0
        %v650 = vadd.f32 0.0, %v649
        %v651 = vpop.f32.mrb[0].mxu0
        %v652 = vadd.f32 0.0, %v651
        %v653 = vpop.f32.mrb[0].mxu0
        %v654 = vadd.f32 0.0, %v653
        %v655 = vpop.f32.mrb[0].mxu0
        %v656 = vadd.f32 0.0, %v655
        %657 = vmatprep.mubr.bf16.mxu0 0
        %658 = vmatmul.mubr.bf16.gmra.mrb[0].mxu0 %v529
        %v659 = vpop.f32.mrb[0].mxu0
        %v660 = vadd.f32 0.0, %v659
        %v661 = vpop.f32.mrb[0].mxu0
        %v662 = vadd.f32 0.0, %v661
        %v663 = vpop.f32.mrb[0].mxu0
        %v664 = vadd.f32 0.0, %v663
        %v665 = vpop.f32.mrb[0].mxu0
        %v666 = vadd.f32 0.0, %v665
        %667 = vmatprep.mubr.bf16.mxu0 0
        %668 = vmatmul.mubr.bf16.gmra.mrb[0].mxu0 %v532
        %v669 = vpop.f32.mrb[0].mxu0
        %v670 = vadd.f32 0.0, %v669
        %v671 = vpop.f32.mrb[0].mxu0
        %v672 = vadd.f32 0.0, %v671
        %v673 = vpop.f32.mrb[0].mxu0
        %v674 = vadd.f32 0.0, %v673
        %v675 = vpop.f32.mrb[0].mxu0
        %v676 = vadd.f32 0.0, %v675
        %677 = vmatprep.mubr.bf16.mxu0 0
        %678 = vmatmul.mubr.bf16.gmra.mrb[0].mxu0 %v535
        %v679 = vpop.f32.mrb[0].mxu0
        %v680 = vadd.f32 0.0, %v679
        %v681 = vpop.f32.mrb[0].mxu0
        %v682 = vadd.f32 0.0, %v681
        %v683 = vpop.f32.mrb[0].mxu0
        %v684 = vadd.f32 0.0, %v683
        %v685 = vpop.f32.mrb[0].mxu0
        %v686 = vadd.f32 0.0, %v685
        %687 = vmatprep.mubr.bf16.mxu0 0
        %688 = vmatmul.mubr.bf16.gmra.mrb[0].mxu0 %v538
        %v689 = vpop.f32.mrb[0].mxu0
        %v690 = vadd.f32 0.0, %v689
        %v691 = vpop.f32.mrb[0].mxu0
        %v692 = vadd.f32 0.0, %v691
        %v693 = vpop.f32.mrb[0].mxu0
        %v694 = vadd.f32 0.0, %v693
        %v695 = vpop.f32.mrb[0].mxu0
        %v696 = vadd.f32 0.0, %v695
        %697 = vmatprep.mubr.bf16.mxu0 0
        %698 = vmatmul.mubr.bf16.gmra.mrb[0].mxu0 %v541
        %v699 = vpop.f32.mrb[0].mxu0
        %v700 = vadd.f32 0.0, %v699
        %v701 = vpop.f32.mrb[0].mxu0
        %v702 = vadd.f32 0.0, %v701
        %v703 = vpop.f32.mrb[0].mxu0
        %v704 = vadd.f32 0.0, %v703
        %v705 = vpop.f32.mrb[0].mxu0
        %v706 = vadd.f32 0.0, %v705
        %707 = vmatprep.mubr.bf16.mxu0 0
        %708 = vmatmul.mubr.bf16.gmra.mrb[0].mxu0 %v544
        %v709 = vpop.f32.mrb[0].mxu0
        %v710 = vadd.f32 0.0, %v709
        %v711 = vpop.f32.mrb[0].mxu0
        %v712 = vadd.f32 0.0, %v711
        %v713 = vpop.f32.mrb[0].mxu0
        %v714 = vadd.f32 0.0, %v713
        %v715 = vpop.f32.mrb[0].mxu0
        %v716 = vadd.f32 0.0, %v715
        %717 = vmatprep.mubr.bf16.mxu0 0
        %718 = vmatmul.mubr.bf16.gmra.mrb[0].mxu0 %v547
        %v719 = vpop.f32.mrb[0].mxu0
        %v720 = vadd.f32 0.0, %v719
        %v721 = vpop.f32.mrb[0].mxu0
        %v722 = vadd.f32 0.0, %v721
        %v723 = vpop.f32.mrb[0].mxu0
        %v724 = vadd.f32 0.0, %v723
        %v725 = vpop.f32.mrb[0].mxu0
        %v726 = vadd.f32 0.0, %v725
        %727 = vmatprep.mubr.bf16.mxu0 0
        %728 = vmatmul.mubr.bf16.gmra.mrb[0].mxu0 %v550
        %v729 = vpop.f32.mrb[0].mxu0
        %v730 = vadd.f32 0.0, %v729
        %v731 = vpop.f32.mrb[0].mxu0
        %v732 = vadd.f32 0.0, %v731
        %v733 = vpop.f32.mrb[0].mxu0
        %v734 = vadd.f32 0.0, %v733
        %v735 = vpop.f32.mrb[0].mxu0
        %v736 = vadd.f32 0.0, %v735
        %737 = vmatprep.mubr.bf16.mxu0 0
        %738 = vmatmul.mubr.bf16.gmra.mrb[0].mxu0 %v553
        %v739 = vpop.f32.mrb[0].mxu0
        %v740 = vadd.f32 0.0, %v739
        %v741 = vpop.f32.mrb[0].mxu0
        %v742 = vadd.f32 0.0, %v741
        %v743 = vpop.f32.mrb[0].mxu0
        %v744 = vadd.f32 0.0, %v743
        %v745 = vpop.f32.mrb[0].mxu0
        %v746 = vadd.f32 0.0, %v745
        %747 = vdwg.mxu0
        %748 = vmatprep.subr.bf16.mxu0 %v501
        %749 = vmatpush1.bf16.msra.mxu0 %v500
        %750 = vmatprep.subr.bf16.mxu0 0
        %751 = vmatpush1.bf16.msra.mxu0 0
        %752 = vmatprep.subr.bf16.mxu0 0
        %753 = vmatpush1.bf16.msra.mxu0 0
        %754 = vmatprep.subr.bf16.mxu0 0
        %755 = vmatpush1.bf16.msra.mxu0 0
        %756 = vmatprep.subr.bf16.mxu0 0
        %757 = vmatpush1.bf16.msra.mxu0 0
        %758 = vmatprep.subr.bf16.mxu0 0
        %759 = vmatpush1.bf16.msra.mxu0 0
        %760 = vmatprep.subr.bf16.mxu0 0
        %761 = vmatpush1.bf16.msra.mxu0 0
        %762 = vmatprep.subr.bf16.mxu0 0
        %763 = vmatpush1.bf16.msra.mxu0 0
        %764 = vmatprep.subr.bf16.mxu0 0
        %765 = vmatpush1.bf16.msra.mxu0 0
        %766 = vmatprep.subr.bf16.mxu0 0
        %767 = vmatpush1.bf16.msra.mxu0 0
        %768 = vmatprep.subr.bf16.mxu0 0
        %769 = vmatpush1.bf16.msra.mxu0 0
        %770 = vmatprep.subr.bf16.mxu0 0
        %771 = vmatpush1.bf16.msra.mxu0 0
        %772 = vmatprep.subr.bf16.mxu0 0
        %773 = vmatpush1.bf16.msra.mxu0 0
        %774 = vmatprep.subr.bf16.mxu0 0
        %775 = vmatpush1.bf16.msra.mxu0 0
        %776 = vmatprep.subr.bf16.mxu0 0
        %777 = vmatpush1.bf16.msra.mxu0 0
        %778 = vmatprep.subr.bf16.mxu0 0
        %779 = vmatpush1.bf16.msra.mxu0 0
        %780 = vmatprep.mubr.bf16.mxu0 0
        %781 = vmatmul.mubr.bf16.gmra.mrb[0].mxu0 %v508
        %v782 = vpop.f32.mrb[0].mxu0
        %v783 = vadd.f32 0.0, %v782
        %v784 = vpop.f32.mrb[0].mxu0
        %v785 = vadd.f32 0.0, %v784
        %v786 = vpop.f32.mrb[0].mxu0
        %v787 = vadd.f32 0.0, %v786
        %v788 = vpop.f32.mrb[0].mxu0
        %v789 = vadd.f32 0.0, %v788
        %790 = vmatprep.mubr.bf16.mxu0 0
        %791 = vmatmul.mubr.bf16.gmra.mrb[0].mxu0 %v511
        %v792 = vpop.f32.mrb[0].mxu0
        %v793 = vadd.f32 0.0, %v792
        %v794 = vpop.f32.mrb[0].mxu0
        %v795 = vadd.f32 0.0, %v794
        %v796 = vpop.f32.mrb[0].mxu0
        %v797 = vadd.f32 0.0, %v796
        %v798 = vpop.f32.mrb[0].mxu0
        %v799 = vadd.f32 0.0, %v798
        %800 = vmatprep.mubr.bf16.mxu0 0
        %801 = vmatmul.mubr.bf16.gmra.mrb[0].mxu0 %v514
        %v802 = vpop.f32.mrb[0].mxu0
        %v803 = vadd.f32 0.0, %v802
        %v804 = vpop.f32.mrb[0].mxu0
        %v805 = vadd.f32 0.0, %v804
        %v806 = vpop.f32.mrb[0].mxu0
        %v807 = vadd.f32 0.0, %v806
        %v808 = vpop.f32.mrb[0].mxu0
        %v809 = vadd.f32 0.0, %v808
        %810 = vmatprep.mubr.bf16.mxu0 0
        %811 = vmatmul.mubr.bf16.gmra.mrb[0].mxu0 %v517
        %v812 = vpop.f32.mrb[0].mxu0
        %v813 = vadd.f32 0.0, %v812
        %v814 = vpop.f32.mrb[0].mxu0
        %v815 = vadd.f32 0.0, %v814
        %v816 = vpop.f32.mrb[0].mxu0
        %v817 = vadd.f32 0.0, %v816
        %v818 = vpop.f32.mrb[0].mxu0
        %v819 = vadd.f32 0.0, %v818
        %820 = vmatprep.mubr.bf16.mxu0 0
        %821 = vmatmul.mubr.bf16.gmra.mrb[0].mxu0 %v520
        %v822 = vpop.f32.mrb[0].mxu0
        %v823 = vadd.f32 0.0, %v822
        %v824 = vpop.f32.mrb[0].mxu0
        %v825 = vadd.f32 0.0, %v824
        %v826 = vpop.f32.mrb[0].mxu0
        %v827 = vadd.f32 0.0, %v826
        %v828 = vpop.f32.mrb[0].mxu0
        %v829 = vadd.f32 0.0, %v828
        %830 = vmatprep.mubr.bf16.mxu0 0
        %831 = vmatmul.mubr.bf16.gmra.mrb[0].mxu0 %v523
        %v832 = vpop.f32.mrb[0].mxu0
        %v833 = vadd.f32 0.0, %v832
        %v834 = vpop.f32.mrb[0].mxu0
        %v835 = vadd.f32 0.0, %v834
        %v836 = vpop.f32.mrb[0].mxu0
        %v837 = vadd.f32 0.0, %v836
        %v838 = vpop.f32.mrb[0].mxu0
        %v839 = vadd.f32 0.0, %v838
        %840 = vmatprep.mubr.bf16.mxu0 0
        %841 = vmatmul.mubr.bf16.gmra.mrb[0].mxu0 %v526
        %v842 = vpop.f32.mrb[0].mxu0
        %v843 = vadd.f32 0.0, %v842
        %v844 = vpop.f32.mrb[0].mxu0
        %v845 = vadd.f32 0.0, %v844
        %v846 = vpop.f32.mrb[0].mxu0
        %v847 = vadd.f32 0.0, %v846
        %v848 = vpop.f32.mrb[0].mxu0
        %v849 = vadd.f32 0.0, %v848
        %850 = vmatprep.mubr.bf16.mxu0 0
        %851 = vmatmul.mubr.bf16.gmra.mrb[0].mxu0 %v529
        %v852 = vpop.f32.mrb[0].mxu0
        %v853 = vadd.f32 0.0, %v852
        %v854 = vpop.f32.mrb[0].mxu0
        %v855 = vadd.f32 0.0, %v854
        %v856 = vpop.f32.mrb[0].mxu0
        %v857 = vadd.f32 0.0, %v856
        %v858 = vpop.f32.mrb[0].mxu0
        %v859 = vadd.f32 0.0, %v858
        %860 = vmatprep.mubr.bf16.mxu0 0
        %861 = vmatmul.mubr.bf16.gmra.mrb[0].mxu0 %v532
        %v862 = vpop.f32.mrb[0].mxu0
        %v863 = vadd.f32 0.0, %v862
        %v864 = vpop.f32.mrb[0].mxu0
        %v865 = vadd.f32 0.0, %v864
        %v866 = vpop.f32.mrb[0].mxu0
        %v867 = vadd.f32 0.0, %v866
        %v868 = vpop.f32.mrb[0].mxu0
        %v869 = vadd.f32 0.0, %v868
        %870 = vmatprep.mubr.bf16.mxu0 0
        %871 = vmatmul.mubr.bf16.gmra.mrb[0].mxu0 %v535
        %v872 = vpop.f32.mrb[0].mxu0
        %v873 = vadd.f32 0.0, %v872
        %v874 = vpop.f32.mrb[0].mxu0
        %v875 = vadd.f32 0.0, %v874
        %v876 = vpop.f32.mrb[0].mxu0
        %v877 = vadd.f32 0.0, %v876
        %v878 = vpop.f32.mrb[0].mxu0
        %v879 = vadd.f32 0.0, %v878
        %880 = vmatprep.mubr.bf16.mxu0 0
        %881 = vmatmul.mubr.bf16.gmra.mrb[0].mxu0 %v538
        %v882 = vpop.f32.mrb[0].mxu0
        %v883 = vadd.f32 0.0, %v882
        %v884 = vpop.f32.mrb[0].mxu0
        %v885 = vadd.f32 0.0, %v884
        %v886 = vpop.f32.mrb[0].mxu0
        %v887 = vadd.f32 0.0, %v886
        %v888 = vpop.f32.mrb[0].mxu0
        %v889 = vadd.f32 0.0, %v888
        %890 = vmatprep.mubr.bf16.mxu0 0
        %891 = vmatmul.mubr.bf16.gmra.mrb[0].mxu0 %v541
        %v892 = vpop.f32.mrb[0].mxu0
        %v893 = vadd.f32 0.0, %v892
        %v894 = vpop.f32.mrb[0].mxu0
        %v895 = vadd.f32 0.0, %v894
        %v896 = vpop.f32.mrb[0].mxu0
        %v897 = vadd.f32 0.0, %v896
        %v898 = vpop.f32.mrb[0].mxu0
        %v899 = vadd.f32 0.0, %v898
        %900 = vmatprep.mubr.bf16.mxu0 0
        %901 = vmatmul.mubr.bf16.gmra.mrb[0].mxu0 %v544
        %v902 = vpop.f32.mrb[0].mxu0
        %v903 = vadd.f32 0.0, %v902
        %v904 = vpop.f32.mrb[0].mxu0
        %v905 = vadd.f32 0.0, %v904
        %v906 = vpop.f32.mrb[0].mxu0
        %v907 = vadd.f32 0.0, %v906
        %v908 = vpop.f32.mrb[0].mxu0
        %v909 = vadd.f32 0.0, %v908
        %910 = vmatprep.mubr.bf16.mxu0 0
        %911 = vmatmul.mubr.bf16.gmra.mrb[0].mxu0 %v547
        %v912 = vpop.f32.mrb[0].mxu0
        %v913 = vadd.f32 0.0, %v912
        %v914 = vpop.f32.mrb[0].mxu0
        %v915 = vadd.f32 0.0, %v914
        %v916 = vpop.f32.mrb[0].mxu0
        %v917 = vadd.f32 0.0, %v916
        %v918 = vpop.f32.mrb[0].mxu0
        %v919 = vadd.f32 0.0, %v918
        %920 = vmatprep.mubr.bf16.mxu0 0
        %921 = vmatmul.mubr.bf16.gmra.mrb[0].mxu0 %v550
        %v922 = vpop.f32.mrb[0].mxu0
        %v923 = vadd.f32 0.0, %v922
        %v924 = vpop.f32.mrb[0].mxu0
        %v925 = vadd.f32 0.0, %v924
        %v926 = vpop.f32.mrb[0].mxu0
        %v927 = vadd.f32 0.0, %v926
        %v928 = vpop.f32.mrb[0].mxu0
        %v929 = vadd.f32 0.0, %v928
        %930 = vmatprep.mubr.bf16.mxu0 0
        %931 = vmatmul.mubr.bf16.gmra.mrb[0].mxu0 %v553
        %v932 = vpop.f32.mrb[0].mxu0
        %v933 = vadd.f32 0.0, %v932
        %v934 = vpop.f32.mrb[0].mxu0
        %v935 = vadd.f32 0.0, %v934
        %v936 = vpop.f32.mrb[0].mxu0
        %v937 = vadd.f32 0.0, %v936
        %v938 = vpop.f32.mrb[0].mxu0
        %v939 = vadd.f32 0.0, %v938
        %940 = vdwg.mxu0
        %v941 = vpack.c.bf16 %v594, %v590
        %v942 = vpack.c.bf16 %v596, %v592
        %v943 = vpack.c.bf16 %v787, %v783
        %v944 = vpack.c.bf16 %v789, %v785
        %v945 = vpack.c.bf16 %v604, %v600
        %v946 = vpack.c.bf16 %v606, %v602
        %v947 = vpack.c.bf16 %v797, %v793
        %v948 = vpack.c.bf16 %v799, %v795
        %v949 = vpack.c.bf16 %v614, %v610
        %v950 = vpack.c.bf16 %v616, %v612
        %v951 = vpack.c.bf16 %v807, %v803
        %v952 = vpack.c.bf16 %v809, %v805
        %v953 = vpack.c.bf16 %v624, %v620
        %v954 = vpack.c.bf16 %v626, %v622
        %v955 = vpack.c.bf16 %v817, %v813
        %v956 = vpack.c.bf16 %v819, %v815
        %v957 = vpack.c.bf16 %v634, %v630
        %v958 = vpack.c.bf16 %v636, %v632
        %v959 = vpack.c.bf16 %v827, %v823
        %v960 = vpack.c.bf16 %v829, %v825
        %v961 = vpack.c.bf16 %v644, %v640
        %v962 = vpack.c.bf16 %v646, %v642
        %v963 = vpack.c.bf16 %v837, %v833
        %v964 = vpack.c.bf16 %v839, %v835
        %v965 = vpack.c.bf16 %v654, %v650
        %v966 = vpack.c.bf16 %v656, %v652
        %v967 = vpack.c.bf16 %v847, %v843
        %v968 = vpack.c.bf16 %v849, %v845
        %v969 = vpack.c.bf16 %v664, %v660
        %v970 = vpack.c.bf16 %v666, %v662
        %v971 = vpack.c.bf16 %v857, %v853
        %v972 = vpack.c.bf16 %v859, %v855
        %v973 = vpack.c.bf16 %v674, %v670
        %v974 = vpack.c.bf16 %v676, %v672
        %v975 = vpack.c.bf16 %v867, %v863
        %v976 = vpack.c.bf16 %v869, %v865
        %v977 = vpack.c.bf16 %v684, %v680
        %v978 = vpack.c.bf16 %v686, %v682
        %v979 = vpack.c.bf16 %v877, %v873
        %v980 = vpack.c.bf16 %v879, %v875
        %v981 = vpack.c.bf16 %v694, %v690
        %v982 = vpack.c.bf16 %v696, %v692
        %v983 = vpack.c.bf16 %v887, %v883
        %v984 = vpack.c.bf16 %v889, %v885
        %v985 = vpack.c.bf16 %v704, %v700
        %v986 = vpack.c.bf16 %v706, %v702
        %v987 = vpack.c.bf16 %v897, %v893
        %v988 = vpack.c.bf16 %v899, %v895
        %v989 = vpack.c.bf16 %v714, %v710
        %v990 = vpack.c.bf16 %v716, %v712
        %v991 = vpack.c.bf16 %v907, %v903
        %v992 = vpack.c.bf16 %v909, %v905
        %v993 = vpack.c.bf16 %v724, %v720
        %v994 = vpack.c.bf16 %v726, %v722
        %v995 = vpack.c.bf16 %v917, %v913
        %v996 = vpack.c.bf16 %v919, %v915
        %v997 = vpack.c.bf16 %v734, %v730
        %v998 = vpack.c.bf16 %v736, %v732
        %v999 = vpack.c.bf16 %v927, %v923
        %v1000 = vpack.c.bf16 %v929, %v925
        %v1001 = vpack.c.bf16 %v744, %v740
        %v1002 = vpack.c.bf16 %v746, %v742
        %v1003 = vpack.c.bf16 %v937, %v933
        %v1004 = vpack.c.bf16 %v939, %v935
        %v1005 = vld [vmem:[%s3] sm:$0xf]
        %v1007 = vlaneseq
        %v1008 = vshrl.u32 %v1007, 7
        %v1009 = vsub.s32 0, %v1008
        %v1010 = vrot.slane %v1005, %v1009
        %v1011 = vlaneseq
        %v1012 = vshrl.u32 %v1011, 7
        %v1013 = vsub.s32 1, %v1012
        %v1014 = vrot.slane %v1005, %v1013
        %v1015 = vlaneseq
        %v1016 = vshrl.u32 %v1015, 7
        %v1017 = vsub.s32 2, %v1016
        %v1018 = vrot.slane %v1005, %v1017
        %v1019 = vlaneseq
        %v1020 = vshrl.u32 %v1019, 7
        %v1021 = vsub.s32 3, %v1020
        %v1022 = vrot.slane %v1005, %v1021
        %v1059 = vunpack.c.l.b16 %v338
        %v1060 = vunpack.c.h.b16 %v338
        %v1061 = vunpack.c.l.b16 %v339
        %v1062 = vunpack.c.h.b16 %v339
        %v1063 = vunpack.c.l.b16 %v340
        %v1064 = vunpack.c.h.b16 %v340
        %v1065 = vunpack.c.l.b16 %v341
        %v1066 = vunpack.c.h.b16 %v341
        %v1067 = vunpack.c.l.b16 %v342
        %v1068 = vunpack.c.h.b16 %v342
        %v1069 = vunpack.c.l.b16 %v343
        %v1070 = vunpack.c.h.b16 %v343
        %v1071 = vunpack.c.l.b16 %v344
        %v1072 = vunpack.c.h.b16 %v344
        %v1073 = vunpack.c.l.b16 %v345
        %v1074 = vunpack.c.h.b16 %v345
        %v1075 = vunpack.c.l.b16 %v346
        %v1076 = vunpack.c.h.b16 %v346
        %v1077 = vunpack.c.l.b16 %v347
        %v1078 = vunpack.c.h.b16 %v347
        %v1079 = vunpack.c.l.b16 %v348
        %v1080 = vunpack.c.h.b16 %v348
        %v1081 = vunpack.c.l.b16 %v349
        %v1082 = vunpack.c.h.b16 %v349
        %v1083 = vunpack.c.l.b16 %v350
        %v1084 = vunpack.c.h.b16 %v350
        %v1085 = vunpack.c.l.b16 %v351
        %v1086 = vunpack.c.h.b16 %v351
        %v1087 = vunpack.c.l.b16 %v352
        %v1088 = vunpack.c.h.b16 %v352
        %v1089 = vunpack.c.l.b16 %v353
        %v1090 = vunpack.c.h.b16 %v353
        %v1091 = vunpack.c.l.b16 %v354
        %v1092 = vunpack.c.h.b16 %v354
        %v1093 = vunpack.c.l.b16 %v355
        %v1094 = vunpack.c.h.b16 %v355
        %v1095 = vunpack.c.l.b16 %v356
        %v1096 = vunpack.c.h.b16 %v356
        %v1097 = vunpack.c.l.b16 %v357
        %v1098 = vunpack.c.h.b16 %v357
        %v1099 = vunpack.c.l.b16 %v358
        %v1100 = vunpack.c.h.b16 %v358
        %v1101 = vunpack.c.l.b16 %v359
        %v1102 = vunpack.c.h.b16 %v359
        %v1103 = vunpack.c.l.b16 %v360
        %v1104 = vunpack.c.h.b16 %v360
        %v1105 = vunpack.c.l.b16 %v361
        %v1106 = vunpack.c.h.b16 %v361
        %v1107 = vunpack.c.l.b16 %v362
        %v1108 = vunpack.c.h.b16 %v362
        %v1109 = vunpack.c.l.b16 %v363
        %v1110 = vunpack.c.h.b16 %v363
        %v1111 = vunpack.c.l.b16 %v364
        %v1112 = vunpack.c.h.b16 %v364
        %v1113 = vunpack.c.l.b16 %v365
        %v1114 = vunpack.c.h.b16 %v365
        %v1115 = vunpack.c.l.b16 %v366
        %v1116 = vunpack.c.h.b16 %v366
        %v1117 = vunpack.c.l.b16 %v367
        %v1118 = vunpack.c.h.b16 %v367
        %v1119 = vunpack.c.l.b16 %v368
        %v1120 = vunpack.c.h.b16 %v368
        %v1121 = vunpack.c.l.b16 %v369
        %v1122 = vunpack.c.h.b16 %v369
        %v1123 = vpack.c.b16 %v1061, %v1059
        %v1124 = vpack.c.b16 %v1062, %v1060
        %v1125 = vpack.c.b16 %v1065, %v1063
        %v1126 = vpack.c.b16 %v1066, %v1064
        %v1127 = vpack.c.b16 %v1069, %v1067
        %v1128 = vpack.c.b16 %v1070, %v1068
        %v1129 = vpack.c.b16 %v1073, %v1071
        %v1130 = vpack.c.b16 %v1074, %v1072
        %v1131 = vpack.c.b16 %v1077, %v1075
        %v1132 = vpack.c.b16 %v1078, %v1076
        %v1133 = vpack.c.b16 %v1081, %v1079
        %v1134 = vpack.c.b16 %v1082, %v1080
        %v1135 = vpack.c.b16 %v1085, %v1083
        %v1136 = vpack.c.b16 %v1086, %v1084
        %v1137 = vpack.c.b16 %v1089, %v1087
        %v1138 = vpack.c.b16 %v1090, %v1088
        %v1139 = vpack.c.b16 %v1093, %v1091
        %v1140 = vpack.c.b16 %v1094, %v1092
        %v1141 = vpack.c.b16 %v1097, %v1095
        %v1142 = vpack.c.b16 %v1098, %v1096
        %v1143 = vpack.c.b16 %v1101, %v1099
        %v1144 = vpack.c.b16 %v1102, %v1100
        %v1145 = vpack.c.b16 %v1105, %v1103
        %v1146 = vpack.c.b16 %v1106, %v1104
        %v1147 = vpack.c.b16 %v1109, %v1107
        %v1148 = vpack.c.b16 %v1110, %v1108
        %v1149 = vpack.c.b16 %v1113, %v1111
        %v1150 = vpack.c.b16 %v1114, %v1112
        %v1151 = vpack.c.b16 %v1117, %v1115
        %v1152 = vpack.c.b16 %v1118, %v1116
        %v1153 = vpack.c.b16 %v1121, %v1119
        %v1154 = vpack.c.b16 %v1122, %v1120
        %1187 = vmatprep.subr.bf16.mxu0 %v942
        %1188 = vmatpush1.bf16.msra.mxu0 %v941
        %1189 = vmatprep.subr.bf16.mxu0 %v946
        %1190 = vmatpush1.bf16.msra.mxu0 %v945
        %1191 = vmatprep.subr.bf16.mxu0 %v950
        %1192 = vmatpush1.bf16.msra.mxu0 %v949
        %1193 = vmatprep.subr.bf16.mxu0 %v954
        %1194 = vmatpush1.bf16.msra.mxu0 %v953
        %1195 = vmatprep.subr.bf16.mxu0 %v958
        %1196 = vmatpush1.bf16.msra.mxu0 %v957
        %1197 = vmatprep.subr.bf16.mxu0 %v962
        %1198 = vmatpush1.bf16.msra.mxu0 %v961
        %1199 = vmatprep.subr.bf16.mxu0 %v966
        %1200 = vmatpush1.bf16.msra.mxu0 %v965
        %1201 = vmatprep.subr.bf16.mxu0 %v970
        %1202 = vmatpush1.bf16.msra.mxu0 %v969
        %1203 = vmatprep.subr.bf16.mxu0 %v974
        %1204 = vmatpush1.bf16.msra.mxu0 %v973
        %1205 = vmatprep.subr.bf16.mxu0 %v978
        %1206 = vmatpush1.bf16.msra.mxu0 %v977
        %1207 = vmatprep.subr.bf16.mxu0 %v982
        %1208 = vmatpush1.bf16.msra.mxu0 %v981
        %1209 = vmatprep.subr.bf16.mxu0 %v986
        %1210 = vmatpush1.bf16.msra.mxu0 %v985
        %1211 = vmatprep.subr.bf16.mxu0 %v990
        %1212 = vmatpush1.bf16.msra.mxu0 %v989
        %1213 = vmatprep.subr.bf16.mxu0 %v994
        %1214 = vmatpush1.bf16.msra.mxu0 %v993
        %1215 = vmatprep.subr.bf16.mxu0 %v998
        %1216 = vmatpush1.bf16.msra.mxu0 %v997
        %1217 = vmatprep.subr.bf16.mxu0 %v1002
        %1218 = vmatpush1.bf16.msra.mxu0 %v1001
        %1219 = vmatprep.mubr.bf16.mxu0 %v1124
        %1220 = vmatmul.mubr.bf16.gmra.mrb[0].mxu0 %v1123
        %v1221 = vpop.f32.mrb[0].mxu0
        %v1222 = vadd.f32 %v1010, %v1221
        %v1223 = vpop.f32.mrb[0].mxu0
        %v1224 = vadd.f32 %v1014, %v1223
        %v1225 = vpop.f32.mrb[0].mxu0
        %v1226 = vadd.f32 %v1010, %v1225
        %v1227 = vpop.f32.mrb[0].mxu0
        %v1228 = vadd.f32 %v1014, %v1227
        %1229 = vmatprep.mubr.bf16.mxu0 %v1126
        %1230 = vmatmul.mubr.bf16.gmra.mrb[0].mxu0 %v1125
        %v1231 = vpop.f32.mrb[0].mxu0
        %v1232 = vadd.f32 %v1010, %v1231
        %v1233 = vpop.f32.mrb[0].mxu0
        %v1234 = vadd.f32 %v1014, %v1233
        %v1235 = vpop.f32.mrb[0].mxu0
        %v1236 = vadd.f32 %v1010, %v1235
        %v1237 = vpop.f32.mrb[0].mxu0
        %v1238 = vadd.f32 %v1014, %v1237
        %1239 = vmatprep.mubr.bf16.mxu0 %v1128
        %1240 = vmatmul.mubr.bf16.gmra.mrb[0].mxu0 %v1127
        %v1241 = vpop.f32.mrb[0].mxu0
        %v1242 = vadd.f32 %v1010, %v1241
        %v1243 = vpop.f32.mrb[0].mxu0
        %v1244 = vadd.f32 %v1014, %v1243
        %v1245 = vpop.f32.mrb[0].mxu0
        %v1246 = vadd.f32 %v1010, %v1245
        %v1247 = vpop.f32.mrb[0].mxu0
        %v1248 = vadd.f32 %v1014, %v1247
        %1249 = vmatprep.mubr.bf16.mxu0 %v1130
        %1250 = vmatmul.mubr.bf16.gmra.mrb[0].mxu0 %v1129
        %v1251 = vpop.f32.mrb[0].mxu0
        %v1252 = vadd.f32 %v1010, %v1251
        %v1253 = vpop.f32.mrb[0].mxu0
        %v1254 = vadd.f32 %v1014, %v1253
        %v1255 = vpop.f32.mrb[0].mxu0
        %v1256 = vadd.f32 %v1010, %v1255
        %v1257 = vpop.f32.mrb[0].mxu0
        %v1258 = vadd.f32 %v1014, %v1257
        %1259 = vmatprep.mubr.bf16.mxu0 %v1132
        %1260 = vmatmul.mubr.bf16.gmra.mrb[0].mxu0 %v1131
        %v1261 = vpop.f32.mrb[0].mxu0
        %v1262 = vadd.f32 %v1010, %v1261
        %v1263 = vpop.f32.mrb[0].mxu0
        %v1264 = vadd.f32 %v1014, %v1263
        %v1265 = vpop.f32.mrb[0].mxu0
        %v1266 = vadd.f32 %v1010, %v1265
        %v1267 = vpop.f32.mrb[0].mxu0
        %v1268 = vadd.f32 %v1014, %v1267
        %1269 = vmatprep.mubr.bf16.mxu0 %v1134
        %1270 = vmatmul.mubr.bf16.gmra.mrb[0].mxu0 %v1133
        %v1271 = vpop.f32.mrb[0].mxu0
        %v1272 = vadd.f32 %v1010, %v1271
        %v1273 = vpop.f32.mrb[0].mxu0
        %v1274 = vadd.f32 %v1014, %v1273
        %v1275 = vpop.f32.mrb[0].mxu0
        %v1276 = vadd.f32 %v1010, %v1275
        %v1277 = vpop.f32.mrb[0].mxu0
        %v1278 = vadd.f32 %v1014, %v1277
        %1279 = vmatprep.mubr.bf16.mxu0 %v1136
        %1280 = vmatmul.mubr.bf16.gmra.mrb[0].mxu0 %v1135
        %v1281 = vpop.f32.mrb[0].mxu0
        %v1282 = vadd.f32 %v1010, %v1281
        %v1283 = vpop.f32.mrb[0].mxu0
        %v1284 = vadd.f32 %v1014, %v1283
        %v1285 = vpop.f32.mrb[0].mxu0
        %v1286 = vadd.f32 %v1010, %v1285
        %v1287 = vpop.f32.mrb[0].mxu0
        %v1288 = vadd.f32 %v1014, %v1287
        %1289 = vmatprep.mubr.bf16.mxu0 %v1138
        %1290 = vmatmul.mubr.bf16.gmra.mrb[0].mxu0 %v1137
        %v1291 = vpop.f32.mrb[0].mxu0
        %v1292 = vadd.f32 %v1010, %v1291
        %v1293 = vpop.f32.mrb[0].mxu0
        %v1294 = vadd.f32 %v1014, %v1293
        %v1295 = vpop.f32.mrb[0].mxu0
        %v1296 = vadd.f32 %v1010, %v1295
        %v1297 = vpop.f32.mrb[0].mxu0
        %v1298 = vadd.f32 %v1014, %v1297
        %1299 = vmatprep.mubr.bf16.mxu0 %v1140
        %1300 = vmatmul.mubr.bf16.gmra.mrb[0].mxu0 %v1139
        %v1301 = vpop.f32.mrb[0].mxu0
        %v1302 = vadd.f32 %v1010, %v1301
        %v1303 = vpop.f32.mrb[0].mxu0
        %v1304 = vadd.f32 %v1014, %v1303
        %v1305 = vpop.f32.mrb[0].mxu0
        %v1306 = vadd.f32 %v1010, %v1305
        %v1307 = vpop.f32.mrb[0].mxu0
        %v1308 = vadd.f32 %v1014, %v1307
        %1309 = vmatprep.mubr.bf16.mxu0 %v1142
        %1310 = vmatmul.mubr.bf16.gmra.mrb[0].mxu0 %v1141
        %v1311 = vpop.f32.mrb[0].mxu0
        %v1312 = vadd.f32 %v1010, %v1311
        %v1313 = vpop.f32.mrb[0].mxu0
        %v1314 = vadd.f32 %v1014, %v1313
        %v1315 = vpop.f32.mrb[0].mxu0
        %v1316 = vadd.f32 %v1010, %v1315
        %v1317 = vpop.f32.mrb[0].mxu0
        %v1318 = vadd.f32 %v1014, %v1317
        %1319 = vmatprep.mubr.bf16.mxu0 %v1144
        %1320 = vmatmul.mubr.bf16.gmra.mrb[0].mxu0 %v1143
        %v1321 = vpop.f32.mrb[0].mxu0
        %v1322 = vadd.f32 %v1010, %v1321
        %v1323 = vpop.f32.mrb[0].mxu0
        %v1324 = vadd.f32 %v1014, %v1323
        %v1325 = vpop.f32.mrb[0].mxu0
        %v1326 = vadd.f32 %v1010, %v1325
        %v1327 = vpop.f32.mrb[0].mxu0
        %v1328 = vadd.f32 %v1014, %v1327
        %1329 = vmatprep.mubr.bf16.mxu0 %v1146
        %1330 = vmatmul.mubr.bf16.gmra.mrb[0].mxu0 %v1145
        %v1331 = vpop.f32.mrb[0].mxu0
        %v1332 = vadd.f32 %v1010, %v1331
        %v1333 = vpop.f32.mrb[0].mxu0
        %v1334 = vadd.f32 %v1014, %v1333
        %v1335 = vpop.f32.mrb[0].mxu0
        %v1336 = vadd.f32 %v1010, %v1335
        %v1337 = vpop.f32.mrb[0].mxu0
        %v1338 = vadd.f32 %v1014, %v1337
        %1339 = vmatprep.mubr.bf16.mxu0 %v1148
        %1340 = vmatmul.mubr.bf16.gmra.mrb[0].mxu0 %v1147
        %v1341 = vpop.f32.mrb[0].mxu0
        %v1342 = vadd.f32 %v1010, %v1341
        %v1343 = vpop.f32.mrb[0].mxu0
        %v1344 = vadd.f32 %v1014, %v1343
        %v1345 = vpop.f32.mrb[0].mxu0
        %v1346 = vadd.f32 %v1010, %v1345
        %v1347 = vpop.f32.mrb[0].mxu0
        %v1348 = vadd.f32 %v1014, %v1347
        %1349 = vmatprep.mubr.bf16.mxu0 %v1150
        %1350 = vmatmul.mubr.bf16.gmra.mrb[0].mxu0 %v1149
        %v1351 = vpop.f32.mrb[0].mxu0
        %v1352 = vadd.f32 %v1010, %v1351
        %v1353 = vpop.f32.mrb[0].mxu0
        %v1354 = vadd.f32 %v1014, %v1353
        %v1355 = vpop.f32.mrb[0].mxu0
        %v1356 = vadd.f32 %v1010, %v1355
        %v1357 = vpop.f32.mrb[0].mxu0
        %v1358 = vadd.f32 %v1014, %v1357
        %1359 = vmatprep.mubr.bf16.mxu0 %v1152
        %1360 = vmatmul.mubr.bf16.gmra.mrb[0].mxu0 %v1151
        %v1361 = vpop.f32.mrb[0].mxu0
        %v1362 = vadd.f32 %v1010, %v1361
        %v1363 = vpop.f32.mrb[0].mxu0
        %v1364 = vadd.f32 %v1014, %v1363
        %v1365 = vpop.f32.mrb[0].mxu0
        %v1366 = vadd.f32 %v1010, %v1365
        %v1367 = vpop.f32.mrb[0].mxu0
        %v1368 = vadd.f32 %v1014, %v1367
        %1369 = vmatprep.mubr.bf16.mxu0 %v1154
        %1370 = vmatmul.mubr.bf16.gmra.mrb[0].mxu0 %v1153
        %v1371 = vpop.f32.mrb[0].mxu0
        %v1372 = vadd.f32 %v1010, %v1371
        %v1373 = vpop.f32.mrb[0].mxu0
        %v1374 = vadd.f32 %v1014, %v1373
        %v1375 = vpop.f32.mrb[0].mxu0
        %v1376 = vadd.f32 %v1010, %v1375
        %v1377 = vpop.f32.mrb[0].mxu0
        %v1378 = vadd.f32 %v1014, %v1377
        %1379 = vdwg.mxu0
        %1380 = vmatprep.subr.bf16.mxu0 %v944
        %1381 = vmatpush1.bf16.msra.mxu0 %v943
        %1382 = vmatprep.subr.bf16.mxu0 %v948
        %1383 = vmatpush1.bf16.msra.mxu0 %v947
        %1384 = vmatprep.subr.bf16.mxu0 %v952
        %1385 = vmatpush1.bf16.msra.mxu0 %v951
        %1386 = vmatprep.subr.bf16.mxu0 %v956
        %1387 = vmatpush1.bf16.msra.mxu0 %v955
        %1388 = vmatprep.subr.bf16.mxu0 %v960
        %1389 = vmatpush1.bf16.msra.mxu0 %v959
        %1390 = vmatprep.subr.bf16.mxu0 %v964
        %1391 = vmatpush1.bf16.msra.mxu0 %v963
        %1392 = vmatprep.subr.bf16.mxu0 %v968
        %1393 = vmatpush1.bf16.msra.mxu0 %v967
        %1394 = vmatprep.subr.bf16.mxu0 %v972
        %1395 = vmatpush1.bf16.msra.mxu0 %v971
        %1396 = vmatprep.subr.bf16.mxu0 %v976
        %1397 = vmatpush1.bf16.msra.mxu0 %v975
        %1398 = vmatprep.subr.bf16.mxu0 %v980
        %1399 = vmatpush1.bf16.msra.mxu0 %v979
        %1400 = vmatprep.subr.bf16.mxu0 %v984
        %1401 = vmatpush1.bf16.msra.mxu0 %v983
        %1402 = vmatprep.subr.bf16.mxu0 %v988
        %1403 = vmatpush1.bf16.msra.mxu0 %v987
        %1404 = vmatprep.subr.bf16.mxu0 %v992
        %1405 = vmatpush1.bf16.msra.mxu0 %v991
        %1406 = vmatprep.subr.bf16.mxu0 %v996
        %1407 = vmatpush1.bf16.msra.mxu0 %v995
        %1408 = vmatprep.subr.bf16.mxu0 %v1000
        %1409 = vmatpush1.bf16.msra.mxu0 %v999
        %1410 = vmatprep.subr.bf16.mxu0 %v1004
        %1411 = vmatpush1.bf16.msra.mxu0 %v1003
        %1412 = vmatprep.mubr.bf16.mxu0 %v1124
        %1413 = vmatmul.mubr.bf16.gmra.mrb[0].mxu0 %v1123
        %v1414 = vpop.f32.mrb[0].mxu0
        %v1415 = vadd.f32 %v1018, %v1414
        %v1416 = vpop.f32.mrb[0].mxu0
        %v1417 = vadd.f32 %v1022, %v1416
        %v1418 = vpop.f32.mrb[0].mxu0
        %v1419 = vadd.f32 %v1018, %v1418
        %v1420 = vpop.f32.mrb[0].mxu0
        %v1421 = vadd.f32 %v1022, %v1420
        %1422 = vmatprep.mubr.bf16.mxu0 %v1126
        %1423 = vmatmul.mubr.bf16.gmra.mrb[0].mxu0 %v1125
        %v1424 = vpop.f32.mrb[0].mxu0
        %v1425 = vadd.f32 %v1018, %v1424
        %v1426 = vpop.f32.mrb[0].mxu0
        %v1427 = vadd.f32 %v1022, %v1426
        %v1428 = vpop.f32.mrb[0].mxu0
        %v1429 = vadd.f32 %v1018, %v1428
        %v1430 = vpop.f32.mrb[0].mxu0
        %v1431 = vadd.f32 %v1022, %v1430
        %1432 = vmatprep.mubr.bf16.mxu0 %v1128
        %1433 = vmatmul.mubr.bf16.gmra.mrb[0].mxu0 %v1127
        %v1434 = vpop.f32.mrb[0].mxu0
        %v1435 = vadd.f32 %v1018, %v1434
        %v1436 = vpop.f32.mrb[0].mxu0
        %v1437 = vadd.f32 %v1022, %v1436
        %v1438 = vpop.f32.mrb[0].mxu0
        %v1439 = vadd.f32 %v1018, %v1438
        %v1440 = vpop.f32.mrb[0].mxu0
        %v1441 = vadd.f32 %v1022, %v1440
        %1442 = vmatprep.mubr.bf16.mxu0 %v1130
        %1443 = vmatmul.mubr.bf16.gmra.mrb[0].mxu0 %v1129
        %v1444 = vpop.f32.mrb[0].mxu0
        %v1445 = vadd.f32 %v1018, %v1444
        %v1446 = vpop.f32.mrb[0].mxu0
        %v1447 = vadd.f32 %v1022, %v1446
        %v1448 = vpop.f32.mrb[0].mxu0
        %v1449 = vadd.f32 %v1018, %v1448
        %v1450 = vpop.f32.mrb[0].mxu0
        %v1451 = vadd.f32 %v1022, %v1450
        %1452 = vmatprep.mubr.bf16.mxu0 %v1132
        %1453 = vmatmul.mubr.bf16.gmra.mrb[0].mxu0 %v1131
        %v1454 = vpop.f32.mrb[0].mxu0
        %v1455 = vadd.f32 %v1018, %v1454
        %v1456 = vpop.f32.mrb[0].mxu0
        %v1457 = vadd.f32 %v1022, %v1456
        %v1458 = vpop.f32.mrb[0].mxu0
        %v1459 = vadd.f32 %v1018, %v1458
        %v1460 = vpop.f32.mrb[0].mxu0
        %v1461 = vadd.f32 %v1022, %v1460
        %1462 = vmatprep.mubr.bf16.mxu0 %v1134
        %1463 = vmatmul.mubr.bf16.gmra.mrb[0].mxu0 %v1133
        %v1464 = vpop.f32.mrb[0].mxu0
        %v1465 = vadd.f32 %v1018, %v1464
        %v1466 = vpop.f32.mrb[0].mxu0
        %v1467 = vadd.f32 %v1022, %v1466
        %v1468 = vpop.f32.mrb[0].mxu0
        %v1469 = vadd.f32 %v1018, %v1468
        %v1470 = vpop.f32.mrb[0].mxu0
        %v1471 = vadd.f32 %v1022, %v1470
        %1472 = vmatprep.mubr.bf16.mxu0 %v1136
        %1473 = vmatmul.mubr.bf16.gmra.mrb[0].mxu0 %v1135
        %v1474 = vpop.f32.mrb[0].mxu0
        %v1475 = vadd.f32 %v1018, %v1474
        %v1476 = vpop.f32.mrb[0].mxu0
        %v1477 = vadd.f32 %v1022, %v1476
        %v1478 = vpop.f32.mrb[0].mxu0
        %v1479 = vadd.f32 %v1018, %v1478
        %v1480 = vpop.f32.mrb[0].mxu0
        %v1481 = vadd.f32 %v1022, %v1480
        %1482 = vmatprep.mubr.bf16.mxu0 %v1138
        %1483 = vmatmul.mubr.bf16.gmra.mrb[0].mxu0 %v1137
        %v1484 = vpop.f32.mrb[0].mxu0
        %v1485 = vadd.f32 %v1018, %v1484
        %v1486 = vpop.f32.mrb[0].mxu0
        %v1487 = vadd.f32 %v1022, %v1486
        %v1488 = vpop.f32.mrb[0].mxu0
        %v1489 = vadd.f32 %v1018, %v1488
        %v1490 = vpop.f32.mrb[0].mxu0
        %v1491 = vadd.f32 %v1022, %v1490
        %1492 = vmatprep.mubr.bf16.mxu0 %v1140
        %1493 = vmatmul.mubr.bf16.gmra.mrb[0].mxu0 %v1139
        %v1494 = vpop.f32.mrb[0].mxu0
        %v1495 = vadd.f32 %v1018, %v1494
        %v1496 = vpop.f32.mrb[0].mxu0
        %v1497 = vadd.f32 %v1022, %v1496
        %v1498 = vpop.f32.mrb[0].mxu0
        %v1499 = vadd.f32 %v1018, %v1498
        %v1500 = vpop.f32.mrb[0].mxu0
        %v1501 = vadd.f32 %v1022, %v1500
        %1502 = vmatprep.mubr.bf16.mxu0 %v1142
        %1503 = vmatmul.mubr.bf16.gmra.mrb[0].mxu0 %v1141
        %v1504 = vpop.f32.mrb[0].mxu0
        %v1505 = vadd.f32 %v1018, %v1504
        %v1506 = vpop.f32.mrb[0].mxu0
        %v1507 = vadd.f32 %v1022, %v1506
        %v1508 = vpop.f32.mrb[0].mxu0
        %v1509 = vadd.f32 %v1018, %v1508
        %v1510 = vpop.f32.mrb[0].mxu0
        %v1511 = vadd.f32 %v1022, %v1510
        %1512 = vmatprep.mubr.bf16.mxu0 %v1144
        %1513 = vmatmul.mubr.bf16.gmra.mrb[0].mxu0 %v1143
        %v1514 = vpop.f32.mrb[0].mxu0
        %v1515 = vadd.f32 %v1018, %v1514
        %v1516 = vpop.f32.mrb[0].mxu0
        %v1517 = vadd.f32 %v1022, %v1516
        %v1518 = vpop.f32.mrb[0].mxu0
        %v1519 = vadd.f32 %v1018, %v1518
        %v1520 = vpop.f32.mrb[0].mxu0
        %v1521 = vadd.f32 %v1022, %v1520
        %1522 = vmatprep.mubr.bf16.mxu0 %v1146
        %1523 = vmatmul.mubr.bf16.gmra.mrb[0].mxu0 %v1145
        %v1524 = vpop.f32.mrb[0].mxu0
        %v1525 = vadd.f32 %v1018, %v1524
        %v1526 = vpop.f32.mrb[0].mxu0
        %v1527 = vadd.f32 %v1022, %v1526
        %v1528 = vpop.f32.mrb[0].mxu0
        %v1529 = vadd.f32 %v1018, %v1528
        %v1530 = vpop.f32.mrb[0].mxu0
        %v1531 = vadd.f32 %v1022, %v1530
        %1532 = vmatprep.mubr.bf16.mxu0 %v1148
        %1533 = vmatmul.mubr.bf16.gmra.mrb[0].mxu0 %v1147
        %v1534 = vpop.f32.mrb[0].mxu0
        %v1535 = vadd.f32 %v1018, %v1534
        %v1536 = vpop.f32.mrb[0].mxu0
        %v1537 = vadd.f32 %v1022, %v1536
        %v1538 = vpop.f32.mrb[0].mxu0
        %v1539 = vadd.f32 %v1018, %v1538
        %v1540 = vpop.f32.mrb[0].mxu0
        %v1541 = vadd.f32 %v1022, %v1540
        %1542 = vmatprep.mubr.bf16.mxu0 %v1150
        %1543 = vmatmul.mubr.bf16.gmra.mrb[0].mxu0 %v1149
        %v1544 = vpop.f32.mrb[0].mxu0
        %v1545 = vadd.f32 %v1018, %v1544
        %v1546 = vpop.f32.mrb[0].mxu0
        %v1547 = vadd.f32 %v1022, %v1546
        %v1548 = vpop.f32.mrb[0].mxu0
        %v1549 = vadd.f32 %v1018, %v1548
        %v1550 = vpop.f32.mrb[0].mxu0
        %v1551 = vadd.f32 %v1022, %v1550
        %1552 = vmatprep.mubr.bf16.mxu0 %v1152
        %1553 = vmatmul.mubr.bf16.gmra.mrb[0].mxu0 %v1151
        %v1554 = vpop.f32.mrb[0].mxu0
        %v1555 = vadd.f32 %v1018, %v1554
        %v1556 = vpop.f32.mrb[0].mxu0
        %v1557 = vadd.f32 %v1022, %v1556
        %v1558 = vpop.f32.mrb[0].mxu0
        %v1559 = vadd.f32 %v1018, %v1558
        %v1560 = vpop.f32.mrb[0].mxu0
        %v1561 = vadd.f32 %v1022, %v1560
        %1562 = vmatprep.mubr.bf16.mxu0 %v1154
        %1563 = vmatmul.mubr.bf16.gmra.mrb[0].mxu0 %v1153
        %v1564 = vpop.f32.mrb[0].mxu0
        %v1565 = vadd.f32 %v1018, %v1564
        %v1566 = vpop.f32.mrb[0].mxu0
        %v1567 = vadd.f32 %v1022, %v1566
        %v1568 = vpop.f32.mrb[0].mxu0
        %v1569 = vadd.f32 %v1018, %v1568
        %v1570 = vpop.f32.mrb[0].mxu0
        %v1571 = vadd.f32 %v1022, %v1570
        %1572 = vdwg.mxu0
        %v1573 = vmax.f32 %v1222, 0.0
        %v1574 = vmax.f32 %v1224, 0.0
        %v1575 = vmax.f32 %v1415, 0.0
        %v1576 = vmax.f32 %v1417, 0.0
        %v1577 = vmax.f32 %v1226, 0.0
        %v1578 = vmax.f32 %v1228, 0.0
        %v1579 = vmax.f32 %v1419, 0.0
        %v1580 = vmax.f32 %v1421, 0.0
        %v1581 = vmax.f32 %v1232, 0.0
        %v1582 = vmax.f32 %v1234, 0.0
        %v1583 = vmax.f32 %v1425, 0.0
        %v1584 = vmax.f32 %v1427, 0.0
        %v1585 = vmax.f32 %v1236, 0.0
        %v1586 = vmax.f32 %v1238, 0.0
        %v1587 = vmax.f32 %v1429, 0.0
        %v1588 = vmax.f32 %v1431, 0.0
        %v1589 = vmax.f32 %v1242, 0.0
        %v1590 = vmax.f32 %v1244, 0.0
        %v1591 = vmax.f32 %v1435, 0.0
        %v1592 = vmax.f32 %v1437, 0.0
        %v1593 = vmax.f32 %v1246, 0.0
        %v1594 = vmax.f32 %v1248, 0.0
        %v1595 = vmax.f32 %v1439, 0.0
        %v1596 = vmax.f32 %v1441, 0.0
        %v1597 = vmax.f32 %v1252, 0.0
        %v1598 = vmax.f32 %v1254, 0.0
        %v1599 = vmax.f32 %v1445, 0.0
        %v1600 = vmax.f32 %v1447, 0.0
        %v1601 = vmax.f32 %v1256, 0.0
        %v1602 = vmax.f32 %v1258, 0.0
        %v1603 = vmax.f32 %v1449, 0.0
        %v1604 = vmax.f32 %v1451, 0.0
        %v1605 = vmax.f32 %v1262, 0.0
        %v1606 = vmax.f32 %v1264, 0.0
        %v1607 = vmax.f32 %v1455, 0.0
        %v1608 = vmax.f32 %v1457, 0.0
        %v1609 = vmax.f32 %v1266, 0.0
        %v1610 = vmax.f32 %v1268, 0.0
        %v1611 = vmax.f32 %v1459, 0.0
        %v1612 = vmax.f32 %v1461, 0.0
        %v1613 = vmax.f32 %v1272, 0.0
        %v1614 = vmax.f32 %v1274, 0.0
        %v1615 = vmax.f32 %v1465, 0.0
        %v1616 = vmax.f32 %v1467, 0.0
        %v1617 = vmax.f32 %v1276, 0.0
        %v1618 = vmax.f32 %v1278, 0.0
        %v1619 = vmax.f32 %v1469, 0.0
        %v1620 = vmax.f32 %v1471, 0.0
        %v1621 = vmax.f32 %v1282, 0.0
        %v1622 = vmax.f32 %v1284, 0.0
        %v1623 = vmax.f32 %v1475, 0.0
        %v1624 = vmax.f32 %v1477, 0.0
        %v1625 = vmax.f32 %v1286, 0.0
        %v1626 = vmax.f32 %v1288, 0.0
        %v1627 = vmax.f32 %v1479, 0.0
        %v1628 = vmax.f32 %v1481, 0.0
        %v1629 = vmax.f32 %v1292, 0.0
        %v1630 = vmax.f32 %v1294, 0.0
        %v1631 = vmax.f32 %v1485, 0.0
        %v1632 = vmax.f32 %v1487, 0.0
        %v1633 = vmax.f32 %v1296, 0.0
        %v1634 = vmax.f32 %v1298, 0.0
        %v1635 = vmax.f32 %v1489, 0.0
        %v1636 = vmax.f32 %v1491, 0.0
        %v1637 = vmax.f32 %v1302, 0.0
        %v1638 = vmax.f32 %v1304, 0.0
        %v1639 = vmax.f32 %v1495, 0.0
        %v1640 = vmax.f32 %v1497, 0.0
        %v1641 = vmax.f32 %v1306, 0.0
        %v1642 = vmax.f32 %v1308, 0.0
        %v1643 = vmax.f32 %v1499, 0.0
        %v1644 = vmax.f32 %v1501, 0.0
        %v1645 = vmax.f32 %v1312, 0.0
        %v1646 = vmax.f32 %v1314, 0.0
        %v1647 = vmax.f32 %v1505, 0.0
        %v1648 = vmax.f32 %v1507, 0.0
        %v1649 = vmax.f32 %v1316, 0.0
        %v1650 = vmax.f32 %v1318, 0.0
        %v1651 = vmax.f32 %v1509, 0.0
        %v1652 = vmax.f32 %v1511, 0.0
        %v1653 = vmax.f32 %v1322, 0.0
        %v1654 = vmax.f32 %v1324, 0.0
        %v1655 = vmax.f32 %v1515, 0.0
        %v1656 = vmax.f32 %v1517, 0.0
        %v1657 = vmax.f32 %v1326, 0.0
        %v1658 = vmax.f32 %v1328, 0.0
        %v1659 = vmax.f32 %v1519, 0.0
        %v1660 = vmax.f32 %v1521, 0.0
        %v1661 = vmax.f32 %v1332, 0.0
        %v1662 = vmax.f32 %v1334, 0.0
        %v1663 = vmax.f32 %v1525, 0.0
        %v1664 = vmax.f32 %v1527, 0.0
        %v1665 = vmax.f32 %v1336, 0.0
        %v1666 = vmax.f32 %v1338, 0.0
        %v1667 = vmax.f32 %v1529, 0.0
        %v1668 = vmax.f32 %v1531, 0.0
        %v1669 = vmax.f32 %v1342, 0.0
        %v1670 = vmax.f32 %v1344, 0.0
        %v1671 = vmax.f32 %v1535, 0.0
        %v1672 = vmax.f32 %v1537, 0.0
        %v1673 = vmax.f32 %v1346, 0.0
        %v1674 = vmax.f32 %v1348, 0.0
        %v1675 = vmax.f32 %v1539, 0.0
        %v1676 = vmax.f32 %v1541, 0.0
        %v1677 = vmax.f32 %v1352, 0.0
        %v1678 = vmax.f32 %v1354, 0.0
        %v1679 = vmax.f32 %v1545, 0.0
        %v1680 = vmax.f32 %v1547, 0.0
        %v1681 = vmax.f32 %v1356, 0.0
        %v1682 = vmax.f32 %v1358, 0.0
        %v1683 = vmax.f32 %v1549, 0.0
        %v1684 = vmax.f32 %v1551, 0.0
        %v1685 = vmax.f32 %v1362, 0.0
        %v1686 = vmax.f32 %v1364, 0.0
        %v1687 = vmax.f32 %v1555, 0.0
        %v1688 = vmax.f32 %v1557, 0.0
        %v1689 = vmax.f32 %v1366, 0.0
        %v1690 = vmax.f32 %v1368, 0.0
        %v1691 = vmax.f32 %v1559, 0.0
        %v1692 = vmax.f32 %v1561, 0.0
        %v1693 = vmax.f32 %v1372, 0.0
        %v1694 = vmax.f32 %v1374, 0.0
        %v1695 = vmax.f32 %v1565, 0.0
        %v1696 = vmax.f32 %v1567, 0.0
        %v1697 = vmax.f32 %v1376, 0.0
        %v1698 = vmax.f32 %v1378, 0.0
        %v1699 = vmax.f32 %v1569, 0.0
        %v1700 = vmax.f32 %v1571, 0.0
        %v1701 = vpack.c.bf16 %v1577, %v1573
        %v1702 = vpack.c.bf16 %v1578, %v1574
        %v1703 = vpack.c.bf16 %v1579, %v1575
        %v1704 = vpack.c.bf16 %v1580, %v1576
        %v1705 = vpack.c.bf16 %v1585, %v1581
        %v1706 = vpack.c.bf16 %v1586, %v1582
        %v1707 = vpack.c.bf16 %v1587, %v1583
        %v1708 = vpack.c.bf16 %v1588, %v1584
        %v1709 = vpack.c.bf16 %v1593, %v1589
        %v1710 = vpack.c.bf16 %v1594, %v1590
        %v1711 = vpack.c.bf16 %v1595, %v1591
        %v1712 = vpack.c.bf16 %v1596, %v1592
        %v1713 = vpack.c.bf16 %v1601, %v1597
        %v1714 = vpack.c.bf16 %v1602, %v1598
        %v1715 = vpack.c.bf16 %v1603, %v1599
        %v1716 = vpack.c.bf16 %v1604, %v1600
        %v1717 = vpack.c.bf16 %v1609, %v1605
        %v1718 = vpack.c.bf16 %v1610, %v1606
        %v1719 = vpack.c.bf16 %v1611, %v1607
        %v1720 = vpack.c.bf16 %v1612, %v1608
        %v1721 = vpack.c.bf16 %v1617, %v1613
        %v1722 = vpack.c.bf16 %v1618, %v1614
        %v1723 = vpack.c.bf16 %v1619, %v1615
        %v1724 = vpack.c.bf16 %v1620, %v1616
        %v1725 = vpack.c.bf16 %v1625, %v1621
        %v1726 = vpack.c.bf16 %v1626, %v1622
        %v1727 = vpack.c.bf16 %v1627, %v1623
        %v1728 = vpack.c.bf16 %v1628, %v1624
        %v1729 = vpack.c.bf16 %v1633, %v1629
        %v1730 = vpack.c.bf16 %v1634, %v1630
        %v1731 = vpack.c.bf16 %v1635, %v1631
        %v1732 = vpack.c.bf16 %v1636, %v1632
        %v1733 = vpack.c.bf16 %v1641, %v1637
        %v1734 = vpack.c.bf16 %v1642, %v1638
        %v1735 = vpack.c.bf16 %v1643, %v1639
        %v1736 = vpack.c.bf16 %v1644, %v1640
        %v1737 = vpack.c.bf16 %v1649, %v1645
        %v1738 = vpack.c.bf16 %v1650, %v1646
        %v1739 = vpack.c.bf16 %v1651, %v1647
        %v1740 = vpack.c.bf16 %v1652, %v1648
        %v1741 = vpack.c.bf16 %v1657, %v1653
        %v1742 = vpack.c.bf16 %v1658, %v1654
        %v1743 = vpack.c.bf16 %v1659, %v1655
        %v1744 = vpack.c.bf16 %v1660, %v1656
        %v1745 = vpack.c.bf16 %v1665, %v1661
        %v1746 = vpack.c.bf16 %v1666, %v1662
        %v1747 = vpack.c.bf16 %v1667, %v1663
        %v1748 = vpack.c.bf16 %v1668, %v1664
        %v1749 = vpack.c.bf16 %v1673, %v1669
        %v1750 = vpack.c.bf16 %v1674, %v1670
        %v1751 = vpack.c.bf16 %v1675, %v1671
        %v1752 = vpack.c.bf16 %v1676, %v1672
        %v1753 = vpack.c.bf16 %v1681, %v1677
        %v1754 = vpack.c.bf16 %v1682, %v1678
        %v1755 = vpack.c.bf16 %v1683, %v1679
        %v1756 = vpack.c.bf16 %v1684, %v1680
        %v1757 = vpack.c.bf16 %v1689, %v1685
        %v1758 = vpack.c.bf16 %v1690, %v1686
        %v1759 = vpack.c.bf16 %v1691, %v1687
        %v1760 = vpack.c.bf16 %v1692, %v1688
        %v1761 = vpack.c.bf16 %v1697, %v1693
        %v1762 = vpack.c.bf16 %v1698, %v1694
        %v1763 = vpack.c.bf16 %v1699, %v1695
        %v1764 = vpack.c.bf16 %v1700, %v1696
        %v1765 = vld [vmem:[#allocation2] sm:$0xff]
        %v1766 = vld [vmem:[#allocation2 + $0x8] sm:$0xff]
        %v1767 = vld [vmem:[#allocation2 + $0x10] sm:$0xff]
        %v1768 = vld [vmem:[#allocation2 + $0x18] sm:$0xff]
        %v1769 = vld [vmem:[#allocation2 + $0x20] sm:$0xff]
        %v1770 = vld [vmem:[#allocation2 + $0x28] sm:$0xff]
        %v1771 = vld [vmem:[#allocation2 + $0x30] sm:$0xff]
        %v1772 = vld [vmem:[#allocation2 + $0x38] sm:$0xff]
        %v1773 = vld [vmem:[#allocation2 + $0x40] sm:$0xff]
        %v1774 = vld [vmem:[#allocation2 + $0x48] sm:$0xff]
        %v1775 = vld [vmem:[#allocation2 + $0x50] sm:$0xff]
        %v1776 = vld [vmem:[#allocation2 + $0x58] sm:$0xff]
        %v1777 = vld [vmem:[#allocation2 + $0x60] sm:$0xff]
        %v1778 = vld [vmem:[#allocation2 + $0x68] sm:$0xff]
        %v1779 = vld [vmem:[#allocation2 + $0x70] sm:$0xff]
        %v1780 = vld [vmem:[#allocation2 + $0x78] sm:$0xff]
        %v1781 = vld [vmem:[#allocation2 + $0x80] sm:$0xff]
        %v1782 = vld [vmem:[#allocation2 + $0x88] sm:$0xff]
        %v1783 = vld [vmem:[#allocation2 + $0x90] sm:$0xff]
        %v1784 = vld [vmem:[#allocation2 + $0x98] sm:$0xff]
        %v1785 = vld [vmem:[#allocation2 + $0xa0] sm:$0xff]
        %v1786 = vld [vmem:[#allocation2 + $0xa8] sm:$0xff]
        %v1787 = vld [vmem:[#allocation2 + $0xb0] sm:$0xff]
        %v1788 = vld [vmem:[#allocation2 + $0xb8] sm:$0xff]
        %v1789 = vld [vmem:[#allocation2 + $0xc0] sm:$0xff]
        %v1790 = vld [vmem:[#allocation2 + $0xc8] sm:$0xff]
        %v1791 = vld [vmem:[#allocation2 + $0xd0] sm:$0xff]
        %v1792 = vld [vmem:[#allocation2 + $0xd8] sm:$0xff]
        %v1793 = vld [vmem:[#allocation2 + $0xe0] sm:$0xff]
        %v1794 = vld [vmem:[#allocation2 + $0xe8] sm:$0xff]
        %v1795 = vld [vmem:[#allocation2 + $0xf0] sm:$0xff]
        %v1796 = vld [vmem:[#allocation2 + $0xf8] sm:$0xff]
        %v1797 = vld [vmem:[#allocation2 + $0x100] sm:$0xff]
        %v1798 = vld [vmem:[#allocation2 + $0x108] sm:$0xff]
        %v1799 = vld [vmem:[#allocation2 + $0x110] sm:$0xff]
        %v1800 = vld [vmem:[#allocation2 + $0x118] sm:$0xff]
        %v1801 = vld [vmem:[#allocation2 + $0x120] sm:$0xff]
        %v1802 = vld [vmem:[#allocation2 + $0x128] sm:$0xff]
        %v1803 = vld [vmem:[#allocation2 + $0x130] sm:$0xff]
        %v1804 = vld [vmem:[#allocation2 + $0x138] sm:$0xff]
        %v1805 = vld [vmem:[#allocation2 + $0x140] sm:$0xff]
        %v1806 = vld [vmem:[#allocation2 + $0x148] sm:$0xff]
        %v1807 = vld [vmem:[#allocation2 + $0x150] sm:$0xff]
        %v1808 = vld [vmem:[#allocation2 + $0x158] sm:$0xff]
        %v1809 = vld [vmem:[#allocation2 + $0x160] sm:$0xff]
        %v1810 = vld [vmem:[#allocation2 + $0x168] sm:$0xff]
        %v1811 = vld [vmem:[#allocation2 + $0x170] sm:$0xff]
        %v1812 = vld [vmem:[#allocation2 + $0x178] sm:$0xff]
        %v1813 = vld [vmem:[#allocation2 + $0x180] sm:$0xff]
        %v1814 = vld [vmem:[#allocation2 + $0x188] sm:$0xff]
        %v1815 = vld [vmem:[#allocation2 + $0x190] sm:$0xff]
        %v1816 = vld [vmem:[#allocation2 + $0x198] sm:$0xff]
        %v1817 = vld [vmem:[#allocation2 + $0x1a0] sm:$0xff]
        %v1818 = vld [vmem:[#allocation2 + $0x1a8] sm:$0xff]
        %v1819 = vld [vmem:[#allocation2 + $0x1b0] sm:$0xff]
        %v1820 = vld [vmem:[#allocation2 + $0x1b8] sm:$0xff]
        %v1821 = vld [vmem:[#allocation2 + $0x1c0] sm:$0xff]
        %v1822 = vld [vmem:[#allocation2 + $0x1c8] sm:$0xff]
        %v1823 = vld [vmem:[#allocation2 + $0x1d0] sm:$0xff]
        %v1824 = vld [vmem:[#allocation2 + $0x1d8] sm:$0xff]
        %v1825 = vld [vmem:[#allocation2 + $0x1e0] sm:$0xff]
        %v1826 = vld [vmem:[#allocation2 + $0x1e8] sm:$0xff]
        %v1827 = vld [vmem:[#allocation2 + $0x1f0] sm:$0xff]
        %v1828 = vld [vmem:[#allocation2 + $0x1f8] sm:$0xff]
        %v1829 = vld [vmem:[#allocation2 + $0x200] sm:$0xff]
        %v1830 = vld [vmem:[#allocation2 + $0x208] sm:$0xff]
        %v1831 = vld [vmem:[#allocation2 + $0x210] sm:$0xff]
        %v1832 = vld [vmem:[#allocation2 + $0x218] sm:$0xff]
        %v1833 = vld [vmem:[#allocation2 + $0x220] sm:$0xff]
        %v1834 = vld [vmem:[#allocation2 + $0x228] sm:$0xff]
        %v1835 = vld [vmem:[#allocation2 + $0x230] sm:$0xff]
        %v1836 = vld [vmem:[#allocation2 + $0x238] sm:$0xff]
        %v1837 = vld [vmem:[#allocation2 + $0x240] sm:$0xff]
        %v1838 = vld [vmem:[#allocation2 + $0x248] sm:$0xff]
        %v1839 = vld [vmem:[#allocation2 + $0x250] sm:$0xff]
        %v1840 = vld [vmem:[#allocation2 + $0x258] sm:$0xff]
        %v1841 = vld [vmem:[#allocation2 + $0x260] sm:$0xff]
        %v1842 = vld [vmem:[#allocation2 + $0x268] sm:$0xff]
        %v1843 = vld [vmem:[#allocation2 + $0x270] sm:$0xff]
        %v1844 = vld [vmem:[#allocation2 + $0x278] sm:$0xff]
        %v1845 = vld [vmem:[#allocation2 + $0x280] sm:$0xff]
        %v1846 = vld [vmem:[#allocation2 + $0x288] sm:$0xff]
        %v1847 = vld [vmem:[#allocation2 + $0x290] sm:$0xff]
        %v1848 = vld [vmem:[#allocation2 + $0x298] sm:$0xff]
        %v1849 = vld [vmem:[#allocation2 + $0x2a0] sm:$0xff]
        %v1850 = vld [vmem:[#allocation2 + $0x2a8] sm:$0xff]
        %v1851 = vld [vmem:[#allocation2 + $0x2b0] sm:$0xff]
        %v1852 = vld [vmem:[#allocation2 + $0x2b8] sm:$0xff]
        %v1853 = vld [vmem:[#allocation2 + $0x2c0] sm:$0xff]
        %v1854 = vld [vmem:[#allocation2 + $0x2c8] sm:$0xff]
        %v1855 = vld [vmem:[#allocation2 + $0x2d0] sm:$0xff]
        %v1856 = vld [vmem:[#allocation2 + $0x2d8] sm:$0xff]
        %v1857 = vld [vmem:[#allocation2 + $0x2e0] sm:$0xff]
        %v1858 = vld [vmem:[#allocation2 + $0x2e8] sm:$0xff]
        %v1859 = vld [vmem:[#allocation2 + $0x2f0] sm:$0xff]
        %v1860 = vld [vmem:[#allocation2 + $0x2f8] sm:$0xff]
        %v1861 = vld [vmem:[#allocation2 + $0x300] sm:$0xff]
        %v1862 = vld [vmem:[#allocation2 + $0x308] sm:$0xff]
        %v1863 = vld [vmem:[#allocation2 + $0x310] sm:$0xff]
        %v1864 = vld [vmem:[#allocation2 + $0x318] sm:$0xff]
        %v1865 = vld [vmem:[#allocation2 + $0x320] sm:$0xff]
        %v1866 = vld [vmem:[#allocation2 + $0x328] sm:$0xff]
        %v1867 = vld [vmem:[#allocation2 + $0x330] sm:$0xff]
        %v1868 = vld [vmem:[#allocation2 + $0x338] sm:$0xff]
        %v1869 = vld [vmem:[#allocation2 + $0x340] sm:$0xff]
        %v1870 = vld [vmem:[#allocation2 + $0x348] sm:$0xff]
        %v1871 = vld [vmem:[#allocation2 + $0x350] sm:$0xff]
        %v1872 = vld [vmem:[#allocation2 + $0x358] sm:$0xff]
        %v1873 = vld [vmem:[#allocation2 + $0x360] sm:$0xff]
        %v1874 = vld [vmem:[#allocation2 + $0x368] sm:$0xff]
        %v1875 = vld [vmem:[#allocation2 + $0x370] sm:$0xff]
        %v1876 = vld [vmem:[#allocation2 + $0x378] sm:$0xff]
        %v1877 = vld [vmem:[#allocation2 + $0x380] sm:$0xff]
        %v1878 = vld [vmem:[#allocation2 + $0x388] sm:$0xff]
        %v1879 = vld [vmem:[#allocation2 + $0x390] sm:$0xff]
        %v1880 = vld [vmem:[#allocation2 + $0x398] sm:$0xff]
        %v1881 = vld [vmem:[#allocation2 + $0x3a0] sm:$0xff]
        %v1882 = vld [vmem:[#allocation2 + $0x3a8] sm:$0xff]
        %v1883 = vld [vmem:[#allocation2 + $0x3b0] sm:$0xff]
        %v1884 = vld [vmem:[#allocation2 + $0x3b8] sm:$0xff]
        %v1885 = vld [vmem:[#allocation2 + $0x3c0] sm:$0xff]
        %v1886 = vld [vmem:[#allocation2 + $0x3c8] sm:$0xff]
        %v1887 = vld [vmem:[#allocation2 + $0x3d0] sm:$0xff]
        %v1888 = vld [vmem:[#allocation2 + $0x3d8] sm:$0xff]
        %v1889 = vld [vmem:[#allocation2 + $0x3e0] sm:$0xff]
        %v1890 = vld [vmem:[#allocation2 + $0x3e8] sm:$0xff]
        %v1891 = vld [vmem:[#allocation2 + $0x3f0] sm:$0xff]
        %v1892 = vld [vmem:[#allocation2 + $0x3f8] sm:$0xff]
        %v2021 = vunpack.c.l.b16 %v1765
        %v2022 = vunpack.c.h.b16 %v1765
        %v2023 = vunpack.c.l.b16 %v1766
        %v2024 = vunpack.c.h.b16 %v1766
        %v2025 = vunpack.c.l.b16 %v1767
        %v2026 = vunpack.c.h.b16 %v1767
        %v2027 = vunpack.c.l.b16 %v1768
        %v2028 = vunpack.c.h.b16 %v1768
        %v2029 = vunpack.c.l.b16 %v1769
        %v2030 = vunpack.c.h.b16 %v1769
        %v2031 = vunpack.c.l.b16 %v1770
        %v2032 = vunpack.c.h.b16 %v1770
        %v2033 = vunpack.c.l.b16 %v1771
        %v2034 = vunpack.c.h.b16 %v1771
        %v2035 = vunpack.c.l.b16 %v1772
        %v2036 = vunpack.c.h.b16 %v1772
        %v2037 = vunpack.c.l.b16 %v1773
        %v2038 = vunpack.c.h.b16 %v1773
        %v2039 = vunpack.c.l.b16 %v1774
        %v2040 = vunpack.c.h.b16 %v1774
        %v2041 = vunpack.c.l.b16 %v1775
        %v2042 = vunpack.c.h.b16 %v1775
        %v2043 = vunpack.c.l.b16 %v1776
        %v2044 = vunpack.c.h.b16 %v1776
        %v2045 = vunpack.c.l.b16 %v1777
        %v2046 = vunpack.c.h.b16 %v1777
        %v2047 = vunpack.c.l.b16 %v1778
        %v2048 = vunpack.c.h.b16 %v1778
        %v2049 = vunpack.c.l.b16 %v1779
        %v2050 = vunpack.c.h.b16 %v1779
        %v2051 = vunpack.c.l.b16 %v1780
        %v2052 = vunpack.c.h.b16 %v1780
        %v2053 = vunpack.c.l.b16 %v1781
        %v2054 = vunpack.c.h.b16 %v1781
        %v2055 = vunpack.c.l.b16 %v1782
        %v2056 = vunpack.c.h.b16 %v1782
        %v2057 = vunpack.c.l.b16 %v1783
        %v2058 = vunpack.c.h.b16 %v1783
        %v2059 = vunpack.c.l.b16 %v1784
        %v2060 = vunpack.c.h.b16 %v1784
        %v2061 = vunpack.c.l.b16 %v1785
        %v2062 = vunpack.c.h.b16 %v1785
        %v2063 = vunpack.c.l.b16 %v1786
        %v2064 = vunpack.c.h.b16 %v1786
        %v2065 = vunpack.c.l.b16 %v1787
        %v2066 = vunpack.c.h.b16 %v1787
        %v2067 = vunpack.c.l.b16 %v1788
        %v2068 = vunpack.c.h.b16 %v1788
        %v2069 = vunpack.c.l.b16 %v1789
        %v2070 = vunpack.c.h.b16 %v1789
        %v2071 = vunpack.c.l.b16 %v1790
        %v2072 = vunpack.c.h.b16 %v1790
        %v2073 = vunpack.c.l.b16 %v1791
        %v2074 = vunpack.c.h.b16 %v1791
        %v2075 = vunpack.c.l.b16 %v1792
        %v2076 = vunpack.c.h.b16 %v1792
        %v2077 = vunpack.c.l.b16 %v1793
        %v2078 = vunpack.c.h.b16 %v1793
        %v2079 = vunpack.c.l.b16 %v1794
        %v2080 = vunpack.c.h.b16 %v1794
        %v2081 = vunpack.c.l.b16 %v1795
        %v2082 = vunpack.c.h.b16 %v1795
        %v2083 = vunpack.c.l.b16 %v1796
        %v2084 = vunpack.c.h.b16 %v1796
        %v2085 = vunpack.c.l.b16 %v1797
        %v2086 = vunpack.c.h.b16 %v1797
        %v2087 = vunpack.c.l.b16 %v1798
        %v2088 = vunpack.c.h.b16 %v1798
        %v2089 = vunpack.c.l.b16 %v1799
        %v2090 = vunpack.c.h.b16 %v1799
        %v2091 = vunpack.c.l.b16 %v1800
        %v2092 = vunpack.c.h.b16 %v1800
        %v2093 = vunpack.c.l.b16 %v1801
        %v2094 = vunpack.c.h.b16 %v1801
        %v2095 = vunpack.c.l.b16 %v1802
        %v2096 = vunpack.c.h.b16 %v1802
        %v2097 = vunpack.c.l.b16 %v1803
        %v2098 = vunpack.c.h.b16 %v1803
        %v2099 = vunpack.c.l.b16 %v1804
        %v2100 = vunpack.c.h.b16 %v1804
        %v2101 = vunpack.c.l.b16 %v1805
        %v2102 = vunpack.c.h.b16 %v1805
        %v2103 = vunpack.c.l.b16 %v1806
        %v2104 = vunpack.c.h.b16 %v1806
        %v2105 = vunpack.c.l.b16 %v1807
        %v2106 = vunpack.c.h.b16 %v1807
        %v2107 = vunpack.c.l.b16 %v1808
        %v2108 = vunpack.c.h.b16 %v1808
        %v2109 = vunpack.c.l.b16 %v1809
        %v2110 = vunpack.c.h.b16 %v1809
        %v2111 = vunpack.c.l.b16 %v1810
        %v2112 = vunpack.c.h.b16 %v1810
        %v2113 = vunpack.c.l.b16 %v1811
        %v2114 = vunpack.c.h.b16 %v1811
        %v2115 = vunpack.c.l.b16 %v1812
        %v2116 = vunpack.c.h.b16 %v1812
        %v2117 = vunpack.c.l.b16 %v1813
        %v2118 = vunpack.c.h.b16 %v1813
        %v2119 = vunpack.c.l.b16 %v1814
        %v2120 = vunpack.c.h.b16 %v1814
        %v2121 = vunpack.c.l.b16 %v1815
        %v2122 = vunpack.c.h.b16 %v1815
        %v2123 = vunpack.c.l.b16 %v1816
        %v2124 = vunpack.c.h.b16 %v1816
        %v2125 = vunpack.c.l.b16 %v1817
        %v2126 = vunpack.c.h.b16 %v1817
        %v2127 = vunpack.c.l.b16 %v1818
        %v2128 = vunpack.c.h.b16 %v1818
        %v2129 = vunpack.c.l.b16 %v1819
        %v2130 = vunpack.c.h.b16 %v1819
        %v2131 = vunpack.c.l.b16 %v1820
        %v2132 = vunpack.c.h.b16 %v1820
        %v2133 = vunpack.c.l.b16 %v1821
        %v2134 = vunpack.c.h.b16 %v1821
        %v2135 = vunpack.c.l.b16 %v1822
        %v2136 = vunpack.c.h.b16 %v1822
        %v2137 = vunpack.c.l.b16 %v1823
        %v2138 = vunpack.c.h.b16 %v1823
        %v2139 = vunpack.c.l.b16 %v1824
        %v2140 = vunpack.c.h.b16 %v1824
        %v2141 = vunpack.c.l.b16 %v1825
        %v2142 = vunpack.c.h.b16 %v1825
        %v2143 = vunpack.c.l.b16 %v1826
        %v2144 = vunpack.c.h.b16 %v1826
        %v2145 = vunpack.c.l.b16 %v1827
        %v2146 = vunpack.c.h.b16 %v1827
        %v2147 = vunpack.c.l.b16 %v1828
        %v2148 = vunpack.c.h.b16 %v1828
        %v2149 = vunpack.c.l.b16 %v1829
        %v2150 = vunpack.c.h.b16 %v1829
        %v2151 = vunpack.c.l.b16 %v1830
        %v2152 = vunpack.c.h.b16 %v1830
        %v2153 = vunpack.c.l.b16 %v1831
        %v2154 = vunpack.c.h.b16 %v1831
        %v2155 = vunpack.c.l.b16 %v1832
        %v2156 = vunpack.c.h.b16 %v1832
        %v2157 = vunpack.c.l.b16 %v1833
        %v2158 = vunpack.c.h.b16 %v1833
        %v2159 = vunpack.c.l.b16 %v1834
        %v2160 = vunpack.c.h.b16 %v1834
        %v2161 = vunpack.c.l.b16 %v1835
        %v2162 = vunpack.c.h.b16 %v1835
        %v2163 = vunpack.c.l.b16 %v1836
        %v2164 = vunpack.c.h.b16 %v1836
        %v2165 = vunpack.c.l.b16 %v1837
        %v2166 = vunpack.c.h.b16 %v1837
        %v2167 = vunpack.c.l.b16 %v1838
        %v2168 = vunpack.c.h.b16 %v1838
        %v2169 = vunpack.c.l.b16 %v1839
        %v2170 = vunpack.c.h.b16 %v1839
        %v2171 = vunpack.c.l.b16 %v1840
        %v2172 = vunpack.c.h.b16 %v1840
        %v2173 = vunpack.c.l.b16 %v1841
        %v2174 = vunpack.c.h.b16 %v1841
        %v2175 = vunpack.c.l.b16 %v1842
        %v2176 = vunpack.c.h.b16 %v1842
        %v2177 = vunpack.c.l.b16 %v1843
        %v2178 = vunpack.c.h.b16 %v1843
        %v2179 = vunpack.c.l.b16 %v1844
        %v2180 = vunpack.c.h.b16 %v1844
        %v2181 = vunpack.c.l.b16 %v1845
        %v2182 = vunpack.c.h.b16 %v1845
        %v2183 = vunpack.c.l.b16 %v1846
        %v2184 = vunpack.c.h.b16 %v1846
        %v2185 = vunpack.c.l.b16 %v1847
        %v2186 = vunpack.c.h.b16 %v1847
        %v2187 = vunpack.c.l.b16 %v1848
        %v2188 = vunpack.c.h.b16 %v1848
        %v2189 = vunpack.c.l.b16 %v1849
        %v2190 = vunpack.c.h.b16 %v1849
        %v2191 = vunpack.c.l.b16 %v1850
        %v2192 = vunpack.c.h.b16 %v1850
        %v2193 = vunpack.c.l.b16 %v1851
        %v2194 = vunpack.c.h.b16 %v1851
        %v2195 = vunpack.c.l.b16 %v1852
        %v2196 = vunpack.c.h.b16 %v1852
        %v2197 = vunpack.c.l.b16 %v1853
        %v2198 = vunpack.c.h.b16 %v1853
        %v2199 = vunpack.c.l.b16 %v1854
        %v2200 = vunpack.c.h.b16 %v1854
        %v2201 = vunpack.c.l.b16 %v1855
        %v2202 = vunpack.c.h.b16 %v1855
        %v2203 = vunpack.c.l.b16 %v1856
        %v2204 = vunpack.c.h.b16 %v1856
        %v2205 = vunpack.c.l.b16 %v1857
        %v2206 = vunpack.c.h.b16 %v1857
        %v2207 = vunpack.c.l.b16 %v1858
        %v2208 = vunpack.c.h.b16 %v1858
        %v2209 = vunpack.c.l.b16 %v1859
        %v2210 = vunpack.c.h.b16 %v1859
        %v2211 = vunpack.c.l.b16 %v1860
        %v2212 = vunpack.c.h.b16 %v1860
        %v2213 = vunpack.c.l.b16 %v1861
        %v2214 = vunpack.c.h.b16 %v1861
        %v2215 = vunpack.c.l.b16 %v1862
        %v2216 = vunpack.c.h.b16 %v1862
        %v2217 = vunpack.c.l.b16 %v1863
        %v2218 = vunpack.c.h.b16 %v1863
        %v2219 = vunpack.c.l.b16 %v1864
        %v2220 = vunpack.c.h.b16 %v1864
        %v2221 = vunpack.c.l.b16 %v1865
        %v2222 = vunpack.c.h.b16 %v1865
        %v2223 = vunpack.c.l.b16 %v1866
        %v2224 = vunpack.c.h.b16 %v1866
        %v2225 = vunpack.c.l.b16 %v1867
        %v2226 = vunpack.c.h.b16 %v1867
        %v2227 = vunpack.c.l.b16 %v1868
        %v2228 = vunpack.c.h.b16 %v1868
        %v2229 = vunpack.c.l.b16 %v1869
        %v2230 = vunpack.c.h.b16 %v1869
        %v2231 = vunpack.c.l.b16 %v1870
        %v2232 = vunpack.c.h.b16 %v1870
        %v2233 = vunpack.c.l.b16 %v1871
        %v2234 = vunpack.c.h.b16 %v1871
        %v2235 = vunpack.c.l.b16 %v1872
        %v2236 = vunpack.c.h.b16 %v1872
        %v2237 = vunpack.c.l.b16 %v1873
        %v2238 = vunpack.c.h.b16 %v1873
        %v2239 = vunpack.c.l.b16 %v1874
        %v2240 = vunpack.c.h.b16 %v1874
        %v2241 = vunpack.c.l.b16 %v1875
        %v2242 = vunpack.c.h.b16 %v1875
        %v2243 = vunpack.c.l.b16 %v1876
        %v2244 = vunpack.c.h.b16 %v1876
        %v2245 = vunpack.c.l.b16 %v1877
        %v2246 = vunpack.c.h.b16 %v1877
        %v2247 = vunpack.c.l.b16 %v1878
        %v2248 = vunpack.c.h.b16 %v1878
        %v2249 = vunpack.c.l.b16 %v1879
        %v2250 = vunpack.c.h.b16 %v1879
        %v2251 = vunpack.c.l.b16 %v1880
        %v2252 = vunpack.c.h.b16 %v1880
        %v2253 = vunpack.c.l.b16 %v1881
        %v2254 = vunpack.c.h.b16 %v1881
        %v2255 = vunpack.c.l.b16 %v1882
        %v2256 = vunpack.c.h.b16 %v1882
        %v2257 = vunpack.c.l.b16 %v1883
        %v2258 = vunpack.c.h.b16 %v1883
        %v2259 = vunpack.c.l.b16 %v1884
        %v2260 = vunpack.c.h.b16 %v1884
        %v2261 = vunpack.c.l.b16 %v1885
        %v2262 = vunpack.c.h.b16 %v1885
        %v2263 = vunpack.c.l.b16 %v1886
        %v2264 = vunpack.c.h.b16 %v1886
        %v2265 = vunpack.c.l.b16 %v1887
        %v2266 = vunpack.c.h.b16 %v1887
        %v2267 = vunpack.c.l.b16 %v1888
        %v2268 = vunpack.c.h.b16 %v1888
        %v2269 = vunpack.c.l.b16 %v1889
        %v2270 = vunpack.c.h.b16 %v1889
        %v2271 = vunpack.c.l.b16 %v1890
        %v2272 = vunpack.c.h.b16 %v1890
        %v2273 = vunpack.c.l.b16 %v1891
        %v2274 = vunpack.c.h.b16 %v1891
        %v2275 = vunpack.c.l.b16 %v1892
        %v2276 = vunpack.c.h.b16 %v1892
        %v2277 = vpack.c.b16 %v2025, %v2021
        %v2278 = vpack.c.b16 %v2026, %v2022
        %v2279 = vpack.c.b16 %v2027, %v2023
        %v2280 = vpack.c.b16 %v2028, %v2024
        %v2281 = vpack.c.b16 %v2033, %v2029
        %v2282 = vpack.c.b16 %v2034, %v2030
        %v2283 = vpack.c.b16 %v2035, %v2031
        %v2284 = vpack.c.b16 %v2036, %v2032
        %v2285 = vpack.c.b16 %v2041, %v2037
        %v2286 = vpack.c.b16 %v2042, %v2038
        %v2287 = vpack.c.b16 %v2043, %v2039
        %v2288 = vpack.c.b16 %v2044, %v2040
        %v2289 = vpack.c.b16 %v2049, %v2045
        %v2290 = vpack.c.b16 %v2050, %v2046
        %v2291 = vpack.c.b16 %v2051, %v2047
        %v2292 = vpack.c.b16 %v2052, %v2048
        %v2293 = vpack.c.b16 %v2057, %v2053
        %v2294 = vpack.c.b16 %v2058, %v2054
        %v2295 = vpack.c.b16 %v2059, %v2055
        %v2296 = vpack.c.b16 %v2060, %v2056
        %v2297 = vpack.c.b16 %v2065, %v2061
        %v2298 = vpack.c.b16 %v2066, %v2062
        %v2299 = vpack.c.b16 %v2067, %v2063
        %v2300 = vpack.c.b16 %v2068, %v2064
        %v2301 = vpack.c.b16 %v2073, %v2069
        %v2302 = vpack.c.b16 %v2074, %v2070
        %v2303 = vpack.c.b16 %v2075, %v2071
        %v2304 = vpack.c.b16 %v2076, %v2072
        %v2305 = vpack.c.b16 %v2081, %v2077
        %v2306 = vpack.c.b16 %v2082, %v2078
        %v2307 = vpack.c.b16 %v2083, %v2079
        %v2308 = vpack.c.b16 %v2084, %v2080
        %v2309 = vpack.c.b16 %v2089, %v2085
        %v2310 = vpack.c.b16 %v2090, %v2086
        %v2311 = vpack.c.b16 %v2091, %v2087
        %v2312 = vpack.c.b16 %v2092, %v2088
        %v2313 = vpack.c.b16 %v2097, %v2093
        %v2314 = vpack.c.b16 %v2098, %v2094
        %v2315 = vpack.c.b16 %v2099, %v2095
        %v2316 = vpack.c.b16 %v2100, %v2096
        %v2317 = vpack.c.b16 %v2105, %v2101
        %v2318 = vpack.c.b16 %v2106, %v2102
        %v2319 = vpack.c.b16 %v2107, %v2103
        %v2320 = vpack.c.b16 %v2108, %v2104
        %v2321 = vpack.c.b16 %v2113, %v2109
        %v2322 = vpack.c.b16 %v2114, %v2110
        %v2323 = vpack.c.b16 %v2115, %v2111
        %v2324 = vpack.c.b16 %v2116, %v2112
        %v2325 = vpack.c.b16 %v2121, %v2117
        %v2326 = vpack.c.b16 %v2122, %v2118
        %v2327 = vpack.c.b16 %v2123, %v2119
        %v2328 = vpack.c.b16 %v2124, %v2120
        %v2329 = vpack.c.b16 %v2129, %v2125
        %v2330 = vpack.c.b16 %v2130, %v2126
        %v2331 = vpack.c.b16 %v2131, %v2127
        %v2332 = vpack.c.b16 %v2132, %v2128
        %v2333 = vpack.c.b16 %v2137, %v2133
        %v2334 = vpack.c.b16 %v2138, %v2134
        %v2335 = vpack.c.b16 %v2139, %v2135
        %v2336 = vpack.c.b16 %v2140, %v2136
        %v2337 = vpack.c.b16 %v2145, %v2141
        %v2338 = vpack.c.b16 %v2146, %v2142
        %v2339 = vpack.c.b16 %v2147, %v2143
        %v2340 = vpack.c.b16 %v2148, %v2144
        %v2341 = vpack.c.b16 %v2153, %v2149
        %v2342 = vpack.c.b16 %v2154, %v2150
        %v2343 = vpack.c.b16 %v2155, %v2151
        %v2344 = vpack.c.b16 %v2156, %v2152
        %v2345 = vpack.c.b16 %v2161, %v2157
        %v2346 = vpack.c.b16 %v2162, %v2158
        %v2347 = vpack.c.b16 %v2163, %v2159
        %v2348 = vpack.c.b16 %v2164, %v2160
        %v2349 = vpack.c.b16 %v2169, %v2165
        %v2350 = vpack.c.b16 %v2170, %v2166
        %v2351 = vpack.c.b16 %v2171, %v2167
        %v2352 = vpack.c.b16 %v2172, %v2168
        %v2353 = vpack.c.b16 %v2177, %v2173
        %v2354 = vpack.c.b16 %v2178, %v2174
        %v2355 = vpack.c.b16 %v2179, %v2175
        %v2356 = vpack.c.b16 %v2180, %v2176
        %v2357 = vpack.c.b16 %v2185, %v2181
        %v2358 = vpack.c.b16 %v2186, %v2182
        %v2359 = vpack.c.b16 %v2187, %v2183
        %v2360 = vpack.c.b16 %v2188, %v2184
        %v2361 = vpack.c.b16 %v2193, %v2189
        %v2362 = vpack.c.b16 %v2194, %v2190
        %v2363 = vpack.c.b16 %v2195, %v2191
        %v2364 = vpack.c.b16 %v2196, %v2192
        %v2365 = vpack.c.b16 %v2201, %v2197
        %v2366 = vpack.c.b16 %v2202, %v2198
        %v2367 = vpack.c.b16 %v2203, %v2199
        %v2368 = vpack.c.b16 %v2204, %v2200
        %v2369 = vpack.c.b16 %v2209, %v2205
        %v2370 = vpack.c.b16 %v2210, %v2206
        %v2371 = vpack.c.b16 %v2211, %v2207
        %v2372 = vpack.c.b16 %v2212, %v2208
        %v2373 = vpack.c.b16 %v2217, %v2213
        %v2374 = vpack.c.b16 %v2218, %v2214
        %v2375 = vpack.c.b16 %v2219, %v2215
        %v2376 = vpack.c.b16 %v2220, %v2216
        %v2377 = vpack.c.b16 %v2225, %v2221
        %v2378 = vpack.c.b16 %v2226, %v2222
        %v2379 = vpack.c.b16 %v2227, %v2223
        %v2380 = vpack.c.b16 %v2228, %v2224
        %v2381 = vpack.c.b16 %v2233, %v2229
        %v2382 = vpack.c.b16 %v2234, %v2230
        %v2383 = vpack.c.b16 %v2235, %v2231
        %v2384 = vpack.c.b16 %v2236, %v2232
        %v2385 = vpack.c.b16 %v2241, %v2237
        %v2386 = vpack.c.b16 %v2242, %v2238
        %v2387 = vpack.c.b16 %v2243, %v2239
        %v2388 = vpack.c.b16 %v2244, %v2240
        %v2389 = vpack.c.b16 %v2249, %v2245
        %v2390 = vpack.c.b16 %v2250, %v2246
        %v2391 = vpack.c.b16 %v2251, %v2247
        %v2392 = vpack.c.b16 %v2252, %v2248
        %v2393 = vpack.c.b16 %v2257, %v2253
        %v2394 = vpack.c.b16 %v2258, %v2254
        %v2395 = vpack.c.b16 %v2259, %v2255
        %v2396 = vpack.c.b16 %v2260, %v2256
        %v2397 = vpack.c.b16 %v2265, %v2261
        %v2398 = vpack.c.b16 %v2266, %v2262
        %v2399 = vpack.c.b16 %v2267, %v2263
        %v2400 = vpack.c.b16 %v2268, %v2264
        %v2401 = vpack.c.b16 %v2273, %v2269
        %v2402 = vpack.c.b16 %v2274, %v2270
        %v2403 = vpack.c.b16 %v2275, %v2271
        %v2404 = vpack.c.b16 %v2276, %v2272
        %2533 = vmatprep.subr.bf16.mxu0 %v2278
        %2534 = vmatpush1.bf16.msra.mxu0 %v2277
        %2535 = vmatprep.subr.bf16.mxu0 %v2282
        %2536 = vmatpush1.bf16.msra.mxu0 %v2281
        %2537 = vmatprep.subr.bf16.mxu0 %v2286
        %2538 = vmatpush1.bf16.msra.mxu0 %v2285
        %2539 = vmatprep.subr.bf16.mxu0 %v2290
        %2540 = vmatpush1.bf16.msra.mxu0 %v2289
        %2541 = vmatprep.subr.bf16.mxu0 %v2294
        %2542 = vmatpush1.bf16.msra.mxu0 %v2293
        %2543 = vmatprep.subr.bf16.mxu0 %v2298
        %2544 = vmatpush1.bf16.msra.mxu0 %v2297
        %2545 = vmatprep.subr.bf16.mxu0 %v2302
        %2546 = vmatpush1.bf16.msra.mxu0 %v2301
        %2547 = vmatprep.subr.bf16.mxu0 %v2306
        %2548 = vmatpush1.bf16.msra.mxu0 %v2305
        %2549 = vmatprep.subr.bf16.mxu0 %v2310
        %2550 = vmatpush1.bf16.msra.mxu0 %v2309
        %2551 = vmatprep.subr.bf16.mxu0 %v2314
        %2552 = vmatpush1.bf16.msra.mxu0 %v2313
        %2553 = vmatprep.subr.bf16.mxu0 %v2318
        %2554 = vmatpush1.bf16.msra.mxu0 %v2317
        %2555 = vmatprep.subr.bf16.mxu0 %v2322
        %2556 = vmatpush1.bf16.msra.mxu0 %v2321
        %2557 = vmatprep.subr.bf16.mxu0 %v2326
        %2558 = vmatpush1.bf16.msra.mxu0 %v2325
        %2559 = vmatprep.subr.bf16.mxu0 %v2330
        %2560 = vmatpush1.bf16.msra.mxu0 %v2329
        %2561 = vmatprep.subr.bf16.mxu0 %v2334
        %2562 = vmatpush1.bf16.msra.mxu0 %v2333
        %2563 = vmatprep.subr.bf16.mxu0 %v2338
        %2564 = vmatpush1.bf16.msra.mxu0 %v2337
        %2565 = vmatprep.mubr.bf16.mxu0 %v1702
        %2566 = vmatmul.mubr.bf16.gmra.mrb[0].mxu0 %v1701
        %v2567 = vpop.f32.mrb[0].mxu0
        %v2568 = vadd.f32 0.0, %v2567
        %v2569 = vpop.f32.mrb[0].mxu0
        %v2570 = vadd.f32 0.0, %v2569
        %v2571 = vpop.f32.mrb[0].mxu0
        %v2572 = vadd.f32 0.0, %v2571
        %v2573 = vpop.f32.mrb[0].mxu0
        %v2574 = vadd.f32 0.0, %v2573
        %2575 = vmatprep.mubr.bf16.mxu0 %v1706
        %2576 = vmatmul.mubr.bf16.gmra.mrb[0].mxu0 %v1705
        %v2577 = vpop.f32.mrb[0].mxu0
        %v2578 = vadd.f32 0.0, %v2577
        %v2579 = vpop.f32.mrb[0].mxu0
        %v2580 = vadd.f32 0.0, %v2579
        %v2581 = vpop.f32.mrb[0].mxu0
        %v2582 = vadd.f32 0.0, %v2581
        %v2583 = vpop.f32.mrb[0].mxu0
        %v2584 = vadd.f32 0.0, %v2583
        %2585 = vmatprep.mubr.bf16.mxu0 %v1710
        %2586 = vmatmul.mubr.bf16.gmra.mrb[0].mxu0 %v1709
        %v2587 = vpop.f32.mrb[0].mxu0
        %v2588 = vadd.f32 0.0, %v2587
        %v2589 = vpop.f32.mrb[0].mxu0
        %v2590 = vadd.f32 0.0, %v2589
        %v2591 = vpop.f32.mrb[0].mxu0
        %v2592 = vadd.f32 0.0, %v2591
        %v2593 = vpop.f32.mrb[0].mxu0
        %v2594 = vadd.f32 0.0, %v2593
        %2595 = vmatprep.mubr.bf16.mxu0 %v1714
        %2596 = vmatmul.mubr.bf16.gmra.mrb[0].mxu0 %v1713
        %v2597 = vpop.f32.mrb[0].mxu0
        %v2598 = vadd.f32 0.0, %v2597
        %v2599 = vpop.f32.mrb[0].mxu0
        %v2600 = vadd.f32 0.0, %v2599
        %v2601 = vpop.f32.mrb[0].mxu0
        %v2602 = vadd.f32 0.0, %v2601
        %v2603 = vpop.f32.mrb[0].mxu0
        %v2604 = vadd.f32 0.0, %v2603
        %2605 = vmatprep.mubr.bf16.mxu0 %v1718
        %2606 = vmatmul.mubr.bf16.gmra.mrb[0].mxu0 %v1717
        %v2607 = vpop.f32.mrb[0].mxu0
        %v2608 = vadd.f32 0.0, %v2607
        %v2609 = vpop.f32.mrb[0].mxu0
        %v2610 = vadd.f32 0.0, %v2609
        %v2611 = vpop.f32.mrb[0].mxu0
        %v2612 = vadd.f32 0.0, %v2611
        %v2613 = vpop.f32.mrb[0].mxu0
        %v2614 = vadd.f32 0.0, %v2613
        %2615 = vmatprep.mubr.bf16.mxu0 %v1722
        %2616 = vmatmul.mubr.bf16.gmra.mrb[0].mxu0 %v1721
        %v2617 = vpop.f32.mrb[0].mxu0
        %v2618 = vadd.f32 0.0, %v2617
        %v2619 = vpop.f32.mrb[0].mxu0
        %v2620 = vadd.f32 0.0, %v2619
        %v2621 = vpop.f32.mrb[0].mxu0
        %v2622 = vadd.f32 0.0, %v2621
        %v2623 = vpop.f32.mrb[0].mxu0
        %v2624 = vadd.f32 0.0, %v2623
        %2625 = vmatprep.mubr.bf16.mxu0 %v1726
        %2626 = vmatmul.mubr.bf16.gmra.mrb[0].mxu0 %v1725
        %v2627 = vpop.f32.mrb[0].mxu0
        %v2628 = vadd.f32 0.0, %v2627
        %v2629 = vpop.f32.mrb[0].mxu0
        %v2630 = vadd.f32 0.0, %v2629
        %v2631 = vpop.f32.mrb[0].mxu0
        %v2632 = vadd.f32 0.0, %v2631
        %v2633 = vpop.f32.mrb[0].mxu0
        %v2634 = vadd.f32 0.0, %v2633
        %2635 = vmatprep.mubr.bf16.mxu0 %v1730
        %2636 = vmatmul.mubr.bf16.gmra.mrb[0].mxu0 %v1729
        %v2637 = vpop.f32.mrb[0].mxu0
        %v2638 = vadd.f32 0.0, %v2637
        %v2639 = vpop.f32.mrb[0].mxu0
        %v2640 = vadd.f32 0.0, %v2639
        %v2641 = vpop.f32.mrb[0].mxu0
        %v2642 = vadd.f32 0.0, %v2641
        %v2643 = vpop.f32.mrb[0].mxu0
        %v2644 = vadd.f32 0.0, %v2643
        %2645 = vmatprep.mubr.bf16.mxu0 %v1734
        %2646 = vmatmul.mubr.bf16.gmra.mrb[0].mxu0 %v1733
        %v2647 = vpop.f32.mrb[0].mxu0
        %v2648 = vadd.f32 0.0, %v2647
        %v2649 = vpop.f32.mrb[0].mxu0
        %v2650 = vadd.f32 0.0, %v2649
        %v2651 = vpop.f32.mrb[0].mxu0
        %v2652 = vadd.f32 0.0, %v2651
        %v2653 = vpop.f32.mrb[0].mxu0
        %v2654 = vadd.f32 0.0, %v2653
        %2655 = vmatprep.mubr.bf16.mxu0 %v1738
        %2656 = vmatmul.mubr.bf16.gmra.mrb[0].mxu0 %v1737
        %v2657 = vpop.f32.mrb[0].mxu0
        %v2658 = vadd.f32 0.0, %v2657
        %v2659 = vpop.f32.mrb[0].mxu0
        %v2660 = vadd.f32 0.0, %v2659
        %v2661 = vpop.f32.mrb[0].mxu0
        %v2662 = vadd.f32 0.0, %v2661
        %v2663 = vpop.f32.mrb[0].mxu0
        %v2664 = vadd.f32 0.0, %v2663
        %2665 = vmatprep.mubr.bf16.mxu0 %v1742
        %2666 = vmatmul.mubr.bf16.gmra.mrb[0].mxu0 %v1741
        %v2667 = vpop.f32.mrb[0].mxu0
        %v2668 = vadd.f32 0.0, %v2667
        %v2669 = vpop.f32.mrb[0].mxu0
        %v2670 = vadd.f32 0.0, %v2669
        %v2671 = vpop.f32.mrb[0].mxu0
        %v2672 = vadd.f32 0.0, %v2671
        %v2673 = vpop.f32.mrb[0].mxu0
        %v2674 = vadd.f32 0.0, %v2673
        %2675 = vmatprep.mubr.bf16.mxu0 %v1746
        %2676 = vmatmul.mubr.bf16.gmra.mrb[0].mxu0 %v1745
        %v2677 = vpop.f32.mrb[0].mxu0
        %v2678 = vadd.f32 0.0, %v2677
        %v2679 = vpop.f32.mrb[0].mxu0
        %v2680 = vadd.f32 0.0, %v2679
        %v2681 = vpop.f32.mrb[0].mxu0
        %v2682 = vadd.f32 0.0, %v2681
        %v2683 = vpop.f32.mrb[0].mxu0
        %v2684 = vadd.f32 0.0, %v2683
        %2685 = vmatprep.mubr.bf16.mxu0 %v1750
        %2686 = vmatmul.mubr.bf16.gmra.mrb[0].mxu0 %v1749
        %v2687 = vpop.f32.mrb[0].mxu0
        %v2688 = vadd.f32 0.0, %v2687
        %v2689 = vpop.f32.mrb[0].mxu0
        %v2690 = vadd.f32 0.0, %v2689
        %v2691 = vpop.f32.mrb[0].mxu0
        %v2692 = vadd.f32 0.0, %v2691
        %v2693 = vpop.f32.mrb[0].mxu0
        %v2694 = vadd.f32 0.0, %v2693
        %2695 = vmatprep.mubr.bf16.mxu0 %v1754
        %2696 = vmatmul.mubr.bf16.gmra.mrb[0].mxu0 %v1753
        %v2697 = vpop.f32.mrb[0].mxu0
        %v2698 = vadd.f32 0.0, %v2697
        %v2699 = vpop.f32.mrb[0].mxu0
        %v2700 = vadd.f32 0.0, %v2699
        %v2701 = vpop.f32.mrb[0].mxu0
        %v2702 = vadd.f32 0.0, %v2701
        %v2703 = vpop.f32.mrb[0].mxu0
        %v2704 = vadd.f32 0.0, %v2703
        %2705 = vmatprep.mubr.bf16.mxu0 %v1758
        %2706 = vmatmul.mubr.bf16.gmra.mrb[0].mxu0 %v1757
        %v2707 = vpop.f32.mrb[0].mxu0
        %v2708 = vadd.f32 0.0, %v2707
        %v2709 = vpop.f32.mrb[0].mxu0
        %v2710 = vadd.f32 0.0, %v2709
        %v2711 = vpop.f32.mrb[0].mxu0
        %v2712 = vadd.f32 0.0, %v2711
        %v2713 = vpop.f32.mrb[0].mxu0
        %v2714 = vadd.f32 0.0, %v2713
        %2715 = vmatprep.mubr.bf16.mxu0 %v1762
        %2716 = vmatmul.mubr.bf16.gmra.mrb[0].mxu0 %v1761
        %v2717 = vpop.f32.mrb[0].mxu0
        %v2718 = vadd.f32 0.0, %v2717
        %v2719 = vpop.f32.mrb[0].mxu0
        %v2720 = vadd.f32 0.0, %v2719
        %v2721 = vpop.f32.mrb[0].mxu0
        %v2722 = vadd.f32 0.0, %v2721
        %v2723 = vpop.f32.mrb[0].mxu0
        %v2724 = vadd.f32 0.0, %v2723
        %2725 = vdwg.mxu0
        %2726 = vmatprep.subr.bf16.mxu0 %v2342
        %2727 = vmatpush1.bf16.msra.mxu0 %v2341
        %2728 = vmatprep.subr.bf16.mxu0 %v2346
        %2729 = vmatpush1.bf16.msra.mxu0 %v2345
        %2730 = vmatprep.subr.bf16.mxu0 %v2350
        %2731 = vmatpush1.bf16.msra.mxu0 %v2349
        %2732 = vmatprep.subr.bf16.mxu0 %v2354
        %2733 = vmatpush1.bf16.msra.mxu0 %v2353
        %2734 = vmatprep.subr.bf16.mxu0 %v2358
        %2735 = vmatpush1.bf16.msra.mxu0 %v2357
        %2736 = vmatprep.subr.bf16.mxu0 %v2362
        %2737 = vmatpush1.bf16.msra.mxu0 %v2361
        %2738 = vmatprep.subr.bf16.mxu0 %v2366
        %2739 = vmatpush1.bf16.msra.mxu0 %v2365
        %2740 = vmatprep.subr.bf16.mxu0 %v2370
        %2741 = vmatpush1.bf16.msra.mxu0 %v2369
        %2742 = vmatprep.subr.bf16.mxu0 %v2374
        %2743 = vmatpush1.bf16.msra.mxu0 %v2373
        %2744 = vmatprep.subr.bf16.mxu0 %v2378
        %2745 = vmatpush1.bf16.msra.mxu0 %v2377
        %2746 = vmatprep.subr.bf16.mxu0 %v2382
        %2747 = vmatpush1.bf16.msra.mxu0 %v2381
        %2748 = vmatprep.subr.bf16.mxu0 %v2386
        %2749 = vmatpush1.bf16.msra.mxu0 %v2385
        %2750 = vmatprep.subr.bf16.mxu0 %v2390
        %2751 = vmatpush1.bf16.msra.mxu0 %v2389
        %2752 = vmatprep.subr.bf16.mxu0 %v2394
        %2753 = vmatpush1.bf16.msra.mxu0 %v2393
        %2754 = vmatprep.subr.bf16.mxu0 %v2398
        %2755 = vmatpush1.bf16.msra.mxu0 %v2397
        %2756 = vmatprep.subr.bf16.mxu0 %v2402
        %2757 = vmatpush1.bf16.msra.mxu0 %v2401
        %2758 = vmatprep.mubr.bf16.mxu0 %v1704
        %2759 = vmatmul.mubr.bf16.gmra.mrb[0].mxu0 %v1703
        %v2760 = vpop.f32.mrb[0].mxu0
        %v2761 = vadd.f32 %v2568, %v2760
        %v2762 = vpop.f32.mrb[0].mxu0
        %v2763 = vadd.f32 %v2570, %v2762
        %v2764 = vpop.f32.mrb[0].mxu0
        %v2765 = vadd.f32 %v2572, %v2764
        %v2766 = vpop.f32.mrb[0].mxu0
        %v2767 = vadd.f32 %v2574, %v2766
        %2768 = vmatprep.mubr.bf16.mxu0 %v1708
        %2769 = vmatmul.mubr.bf16.gmra.mrb[0].mxu0 %v1707
        %v2770 = vpop.f32.mrb[0].mxu0
        %v2771 = vadd.f32 %v2578, %v2770
        %v2772 = vpop.f32.mrb[0].mxu0
        %v2773 = vadd.f32 %v2580, %v2772
        %v2774 = vpop.f32.mrb[0].mxu0
        %v2775 = vadd.f32 %v2582, %v2774
        %v2776 = vpop.f32.mrb[0].mxu0
        %v2777 = vadd.f32 %v2584, %v2776
        %2778 = vmatprep.mubr.bf16.mxu0 %v1712
        %2779 = vmatmul.mubr.bf16.gmra.mrb[0].mxu0 %v1711
        %v2780 = vpop.f32.mrb[0].mxu0
        %v2781 = vadd.f32 %v2588, %v2780
        %v2782 = vpop.f32.mrb[0].mxu0
        %v2783 = vadd.f32 %v2590, %v2782
        %v2784 = vpop.f32.mrb[0].mxu0
        %v2785 = vadd.f32 %v2592, %v2784
        %v2786 = vpop.f32.mrb[0].mxu0
        %v2787 = vadd.f32 %v2594, %v2786
        %2788 = vmatprep.mubr.bf16.mxu0 %v1716
        %2789 = vmatmul.mubr.bf16.gmra.mrb[0].mxu0 %v1715
        %v2790 = vpop.f32.mrb[0].mxu0
        %v2791 = vadd.f32 %v2598, %v2790
        %v2792 = vpop.f32.mrb[0].mxu0
        %v2793 = vadd.f32 %v2600, %v2792
        %v2794 = vpop.f32.mrb[0].mxu0
        %v2795 = vadd.f32 %v2602, %v2794
        %v2796 = vpop.f32.mrb[0].mxu0
        %v2797 = vadd.f32 %v2604, %v2796
        %2798 = vmatprep.mubr.bf16.mxu0 %v1720
        %2799 = vmatmul.mubr.bf16.gmra.mrb[0].mxu0 %v1719
        %v2800 = vpop.f32.mrb[0].mxu0
        %v2801 = vadd.f32 %v2608, %v2800
        %v2802 = vpop.f32.mrb[0].mxu0
        %v2803 = vadd.f32 %v2610, %v2802
        %v2804 = vpop.f32.mrb[0].mxu0
        %v2805 = vadd.f32 %v2612, %v2804
        %v2806 = vpop.f32.mrb[0].mxu0
        %v2807 = vadd.f32 %v2614, %v2806
        %2808 = vmatprep.mubr.bf16.mxu0 %v1724
        %2809 = vmatmul.mubr.bf16.gmra.mrb[0].mxu0 %v1723
        %v2810 = vpop.f32.mrb[0].mxu0
        %v2811 = vadd.f32 %v2618, %v2810
        %v2812 = vpop.f32.mrb[0].mxu0
        %v2813 = vadd.f32 %v2620, %v2812
        %v2814 = vpop.f32.mrb[0].mxu0
        %v2815 = vadd.f32 %v2622, %v2814
        %v2816 = vpop.f32.mrb[0].mxu0
        %v2817 = vadd.f32 %v2624, %v2816
        %2818 = vmatprep.mubr.bf16.mxu0 %v1728
        %2819 = vmatmul.mubr.bf16.gmra.mrb[0].mxu0 %v1727
        %v2820 = vpop.f32.mrb[0].mxu0
        %v2821 = vadd.f32 %v2628, %v2820
        %v2822 = vpop.f32.mrb[0].mxu0
        %v2823 = vadd.f32 %v2630, %v2822
        %v2824 = vpop.f32.mrb[0].mxu0
        %v2825 = vadd.f32 %v2632, %v2824
        %v2826 = vpop.f32.mrb[0].mxu0
        %v2827 = vadd.f32 %v2634, %v2826
        %2828 = vmatprep.mubr.bf16.mxu0 %v1732
        %2829 = vmatmul.mubr.bf16.gmra.mrb[0].mxu0 %v1731
        %v2830 = vpop.f32.mrb[0].mxu0
        %v2831 = vadd.f32 %v2638, %v2830
        %v2832 = vpop.f32.mrb[0].mxu0
        %v2833 = vadd.f32 %v2640, %v2832
        %v2834 = vpop.f32.mrb[0].mxu0
        %v2835 = vadd.f32 %v2642, %v2834
        %v2836 = vpop.f32.mrb[0].mxu0
        %v2837 = vadd.f32 %v2644, %v2836
        %2838 = vmatprep.mubr.bf16.mxu0 %v1736
        %2839 = vmatmul.mubr.bf16.gmra.mrb[0].mxu0 %v1735
        %v2840 = vpop.f32.mrb[0].mxu0
        %v2841 = vadd.f32 %v2648, %v2840
        %v2842 = vpop.f32.mrb[0].mxu0
        %v2843 = vadd.f32 %v2650, %v2842
        %v2844 = vpop.f32.mrb[0].mxu0
        %v2845 = vadd.f32 %v2652, %v2844
        %v2846 = vpop.f32.mrb[0].mxu0
        %v2847 = vadd.f32 %v2654, %v2846
        %2848 = vmatprep.mubr.bf16.mxu0 %v1740
        %2849 = vmatmul.mubr.bf16.gmra.mrb[0].mxu0 %v1739
        %v2850 = vpop.f32.mrb[0].mxu0
        %v2851 = vadd.f32 %v2658, %v2850
        %v2852 = vpop.f32.mrb[0].mxu0
        %v2853 = vadd.f32 %v2660, %v2852
        %v2854 = vpop.f32.mrb[0].mxu0
        %v2855 = vadd.f32 %v2662, %v2854
        %v2856 = vpop.f32.mrb[0].mxu0
        %v2857 = vadd.f32 %v2664, %v2856
        %2858 = vmatprep.mubr.bf16.mxu0 %v1744
        %2859 = vmatmul.mubr.bf16.gmra.mrb[0].mxu0 %v1743
        %v2860 = vpop.f32.mrb[0].mxu0
        %v2861 = vadd.f32 %v2668, %v2860
        %v2862 = vpop.f32.mrb[0].mxu0
        %v2863 = vadd.f32 %v2670, %v2862
        %v2864 = vpop.f32.mrb[0].mxu0
        %v2865 = vadd.f32 %v2672, %v2864
        %v2866 = vpop.f32.mrb[0].mxu0
        %v2867 = vadd.f32 %v2674, %v2866
        %2868 = vmatprep.mubr.bf16.mxu0 %v1748
        %2869 = vmatmul.mubr.bf16.gmra.mrb[0].mxu0 %v1747
        %v2870 = vpop.f32.mrb[0].mxu0
        %v2871 = vadd.f32 %v2678, %v2870
        %v2872 = vpop.f32.mrb[0].mxu0
        %v2873 = vadd.f32 %v2680, %v2872
        %v2874 = vpop.f32.mrb[0].mxu0
        %v2875 = vadd.f32 %v2682, %v2874
        %v2876 = vpop.f32.mrb[0].mxu0
        %v2877 = vadd.f32 %v2684, %v2876
        %2878 = vmatprep.mubr.bf16.mxu0 %v1752
        %2879 = vmatmul.mubr.bf16.gmra.mrb[0].mxu0 %v1751
        %v2880 = vpop.f32.mrb[0].mxu0
        %v2881 = vadd.f32 %v2688, %v2880
        %v2882 = vpop.f32.mrb[0].mxu0
        %v2883 = vadd.f32 %v2690, %v2882
        %v2884 = vpop.f32.mrb[0].mxu0
        %v2885 = vadd.f32 %v2692, %v2884
        %v2886 = vpop.f32.mrb[0].mxu0
        %v2887 = vadd.f32 %v2694, %v2886
        %2888 = vmatprep.mubr.bf16.mxu0 %v1756
        %2889 = vmatmul.mubr.bf16.gmra.mrb[0].mxu0 %v1755
        %v2890 = vpop.f32.mrb[0].mxu0
        %v2891 = vadd.f32 %v2698, %v2890
        %v2892 = vpop.f32.mrb[0].mxu0
        %v2893 = vadd.f32 %v2700, %v2892
        %v2894 = vpop.f32.mrb[0].mxu0
        %v2895 = vadd.f32 %v2702, %v2894
        %v2896 = vpop.f32.mrb[0].mxu0
        %v2897 = vadd.f32 %v2704, %v2896
        %2898 = vmatprep.mubr.bf16.mxu0 %v1760
        %2899 = vmatmul.mubr.bf16.gmra.mrb[0].mxu0 %v1759
        %v2900 = vpop.f32.mrb[0].mxu0
        %v2901 = vadd.f32 %v2708, %v2900
        %v2902 = vpop.f32.mrb[0].mxu0
        %v2903 = vadd.f32 %v2710, %v2902
        %v2904 = vpop.f32.mrb[0].mxu0
        %v2905 = vadd.f32 %v2712, %v2904
        %v2906 = vpop.f32.mrb[0].mxu0
        %v2907 = vadd.f32 %v2714, %v2906
        %2908 = vmatprep.mubr.bf16.mxu0 %v1764
        %2909 = vmatmul.mubr.bf16.gmra.mrb[0].mxu0 %v1763
        %v2910 = vpop.f32.mrb[0].mxu0
        %v2911 = vadd.f32 %v2718, %v2910
        %v2912 = vpop.f32.mrb[0].mxu0
        %v2913 = vadd.f32 %v2720, %v2912
        %v2914 = vpop.f32.mrb[0].mxu0
        %v2915 = vadd.f32 %v2722, %v2914
        %v2916 = vpop.f32.mrb[0].mxu0
        %v2917 = vadd.f32 %v2724, %v2916
        %2918 = vdwg.mxu0
        %2919 = vmatprep.subr.bf16.mxu0 %v2280
        %2920 = vmatpush1.bf16.msra.mxu0 %v2279
        %2921 = vmatprep.subr.bf16.mxu0 %v2284
        %2922 = vmatpush1.bf16.msra.mxu0 %v2283
        %2923 = vmatprep.subr.bf16.mxu0 %v2288
        %2924 = vmatpush1.bf16.msra.mxu0 %v2287
        %2925 = vmatprep.subr.bf16.mxu0 %v2292
        %2926 = vmatpush1.bf16.msra.mxu0 %v2291
        %2927 = vmatprep.subr.bf16.mxu0 %v2296
        %2928 = vmatpush1.bf16.msra.mxu0 %v2295
        %2929 = vmatprep.subr.bf16.mxu0 %v2300
        %2930 = vmatpush1.bf16.msra.mxu0 %v2299
        %2931 = vmatprep.subr.bf16.mxu0 %v2304
        %2932 = vmatpush1.bf16.msra.mxu0 %v2303
        %2933 = vmatprep.subr.bf16.mxu0 %v2308
        %2934 = vmatpush1.bf16.msra.mxu0 %v2307
        %2935 = vmatprep.subr.bf16.mxu0 %v2312
        %2936 = vmatpush1.bf16.msra.mxu0 %v2311
        %2937 = vmatprep.subr.bf16.mxu0 %v2316
        %2938 = vmatpush1.bf16.msra.mxu0 %v2315
        %2939 = vmatprep.subr.bf16.mxu0 %v2320
        %2940 = vmatpush1.bf16.msra.mxu0 %v2319
        %2941 = vmatprep.subr.bf16.mxu0 %v2324
        %2942 = vmatpush1.bf16.msra.mxu0 %v2323
        %2943 = vmatprep.subr.bf16.mxu0 %v2328
        %2944 = vmatpush1.bf16.msra.mxu0 %v2327
        %2945 = vmatprep.subr.bf16.mxu0 %v2332
        %2946 = vmatpush1.bf16.msra.mxu0 %v2331
        %2947 = vmatprep.subr.bf16.mxu0 %v2336
        %2948 = vmatpush1.bf16.msra.mxu0 %v2335
        %2949 = vmatprep.subr.bf16.mxu0 %v2340
        %2950 = vmatpush1.bf16.msra.mxu0 %v2339
        %2951 = vmatprep.mubr.bf16.mxu0 %v1702
        %2952 = vmatmul.mubr.bf16.gmra.mrb[0].mxu0 %v1701
        %v2953 = vpop.f32.mrb[0].mxu0
        %v2954 = vadd.f32 0.0, %v2953
        %v2955 = vpop.f32.mrb[0].mxu0
        %v2956 = vadd.f32 0.0, %v2955
        %v2957 = vpop.f32.mrb[0].mxu0
        %v2958 = vadd.f32 0.0, %v2957
        %v2959 = vpop.f32.mrb[0].mxu0
        %v2960 = vadd.f32 0.0, %v2959
        %2961 = vmatprep.mubr.bf16.mxu0 %v1706
        %2962 = vmatmul.mubr.bf16.gmra.mrb[0].mxu0 %v1705
        %v2963 = vpop.f32.mrb[0].mxu0
        %v2964 = vadd.f32 0.0, %v2963
        %v2965 = vpop.f32.mrb[0].mxu0
        %v2966 = vadd.f32 0.0, %v2965
        %v2967 = vpop.f32.mrb[0].mxu0
        %v2968 = vadd.f32 0.0, %v2967
        %v2969 = vpop.f32.mrb[0].mxu0
        %v2970 = vadd.f32 0.0, %v2969
        %2971 = vmatprep.mubr.bf16.mxu0 %v1710
        %2972 = vmatmul.mubr.bf16.gmra.mrb[0].mxu0 %v1709
        %v2973 = vpop.f32.mrb[0].mxu0
        %v2974 = vadd.f32 0.0, %v2973
        %v2975 = vpop.f32.mrb[0].mxu0
        %v2976 = vadd.f32 0.0, %v2975
        %v2977 = vpop.f32.mrb[0].mxu0
        %v2978 = vadd.f32 0.0, %v2977
        %v2979 = vpop.f32.mrb[0].mxu0
        %v2980 = vadd.f32 0.0, %v2979
        %2981 = vmatprep.mubr.bf16.mxu0 %v1714
        %2982 = vmatmul.mubr.bf16.gmra.mrb[0].mxu0 %v1713
        %v2983 = vpop.f32.mrb[0].mxu0
        %v2984 = vadd.f32 0.0, %v2983
        %v2985 = vpop.f32.mrb[0].mxu0
        %v2986 = vadd.f32 0.0, %v2985
        %v2987 = vpop.f32.mrb[0].mxu0
        %v2988 = vadd.f32 0.0, %v2987
        %v2989 = vpop.f32.mrb[0].mxu0
        %v2990 = vadd.f32 0.0, %v2989
        %2991 = vmatprep.mubr.bf16.mxu0 %v1718
        %2992 = vmatmul.mubr.bf16.gmra.mrb[0].mxu0 %v1717
        %v2993 = vpop.f32.mrb[0].mxu0
        %v2994 = vadd.f32 0.0, %v2993
        %v2995 = vpop.f32.mrb[0].mxu0
        %v2996 = vadd.f32 0.0, %v2995
        %v2997 = vpop.f32.mrb[0].mxu0
        %v2998 = vadd.f32 0.0, %v2997
        %v2999 = vpop.f32.mrb[0].mxu0
        %v3000 = vadd.f32 0.0, %v2999
        %3001 = vmatprep.mubr.bf16.mxu0 %v1722
        %3002 = vmatmul.mubr.bf16.gmra.mrb[0].mxu0 %v1721
        %v3003 = vpop.f32.mrb[0].mxu0
        %v3004 = vadd.f32 0.0, %v3003
        %v3005 = vpop.f32.mrb[0].mxu0
        %v3006 = vadd.f32 0.0, %v3005
        %v3007 = vpop.f32.mrb[0].mxu0
        %v3008 = vadd.f32 0.0, %v3007
        %v3009 = vpop.f32.mrb[0].mxu0
        %v3010 = vadd.f32 0.0, %v3009
        %3011 = vmatprep.mubr.bf16.mxu0 %v1726
        %3012 = vmatmul.mubr.bf16.gmra.mrb[0].mxu0 %v1725
        %v3013 = vpop.f32.mrb[0].mxu0
        %v3014 = vadd.f32 0.0, %v3013
        %v3015 = vpop.f32.mrb[0].mxu0
        %v3016 = vadd.f32 0.0, %v3015
        %v3017 = vpop.f32.mrb[0].mxu0
        %v3018 = vadd.f32 0.0, %v3017
        %v3019 = vpop.f32.mrb[0].mxu0
        %v3020 = vadd.f32 0.0, %v3019
        %3021 = vmatprep.mubr.bf16.mxu0 %v1730
        %3022 = vmatmul.mubr.bf16.gmra.mrb[0].mxu0 %v1729
        %v3023 = vpop.f32.mrb[0].mxu0
        %v3024 = vadd.f32 0.0, %v3023
        %v3025 = vpop.f32.mrb[0].mxu0
        %v3026 = vadd.f32 0.0, %v3025
        %v3027 = vpop.f32.mrb[0].mxu0
        %v3028 = vadd.f32 0.0, %v3027
        %v3029 = vpop.f32.mrb[0].mxu0
        %v3030 = vadd.f32 0.0, %v3029
        %3031 = vmatprep.mubr.bf16.mxu0 %v1734
        %3032 = vmatmul.mubr.bf16.gmra.mrb[0].mxu0 %v1733
        %v3033 = vpop.f32.mrb[0].mxu0
        %v3034 = vadd.f32 0.0, %v3033
        %v3035 = vpop.f32.mrb[0].mxu0
        %v3036 = vadd.f32 0.0, %v3035
        %v3037 = vpop.f32.mrb[0].mxu0
        %v3038 = vadd.f32 0.0, %v3037
        %v3039 = vpop.f32.mrb[0].mxu0
        %v3040 = vadd.f32 0.0, %v3039
        %3041 = vmatprep.mubr.bf16.mxu0 %v1738
        %3042 = vmatmul.mubr.bf16.gmra.mrb[0].mxu0 %v1737
        %v3043 = vpop.f32.mrb[0].mxu0
        %v3044 = vadd.f32 0.0, %v3043
        %v3045 = vpop.f32.mrb[0].mxu0
        %v3046 = vadd.f32 0.0, %v3045
        %v3047 = vpop.f32.mrb[0].mxu0
        %v3048 = vadd.f32 0.0, %v3047
        %v3049 = vpop.f32.mrb[0].mxu0
        %v3050 = vadd.f32 0.0, %v3049
        %3051 = vmatprep.mubr.bf16.mxu0 %v1742
        %3052 = vmatmul.mubr.bf16.gmra.mrb[0].mxu0 %v1741
        %v3053 = vpop.f32.mrb[0].mxu0
        %v3054 = vadd.f32 0.0, %v3053
        %v3055 = vpop.f32.mrb[0].mxu0
        %v3056 = vadd.f32 0.0, %v3055
        %v3057 = vpop.f32.mrb[0].mxu0
        %v3058 = vadd.f32 0.0, %v3057
        %v3059 = vpop.f32.mrb[0].mxu0
        %v3060 = vadd.f32 0.0, %v3059
        %3061 = vmatprep.mubr.bf16.mxu0 %v1746
        %3062 = vmatmul.mubr.bf16.gmra.mrb[0].mxu0 %v1745
        %v3063 = vpop.f32.mrb[0].mxu0
        %v3064 = vadd.f32 0.0, %v3063
        %v3065 = vpop.f32.mrb[0].mxu0
        %v3066 = vadd.f32 0.0, %v3065
        %v3067 = vpop.f32.mrb[0].mxu0
        %v3068 = vadd.f32 0.0, %v3067
        %v3069 = vpop.f32.mrb[0].mxu0
        %v3070 = vadd.f32 0.0, %v3069
        %3071 = vmatprep.mubr.bf16.mxu0 %v1750
        %3072 = vmatmul.mubr.bf16.gmra.mrb[0].mxu0 %v1749
        %v3073 = vpop.f32.mrb[0].mxu0
        %v3074 = vadd.f32 0.0, %v3073
        %v3075 = vpop.f32.mrb[0].mxu0
        %v3076 = vadd.f32 0.0, %v3075
        %v3077 = vpop.f32.mrb[0].mxu0
        %v3078 = vadd.f32 0.0, %v3077
        %v3079 = vpop.f32.mrb[0].mxu0
        %v3080 = vadd.f32 0.0, %v3079
        %3081 = vmatprep.mubr.bf16.mxu0 %v1754
        %3082 = vmatmul.mubr.bf16.gmra.mrb[0].mxu0 %v1753
        %v3083 = vpop.f32.mrb[0].mxu0
        %v3084 = vadd.f32 0.0, %v3083
        %v3085 = vpop.f32.mrb[0].mxu0
        %v3086 = vadd.f32 0.0, %v3085
        %v3087 = vpop.f32.mrb[0].mxu0
        %v3088 = vadd.f32 0.0, %v3087
        %v3089 = vpop.f32.mrb[0].mxu0
        %v3090 = vadd.f32 0.0, %v3089
        %3091 = vmatprep.mubr.bf16.mxu0 %v1758
        %3092 = vmatmul.mubr.bf16.gmra.mrb[0].mxu0 %v1757
        %v3093 = vpop.f32.mrb[0].mxu0
        %v3094 = vadd.f32 0.0, %v3093
        %v3095 = vpop.f32.mrb[0].mxu0
        %v3096 = vadd.f32 0.0, %v3095
        %v3097 = vpop.f32.mrb[0].mxu0
        %v3098 = vadd.f32 0.0, %v3097
        %v3099 = vpop.f32.mrb[0].mxu0
        %v3100 = vadd.f32 0.0, %v3099
        %3101 = vmatprep.mubr.bf16.mxu0 %v1762
        %3102 = vmatmul.mubr.bf16.gmra.mrb[0].mxu0 %v1761
        %v3103 = vpop.f32.mrb[0].mxu0
        %v3104 = vadd.f32 0.0, %v3103
        %v3105 = vpop.f32.mrb[0].mxu0
        %v3106 = vadd.f32 0.0, %v3105
        %v3107 = vpop.f32.mrb[0].mxu0
        %v3108 = vadd.f32 0.0, %v3107
        %v3109 = vpop.f32.mrb[0].mxu0
        %v3110 = vadd.f32 0.0, %v3109
        %3111 = vdwg.mxu0
        %3112 = vmatprep.subr.bf16.mxu0 %v2344
        %3113 = vmatpush1.bf16.msra.mxu0 %v2343
        %3114 = vmatprep.subr.bf16.mxu0 %v2348
        %3115 = vmatpush1.bf16.msra.mxu0 %v2347
        %3116 = vmatprep.subr.bf16.mxu0 %v2352
        %3117 = vmatpush1.bf16.msra.mxu0 %v2351
        %3118 = vmatprep.subr.bf16.mxu0 %v2356
        %3119 = vmatpush1.bf16.msra.mxu0 %v2355
        %3120 = vmatprep.subr.bf16.mxu0 %v2360
        %3121 = vmatpush1.bf16.msra.mxu0 %v2359
        %3122 = vmatprep.subr.bf16.mxu0 %v2364
        %3123 = vmatpush1.bf16.msra.mxu0 %v2363
        %3124 = vmatprep.subr.bf16.mxu0 %v2368
        %3125 = vmatpush1.bf16.msra.mxu0 %v2367
        %3126 = vmatprep.subr.bf16.mxu0 %v2372
        %3127 = vmatpush1.bf16.msra.mxu0 %v2371
        %3128 = vmatprep.subr.bf16.mxu0 %v2376
        %3129 = vmatpush1.bf16.msra.mxu0 %v2375
        %3130 = vmatprep.subr.bf16.mxu0 %v2380
        %3131 = vmatpush1.bf16.msra.mxu0 %v2379
        %3132 = vmatprep.subr.bf16.mxu0 %v2384
        %3133 = vmatpush1.bf16.msra.mxu0 %v2383
        %3134 = vmatprep.subr.bf16.mxu0 %v2388
        %3135 = vmatpush1.bf16.msra.mxu0 %v2387
        %3136 = vmatprep.subr.bf16.mxu0 %v2392
        %3137 = vmatpush1.bf16.msra.mxu0 %v2391
        %3138 = vmatprep.subr.bf16.mxu0 %v2396
        %3139 = vmatpush1.bf16.msra.mxu0 %v2395
        %3140 = vmatprep.subr.bf16.mxu0 %v2400
        %3141 = vmatpush1.bf16.msra.mxu0 %v2399
        %3142 = vmatprep.subr.bf16.mxu0 %v2404
        %3143 = vmatpush1.bf16.msra.mxu0 %v2403
        %3144 = vmatprep.mubr.bf16.mxu0 %v1704
        %3145 = vmatmul.mubr.bf16.gmra.mrb[0].mxu0 %v1703
        %v3146 = vpop.f32.mrb[0].mxu0
        %v3147 = vadd.f32 %v2954, %v3146
        %v3148 = vpop.f32.mrb[0].mxu0
        %v3149 = vadd.f32 %v2956, %v3148
        %v3150 = vpop.f32.mrb[0].mxu0
        %v3151 = vadd.f32 %v2958, %v3150
        %v3152 = vpop.f32.mrb[0].mxu0
        %v3153 = vadd.f32 %v2960, %v3152
        %3154 = vmatprep.mubr.bf16.mxu0 %v1708
        %3155 = vmatmul.mubr.bf16.gmra.mrb[0].mxu0 %v1707
        %v3156 = vpop.f32.mrb[0].mxu0
        %v3157 = vadd.f32 %v2964, %v3156
        %v3158 = vpop.f32.mrb[0].mxu0
        %v3159 = vadd.f32 %v2966, %v3158
        %v3160 = vpop.f32.mrb[0].mxu0
        %v3161 = vadd.f32 %v2968, %v3160
        %v3162 = vpop.f32.mrb[0].mxu0
        %v3163 = vadd.f32 %v2970, %v3162
        %3164 = vmatprep.mubr.bf16.mxu0 %v1712
        %3165 = vmatmul.mubr.bf16.gmra.mrb[0].mxu0 %v1711
        %v3166 = vpop.f32.mrb[0].mxu0
        %v3167 = vadd.f32 %v2974, %v3166
        %v3168 = vpop.f32.mrb[0].mxu0
        %v3169 = vadd.f32 %v2976, %v3168
        %v3170 = vpop.f32.mrb[0].mxu0
        %v3171 = vadd.f32 %v2978, %v3170
        %v3172 = vpop.f32.mrb[0].mxu0
        %v3173 = vadd.f32 %v2980, %v3172
        %3174 = vmatprep.mubr.bf16.mxu0 %v1716
        %3175 = vmatmul.mubr.bf16.gmra.mrb[0].mxu0 %v1715
        %v3176 = vpop.f32.mrb[0].mxu0
        %v3177 = vadd.f32 %v2984, %v3176
        %v3178 = vpop.f32.mrb[0].mxu0
        %v3179 = vadd.f32 %v2986, %v3178
        %v3180 = vpop.f32.mrb[0].mxu0
        %v3181 = vadd.f32 %v2988, %v3180
        %v3182 = vpop.f32.mrb[0].mxu0
        %v3183 = vadd.f32 %v2990, %v3182
        %3184 = vmatprep.mubr.bf16.mxu0 %v1720
        %3185 = vmatmul.mubr.bf16.gmra.mrb[0].mxu0 %v1719
        %v3186 = vpop.f32.mrb[0].mxu0
        %v3187 = vadd.f32 %v2994, %v3186
        %v3188 = vpop.f32.mrb[0].mxu0
        %v3189 = vadd.f32 %v2996, %v3188
        %v3190 = vpop.f32.mrb[0].mxu0
        %v3191 = vadd.f32 %v2998, %v3190
        %v3192 = vpop.f32.mrb[0].mxu0
        %v3193 = vadd.f32 %v3000, %v3192
        %3194 = vmatprep.mubr.bf16.mxu0 %v1724
        %3195 = vmatmul.mubr.bf16.gmra.mrb[0].mxu0 %v1723
        %v3196 = vpop.f32.mrb[0].mxu0
        %v3197 = vadd.f32 %v3004, %v3196
        %v3198 = vpop.f32.mrb[0].mxu0
        %v3199 = vadd.f32 %v3006, %v3198
        %v3200 = vpop.f32.mrb[0].mxu0
        %v3201 = vadd.f32 %v3008, %v3200
        %v3202 = vpop.f32.mrb[0].mxu0
        %v3203 = vadd.f32 %v3010, %v3202
        %3204 = vmatprep.mubr.bf16.mxu0 %v1728
        %3205 = vmatmul.mubr.bf16.gmra.mrb[0].mxu0 %v1727
        %v3206 = vpop.f32.mrb[0].mxu0
        %v3207 = vadd.f32 %v3014, %v3206
        %v3208 = vpop.f32.mrb[0].mxu0
        %v3209 = vadd.f32 %v3016, %v3208
        %v3210 = vpop.f32.mrb[0].mxu0
        %v3211 = vadd.f32 %v3018, %v3210
        %v3212 = vpop.f32.mrb[0].mxu0
        %v3213 = vadd.f32 %v3020, %v3212
        %3214 = vmatprep.mubr.bf16.mxu0 %v1732
        %3215 = vmatmul.mubr.bf16.gmra.mrb[0].mxu0 %v1731
        %v3216 = vpop.f32.mrb[0].mxu0
        %v3217 = vadd.f32 %v3024, %v3216
        %v3218 = vpop.f32.mrb[0].mxu0
        %v3219 = vadd.f32 %v3026, %v3218
        %v3220 = vpop.f32.mrb[0].mxu0
        %v3221 = vadd.f32 %v3028, %v3220
        %v3222 = vpop.f32.mrb[0].mxu0
        %v3223 = vadd.f32 %v3030, %v3222
        %3224 = vmatprep.mubr.bf16.mxu0 %v1736
        %3225 = vmatmul.mubr.bf16.gmra.mrb[0].mxu0 %v1735
        %v3226 = vpop.f32.mrb[0].mxu0
        %v3227 = vadd.f32 %v3034, %v3226
        %v3228 = vpop.f32.mrb[0].mxu0
        %v3229 = vadd.f32 %v3036, %v3228
        %v3230 = vpop.f32.mrb[0].mxu0
        %v3231 = vadd.f32 %v3038, %v3230
        %v3232 = vpop.f32.mrb[0].mxu0
        %v3233 = vadd.f32 %v3040, %v3232
        %3234 = vmatprep.mubr.bf16.mxu0 %v1740
        %3235 = vmatmul.mubr.bf16.gmra.mrb[0].mxu0 %v1739
        %v3236 = vpop.f32.mrb[0].mxu0
        %v3237 = vadd.f32 %v3044, %v3236
        %v3238 = vpop.f32.mrb[0].mxu0
        %v3239 = vadd.f32 %v3046, %v3238
        %v3240 = vpop.f32.mrb[0].mxu0
        %v3241 = vadd.f32 %v3048, %v3240
        %v3242 = vpop.f32.mrb[0].mxu0
        %v3243 = vadd.f32 %v3050, %v3242
        %3244 = vmatprep.mubr.bf16.mxu0 %v1744
        %3245 = vmatmul.mubr.bf16.gmra.mrb[0].mxu0 %v1743
        %v3246 = vpop.f32.mrb[0].mxu0
        %v3247 = vadd.f32 %v3054, %v3246
        %v3248 = vpop.f32.mrb[0].mxu0
        %v3249 = vadd.f32 %v3056, %v3248
        %v3250 = vpop.f32.mrb[0].mxu0
        %v3251 = vadd.f32 %v3058, %v3250
        %v3252 = vpop.f32.mrb[0].mxu0
        %v3253 = vadd.f32 %v3060, %v3252
        %3254 = vmatprep.mubr.bf16.mxu0 %v1748
        %3255 = vmatmul.mubr.bf16.gmra.mrb[0].mxu0 %v1747
        %v3256 = vpop.f32.mrb[0].mxu0
        %v3257 = vadd.f32 %v3064, %v3256
        %v3258 = vpop.f32.mrb[0].mxu0
        %v3259 = vadd.f32 %v3066, %v3258
        %v3260 = vpop.f32.mrb[0].mxu0
        %v3261 = vadd.f32 %v3068, %v3260
        %v3262 = vpop.f32.mrb[0].mxu0
        %v3263 = vadd.f32 %v3070, %v3262
        %3264 = vmatprep.mubr.bf16.mxu0 %v1752
        %3265 = vmatmul.mubr.bf16.gmra.mrb[0].mxu0 %v1751
        %v3266 = vpop.f32.mrb[0].mxu0
        %v3267 = vadd.f32 %v3074, %v3266
        %v3268 = vpop.f32.mrb[0].mxu0
        %v3269 = vadd.f32 %v3076, %v3268
        %v3270 = vpop.f32.mrb[0].mxu0
        %v3271 = vadd.f32 %v3078, %v3270
        %v3272 = vpop.f32.mrb[0].mxu0
        %v3273 = vadd.f32 %v3080, %v3272
        %3274 = vmatprep.mubr.bf16.mxu0 %v1756
        %3275 = vmatmul.mubr.bf16.gmra.mrb[0].mxu0 %v1755
        %v3276 = vpop.f32.mrb[0].mxu0
        %v3277 = vadd.f32 %v3084, %v3276
        %v3278 = vpop.f32.mrb[0].mxu0
        %v3279 = vadd.f32 %v3086, %v3278
        %v3280 = vpop.f32.mrb[0].mxu0
        %v3281 = vadd.f32 %v3088, %v3280
        %v3282 = vpop.f32.mrb[0].mxu0
        %v3283 = vadd.f32 %v3090, %v3282
        %3284 = vmatprep.mubr.bf16.mxu0 %v1760
        %3285 = vmatmul.mubr.bf16.gmra.mrb[0].mxu0 %v1759
        %v3286 = vpop.f32.mrb[0].mxu0
        %v3287 = vadd.f32 %v3094, %v3286
        %v3288 = vpop.f32.mrb[0].mxu0
        %v3289 = vadd.f32 %v3096, %v3288
        %v3290 = vpop.f32.mrb[0].mxu0
        %v3291 = vadd.f32 %v3098, %v3290
        %v3292 = vpop.f32.mrb[0].mxu0
        %v3293 = vadd.f32 %v3100, %v3292
        %3294 = vmatprep.mubr.bf16.mxu0 %v1764
        %3295 = vmatmul.mubr.bf16.gmra.mrb[0].mxu0 %v1763
        %v3296 = vpop.f32.mrb[0].mxu0
        %v3297 = vadd.f32 %v3104, %v3296
        %v3298 = vpop.f32.mrb[0].mxu0
        %v3299 = vadd.f32 %v3106, %v3298
        %v3300 = vpop.f32.mrb[0].mxu0
        %v3301 = vadd.f32 %v3108, %v3300
        %v3302 = vpop.f32.mrb[0].mxu0
        %v3303 = vadd.f32 %v3110, %v3302
        %3304 = vdwg.mxu0
        %v3305 = vpack.c.bf16 %v2765, %v2761
        %v3306 = vpack.c.bf16 %v2767, %v2763
        %v3307 = vpack.c.bf16 %v3151, %v3147
        %v3308 = vpack.c.bf16 %v3153, %v3149
        %v3309 = vpack.c.bf16 %v2775, %v2771
        %v3310 = vpack.c.bf16 %v2777, %v2773
        %v3311 = vpack.c.bf16 %v3161, %v3157
        %v3312 = vpack.c.bf16 %v3163, %v3159
        %v3313 = vpack.c.bf16 %v2785, %v2781
        %v3314 = vpack.c.bf16 %v2787, %v2783
        %v3315 = vpack.c.bf16 %v3171, %v3167
        %v3316 = vpack.c.bf16 %v3173, %v3169
        %v3317 = vpack.c.bf16 %v2795, %v2791
        %v3318 = vpack.c.bf16 %v2797, %v2793
        %v3319 = vpack.c.bf16 %v3181, %v3177
        %v3320 = vpack.c.bf16 %v3183, %v3179
        %v3321 = vpack.c.bf16 %v2805, %v2801
        %v3322 = vpack.c.bf16 %v2807, %v2803
        %v3323 = vpack.c.bf16 %v3191, %v3187
        %v3324 = vpack.c.bf16 %v3193, %v3189
        %v3325 = vpack.c.bf16 %v2815, %v2811
        %v3326 = vpack.c.bf16 %v2817, %v2813
        %v3327 = vpack.c.bf16 %v3201, %v3197
        %v3328 = vpack.c.bf16 %v3203, %v3199
        %v3329 = vpack.c.bf16 %v2825, %v2821
        %v3330 = vpack.c.bf16 %v2827, %v2823
        %v3331 = vpack.c.bf16 %v3211, %v3207
        %v3332 = vpack.c.bf16 %v3213, %v3209
        %v3333 = vpack.c.bf16 %v2835, %v2831
        %v3334 = vpack.c.bf16 %v2837, %v2833
        %v3335 = vpack.c.bf16 %v3221, %v3217
        %v3336 = vpack.c.bf16 %v3223, %v3219
        %v3337 = vpack.c.bf16 %v2845, %v2841
        %v3338 = vpack.c.bf16 %v2847, %v2843
        %v3339 = vpack.c.bf16 %v3231, %v3227
        %v3340 = vpack.c.bf16 %v3233, %v3229
        %v3341 = vpack.c.bf16 %v2855, %v2851
        %v3342 = vpack.c.bf16 %v2857, %v2853
        %v3343 = vpack.c.bf16 %v3241, %v3237
        %v3344 = vpack.c.bf16 %v3243, %v3239
        %v3345 = vpack.c.bf16 %v2865, %v2861
        %v3346 = vpack.c.bf16 %v2867, %v2863
        %v3347 = vpack.c.bf16 %v3251, %v3247
        %v3348 = vpack.c.bf16 %v3253, %v3249
        %v3349 = vpack.c.bf16 %v2875, %v2871
        %v3350 = vpack.c.bf16 %v2877, %v2873
        %v3351 = vpack.c.bf16 %v3261, %v3257
        %v3352 = vpack.c.bf16 %v3263, %v3259
        %v3353 = vpack.c.bf16 %v2885, %v2881
        %v3354 = vpack.c.bf16 %v2887, %v2883
        %v3355 = vpack.c.bf16 %v3271, %v3267
        %v3356 = vpack.c.bf16 %v3273, %v3269
        %v3357 = vpack.c.bf16 %v2895, %v2891
        %v3358 = vpack.c.bf16 %v2897, %v2893
        %v3359 = vpack.c.bf16 %v3281, %v3277
        %v3360 = vpack.c.bf16 %v3283, %v3279
        %v3361 = vpack.c.bf16 %v2905, %v2901
        %v3362 = vpack.c.bf16 %v2907, %v2903
        %v3363 = vpack.c.bf16 %v3291, %v3287
        %v3364 = vpack.c.bf16 %v3293, %v3289
        %v3365 = vpack.c.bf16 %v2915, %v2911
        %v3366 = vpack.c.bf16 %v2917, %v2913
        %v3367 = vpack.c.bf16 %v3301, %v3297
        %v3368 = vpack.c.bf16 %v3303, %v3299
        %v3369 = vld [vmem:[%s5] sm:$0xf]
        %v3371 = vlaneseq
        %v3372 = vshrl.u32 %v3371, 7
        %v3373 = vsub.s32 0, %v3372
        %v3374 = vrot.slane %v3369, %v3373
        %v3375 = vlaneseq
        %v3376 = vshrl.u32 %v3375, 7
        %v3377 = vsub.s32 1, %v3376
        %v3378 = vrot.slane %v3369, %v3377
        %v3379 = vlaneseq
        %v3380 = vshrl.u32 %v3379, 7
        %v3381 = vsub.s32 2, %v3380
        %v3382 = vrot.slane %v3369, %v3381
        %v3383 = vlaneseq
        %v3384 = vshrl.u32 %v3383, 7
        %v3385 = vsub.s32 3, %v3384
        %v3386 = vrot.slane %v3369, %v3385
        %3391 = vmatprep.subr.bf16.mxu0 %v3306
        %3392 = vmatpush1.bf16.msra.mxu0 %v3305
        %3393 = vmatprep.subr.bf16.mxu0 %v3310
        %3394 = vmatpush1.bf16.msra.mxu0 %v3309
        %3395 = vmatprep.subr.bf16.mxu0 %v3314
        %3396 = vmatpush1.bf16.msra.mxu0 %v3313
        %3397 = vmatprep.subr.bf16.mxu0 %v3318
        %3398 = vmatpush1.bf16.msra.mxu0 %v3317
        %3399 = vmatprep.subr.bf16.mxu0 %v3322
        %3400 = vmatpush1.bf16.msra.mxu0 %v3321
        %3401 = vmatprep.subr.bf16.mxu0 %v3326
        %3402 = vmatpush1.bf16.msra.mxu0 %v3325
        %3403 = vmatprep.subr.bf16.mxu0 %v3330
        %3404 = vmatpush1.bf16.msra.mxu0 %v3329
        %3405 = vmatprep.subr.bf16.mxu0 %v3334
        %3406 = vmatpush1.bf16.msra.mxu0 %v3333
        %3407 = vmatprep.subr.bf16.mxu0 %v3338
        %3408 = vmatpush1.bf16.msra.mxu0 %v3337
        %3409 = vmatprep.subr.bf16.mxu0 %v3342
        %3410 = vmatpush1.bf16.msra.mxu0 %v3341
        %3411 = vmatprep.subr.bf16.mxu0 %v3346
        %3412 = vmatpush1.bf16.msra.mxu0 %v3345
        %3413 = vmatprep.subr.bf16.mxu0 %v3350
        %3414 = vmatpush1.bf16.msra.mxu0 %v3349
        %3415 = vmatprep.subr.bf16.mxu0 %v3354
        %3416 = vmatpush1.bf16.msra.mxu0 %v3353
        %3417 = vmatprep.subr.bf16.mxu0 %v3358
        %3418 = vmatpush1.bf16.msra.mxu0 %v3357
        %3419 = vmatprep.subr.bf16.mxu0 %v3362
        %3420 = vmatpush1.bf16.msra.mxu0 %v3361
        %3421 = vmatprep.subr.bf16.mxu0 %v3366
        %3422 = vmatpush1.bf16.msra.mxu0 %v3365
        %3423 = vmatprep.mubr.bf16.mxu0 %v1124
        %3424 = vmatmul.mubr.bf16.gmra.mrb[0].mxu0 %v1123
        %v3425 = vpop.f32.mrb[0].mxu0
        %v3426 = vadd.f32 %v3374, %v3425
        %v3427 = vpop.f32.mrb[0].mxu0
        %v3428 = vadd.f32 %v3378, %v3427
        %v3429 = vpop.f32.mrb[0].mxu0
        %v3430 = vadd.f32 %v3374, %v3429
        %v3431 = vpop.f32.mrb[0].mxu0
        %v3432 = vadd.f32 %v3378, %v3431
        %3433 = vmatprep.mubr.bf16.mxu0 %v1126
        %3434 = vmatmul.mubr.bf16.gmra.mrb[0].mxu0 %v1125
        %v3435 = vpop.f32.mrb[0].mxu0
        %v3436 = vadd.f32 %v3374, %v3435
        %v3437 = vpop.f32.mrb[0].mxu0
        %v3438 = vadd.f32 %v3378, %v3437
        %v3439 = vpop.f32.mrb[0].mxu0
        %v3440 = vadd.f32 %v3374, %v3439
        %v3441 = vpop.f32.mrb[0].mxu0
        %v3442 = vadd.f32 %v3378, %v3441
        %3443 = vmatprep.mubr.bf16.mxu0 %v1128
        %3444 = vmatmul.mubr.bf16.gmra.mrb[0].mxu0 %v1127
        %v3445 = vpop.f32.mrb[0].mxu0
        %v3446 = vadd.f32 %v3374, %v3445
        %v3447 = vpop.f32.mrb[0].mxu0
        %v3448 = vadd.f32 %v3378, %v3447
        %v3449 = vpop.f32.mrb[0].mxu0
        %v3450 = vadd.f32 %v3374, %v3449
        %v3451 = vpop.f32.mrb[0].mxu0
        %v3452 = vadd.f32 %v3378, %v3451
        %3453 = vmatprep.mubr.bf16.mxu0 %v1130
        %3454 = vmatmul.mubr.bf16.gmra.mrb[0].mxu0 %v1129
        %v3455 = vpop.f32.mrb[0].mxu0
        %v3456 = vadd.f32 %v3374, %v3455
        %v3457 = vpop.f32.mrb[0].mxu0
        %v3458 = vadd.f32 %v3378, %v3457
        %v3459 = vpop.f32.mrb[0].mxu0
        %v3460 = vadd.f32 %v3374, %v3459
        %v3461 = vpop.f32.mrb[0].mxu0
        %v3462 = vadd.f32 %v3378, %v3461
        %3463 = vmatprep.mubr.bf16.mxu0 %v1132
        %3464 = vmatmul.mubr.bf16.gmra.mrb[0].mxu0 %v1131
        %v3465 = vpop.f32.mrb[0].mxu0
        %v3466 = vadd.f32 %v3374, %v3465
        %v3467 = vpop.f32.mrb[0].mxu0
        %v3468 = vadd.f32 %v3378, %v3467
        %v3469 = vpop.f32.mrb[0].mxu0
        %v3470 = vadd.f32 %v3374, %v3469
        %v3471 = vpop.f32.mrb[0].mxu0
        %v3472 = vadd.f32 %v3378, %v3471
        %3473 = vmatprep.mubr.bf16.mxu0 %v1134
        %3474 = vmatmul.mubr.bf16.gmra.mrb[0].mxu0 %v1133
        %v3475 = vpop.f32.mrb[0].mxu0
        %v3476 = vadd.f32 %v3374, %v3475
        %v3477 = vpop.f32.mrb[0].mxu0
        %v3478 = vadd.f32 %v3378, %v3477
        %v3479 = vpop.f32.mrb[0].mxu0
        %v3480 = vadd.f32 %v3374, %v3479
        %v3481 = vpop.f32.mrb[0].mxu0
        %v3482 = vadd.f32 %v3378, %v3481
        %3483 = vmatprep.mubr.bf16.mxu0 %v1136
        %3484 = vmatmul.mubr.bf16.gmra.mrb[0].mxu0 %v1135
        %v3485 = vpop.f32.mrb[0].mxu0
        %v3486 = vadd.f32 %v3374, %v3485
        %v3487 = vpop.f32.mrb[0].mxu0
        %v3488 = vadd.f32 %v3378, %v3487
        %v3489 = vpop.f32.mrb[0].mxu0
        %v3490 = vadd.f32 %v3374, %v3489
        %v3491 = vpop.f32.mrb[0].mxu0
        %v3492 = vadd.f32 %v3378, %v3491
        %3493 = vmatprep.mubr.bf16.mxu0 %v1138
        %3494 = vmatmul.mubr.bf16.gmra.mrb[0].mxu0 %v1137
        %v3495 = vpop.f32.mrb[0].mxu0
        %v3496 = vadd.f32 %v3374, %v3495
        %v3497 = vpop.f32.mrb[0].mxu0
        %v3498 = vadd.f32 %v3378, %v3497
        %v3499 = vpop.f32.mrb[0].mxu0
        %v3500 = vadd.f32 %v3374, %v3499
        %v3501 = vpop.f32.mrb[0].mxu0
        %v3502 = vadd.f32 %v3378, %v3501
        %3503 = vmatprep.mubr.bf16.mxu0 %v1140
        %3504 = vmatmul.mubr.bf16.gmra.mrb[0].mxu0 %v1139
        %v3505 = vpop.f32.mrb[0].mxu0
        %v3506 = vadd.f32 %v3374, %v3505
        %v3507 = vpop.f32.mrb[0].mxu0
        %v3508 = vadd.f32 %v3378, %v3507
        %v3509 = vpop.f32.mrb[0].mxu0
        %v3510 = vadd.f32 %v3374, %v3509
        %v3511 = vpop.f32.mrb[0].mxu0
        %v3512 = vadd.f32 %v3378, %v3511
        %3513 = vmatprep.mubr.bf16.mxu0 %v1142
        %3514 = vmatmul.mubr.bf16.gmra.mrb[0].mxu0 %v1141
        %v3515 = vpop.f32.mrb[0].mxu0
        %v3516 = vadd.f32 %v3374, %v3515
        %v3517 = vpop.f32.mrb[0].mxu0
        %v3518 = vadd.f32 %v3378, %v3517
        %v3519 = vpop.f32.mrb[0].mxu0
        %v3520 = vadd.f32 %v3374, %v3519
        %v3521 = vpop.f32.mrb[0].mxu0
        %v3522 = vadd.f32 %v3378, %v3521
        %3523 = vmatprep.mubr.bf16.mxu0 %v1144
        %3524 = vmatmul.mubr.bf16.gmra.mrb[0].mxu0 %v1143
        %v3525 = vpop.f32.mrb[0].mxu0
        %v3526 = vadd.f32 %v3374, %v3525
        %v3527 = vpop.f32.mrb[0].mxu0
        %v3528 = vadd.f32 %v3378, %v3527
        %v3529 = vpop.f32.mrb[0].mxu0
        %v3530 = vadd.f32 %v3374, %v3529
        %v3531 = vpop.f32.mrb[0].mxu0
        %v3532 = vadd.f32 %v3378, %v3531
        %3533 = vmatprep.mubr.bf16.mxu0 %v1146
        %3534 = vmatmul.mubr.bf16.gmra.mrb[0].mxu0 %v1145
        %v3535 = vpop.f32.mrb[0].mxu0
        %v3536 = vadd.f32 %v3374, %v3535
        %v3537 = vpop.f32.mrb[0].mxu0
        %v3538 = vadd.f32 %v3378, %v3537
        %v3539 = vpop.f32.mrb[0].mxu0
        %v3540 = vadd.f32 %v3374, %v3539
        %v3541 = vpop.f32.mrb[0].mxu0
        %v3542 = vadd.f32 %v3378, %v3541
        %3543 = vmatprep.mubr.bf16.mxu0 %v1148
        %3544 = vmatmul.mubr.bf16.gmra.mrb[0].mxu0 %v1147
        %v3545 = vpop.f32.mrb[0].mxu0
        %v3546 = vadd.f32 %v3374, %v3545
        %v3547 = vpop.f32.mrb[0].mxu0
        %v3548 = vadd.f32 %v3378, %v3547
        %v3549 = vpop.f32.mrb[0].mxu0
        %v3550 = vadd.f32 %v3374, %v3549
        %v3551 = vpop.f32.mrb[0].mxu0
        %v3552 = vadd.f32 %v3378, %v3551
        %3553 = vmatprep.mubr.bf16.mxu0 %v1150
        %3554 = vmatmul.mubr.bf16.gmra.mrb[0].mxu0 %v1149
        %v3555 = vpop.f32.mrb[0].mxu0
        %v3556 = vadd.f32 %v3374, %v3555
        %v3557 = vpop.f32.mrb[0].mxu0
        %v3558 = vadd.f32 %v3378, %v3557
        %v3559 = vpop.f32.mrb[0].mxu0
        %v3560 = vadd.f32 %v3374, %v3559
        %v3561 = vpop.f32.mrb[0].mxu0
        %v3562 = vadd.f32 %v3378, %v3561
        %3563 = vmatprep.mubr.bf16.mxu0 %v1152
        %3564 = vmatmul.mubr.bf16.gmra.mrb[0].mxu0 %v1151
        %v3565 = vpop.f32.mrb[0].mxu0
        %v3566 = vadd.f32 %v3374, %v3565
        %v3567 = vpop.f32.mrb[0].mxu0
        %v3568 = vadd.f32 %v3378, %v3567
        %v3569 = vpop.f32.mrb[0].mxu0
        %v3570 = vadd.f32 %v3374, %v3569
        %v3571 = vpop.f32.mrb[0].mxu0
        %v3572 = vadd.f32 %v3378, %v3571
        %3573 = vmatprep.mubr.bf16.mxu0 %v1154
        %3574 = vmatmul.mubr.bf16.gmra.mrb[0].mxu0 %v1153
        %v3575 = vpop.f32.mrb[0].mxu0
        %v3576 = vadd.f32 %v3374, %v3575
        %v3577 = vpop.f32.mrb[0].mxu0
        %v3578 = vadd.f32 %v3378, %v3577
        %v3579 = vpop.f32.mrb[0].mxu0
        %v3580 = vadd.f32 %v3374, %v3579
        %v3581 = vpop.f32.mrb[0].mxu0
        %v3582 = vadd.f32 %v3378, %v3581
        %3583 = vdwg.mxu0
        %3584 = vmatprep.subr.bf16.mxu0 %v3308
        %3585 = vmatpush1.bf16.msra.mxu0 %v3307
        %3586 = vmatprep.subr.bf16.mxu0 %v3312
        %3587 = vmatpush1.bf16.msra.mxu0 %v3311
        %3588 = vmatprep.subr.bf16.mxu0 %v3316
        %3589 = vmatpush1.bf16.msra.mxu0 %v3315
        %3590 = vmatprep.subr.bf16.mxu0 %v3320
        %3591 = vmatpush1.bf16.msra.mxu0 %v3319
        %3592 = vmatprep.subr.bf16.mxu0 %v3324
        %3593 = vmatpush1.bf16.msra.mxu0 %v3323
        %3594 = vmatprep.subr.bf16.mxu0 %v3328
        %3595 = vmatpush1.bf16.msra.mxu0 %v3327
        %3596 = vmatprep.subr.bf16.mxu0 %v3332
        %3597 = vmatpush1.bf16.msra.mxu0 %v3331
        %3598 = vmatprep.subr.bf16.mxu0 %v3336
        %3599 = vmatpush1.bf16.msra.mxu0 %v3335
        %3600 = vmatprep.subr.bf16.mxu0 %v3340
        %3601 = vmatpush1.bf16.msra.mxu0 %v3339
        %3602 = vmatprep.subr.bf16.mxu0 %v3344
        %3603 = vmatpush1.bf16.msra.mxu0 %v3343
        %3604 = vmatprep.subr.bf16.mxu0 %v3348
        %3605 = vmatpush1.bf16.msra.mxu0 %v3347
        %3606 = vmatprep.subr.bf16.mxu0 %v3352
        %3607 = vmatpush1.bf16.msra.mxu0 %v3351
        %3608 = vmatprep.subr.bf16.mxu0 %v3356
        %3609 = vmatpush1.bf16.msra.mxu0 %v3355
        %3610 = vmatprep.subr.bf16.mxu0 %v3360
        %3611 = vmatpush1.bf16.msra.mxu0 %v3359
        %3612 = vmatprep.subr.bf16.mxu0 %v3364
        %3613 = vmatpush1.bf16.msra.mxu0 %v3363
        %3614 = vmatprep.subr.bf16.mxu0 %v3368
        %3615 = vmatpush1.bf16.msra.mxu0 %v3367
        %3616 = vmatprep.mubr.bf16.mxu0 %v1124
        %3617 = vmatmul.mubr.bf16.gmra.mrb[0].mxu0 %v1123
        %v3618 = vpop.f32.mrb[0].mxu0
        %v3619 = vadd.f32 %v3382, %v3618
        %v3620 = vpop.f32.mrb[0].mxu0
        %v3621 = vadd.f32 %v3386, %v3620
        %v3622 = vpop.f32.mrb[0].mxu0
        %v3623 = vadd.f32 %v3382, %v3622
        %v3624 = vpop.f32.mrb[0].mxu0
        %v3625 = vadd.f32 %v3386, %v3624
        %3626 = vmatprep.mubr.bf16.mxu0 %v1126
        %3627 = vmatmul.mubr.bf16.gmra.mrb[0].mxu0 %v1125
        %v3628 = vpop.f32.mrb[0].mxu0
        %v3629 = vadd.f32 %v3382, %v3628
        %v3630 = vpop.f32.mrb[0].mxu0
        %v3631 = vadd.f32 %v3386, %v3630
        %v3632 = vpop.f32.mrb[0].mxu0
        %v3633 = vadd.f32 %v3382, %v3632
        %v3634 = vpop.f32.mrb[0].mxu0
        %v3635 = vadd.f32 %v3386, %v3634
        %3636 = vmatprep.mubr.bf16.mxu0 %v1128
        %3637 = vmatmul.mubr.bf16.gmra.mrb[0].mxu0 %v1127
        %v3638 = vpop.f32.mrb[0].mxu0
        %v3639 = vadd.f32 %v3382, %v3638
        %v3640 = vpop.f32.mrb[0].mxu0
        %v3641 = vadd.f32 %v3386, %v3640
        %v3642 = vpop.f32.mrb[0].mxu0
        %v3643 = vadd.f32 %v3382, %v3642
        %v3644 = vpop.f32.mrb[0].mxu0
        %v3645 = vadd.f32 %v3386, %v3644
        %3646 = vmatprep.mubr.bf16.mxu0 %v1130
        %3647 = vmatmul.mubr.bf16.gmra.mrb[0].mxu0 %v1129
        %v3648 = vpop.f32.mrb[0].mxu0
        %v3649 = vadd.f32 %v3382, %v3648
        %v3650 = vpop.f32.mrb[0].mxu0
        %v3651 = vadd.f32 %v3386, %v3650
        %v3652 = vpop.f32.mrb[0].mxu0
        %v3653 = vadd.f32 %v3382, %v3652
        %v3654 = vpop.f32.mrb[0].mxu0
        %v3655 = vadd.f32 %v3386, %v3654
        %3656 = vmatprep.mubr.bf16.mxu0 %v1132
        %3657 = vmatmul.mubr.bf16.gmra.mrb[0].mxu0 %v1131
        %v3658 = vpop.f32.mrb[0].mxu0
        %v3659 = vadd.f32 %v3382, %v3658
        %v3660 = vpop.f32.mrb[0].mxu0
        %v3661 = vadd.f32 %v3386, %v3660
        %v3662 = vpop.f32.mrb[0].mxu0
        %v3663 = vadd.f32 %v3382, %v3662
        %v3664 = vpop.f32.mrb[0].mxu0
        %v3665 = vadd.f32 %v3386, %v3664
        %3666 = vmatprep.mubr.bf16.mxu0 %v1134
        %3667 = vmatmul.mubr.bf16.gmra.mrb[0].mxu0 %v1133
        %v3668 = vpop.f32.mrb[0].mxu0
        %v3669 = vadd.f32 %v3382, %v3668
        %v3670 = vpop.f32.mrb[0].mxu0
        %v3671 = vadd.f32 %v3386, %v3670
        %v3672 = vpop.f32.mrb[0].mxu0
        %v3673 = vadd.f32 %v3382, %v3672
        %v3674 = vpop.f32.mrb[0].mxu0
        %v3675 = vadd.f32 %v3386, %v3674
        %3676 = vmatprep.mubr.bf16.mxu0 %v1136
        %3677 = vmatmul.mubr.bf16.gmra.mrb[0].mxu0 %v1135
        %v3678 = vpop.f32.mrb[0].mxu0
        %v3679 = vadd.f32 %v3382, %v3678
        %v3680 = vpop.f32.mrb[0].mxu0
        %v3681 = vadd.f32 %v3386, %v3680
        %v3682 = vpop.f32.mrb[0].mxu0
        %v3683 = vadd.f32 %v3382, %v3682
        %v3684 = vpop.f32.mrb[0].mxu0
        %v3685 = vadd.f32 %v3386, %v3684
        %3686 = vmatprep.mubr.bf16.mxu0 %v1138
        %3687 = vmatmul.mubr.bf16.gmra.mrb[0].mxu0 %v1137
        %v3688 = vpop.f32.mrb[0].mxu0
        %v3689 = vadd.f32 %v3382, %v3688
        %v3690 = vpop.f32.mrb[0].mxu0
        %v3691 = vadd.f32 %v3386, %v3690
        %v3692 = vpop.f32.mrb[0].mxu0
        %v3693 = vadd.f32 %v3382, %v3692
        %v3694 = vpop.f32.mrb[0].mxu0
        %v3695 = vadd.f32 %v3386, %v3694
        %3696 = vmatprep.mubr.bf16.mxu0 %v1140
        %3697 = vmatmul.mubr.bf16.gmra.mrb[0].mxu0 %v1139
        %v3698 = vpop.f32.mrb[0].mxu0
        %v3699 = vadd.f32 %v3382, %v3698
        %v3700 = vpop.f32.mrb[0].mxu0
        %v3701 = vadd.f32 %v3386, %v3700
        %v3702 = vpop.f32.mrb[0].mxu0
        %v3703 = vadd.f32 %v3382, %v3702
        %v3704 = vpop.f32.mrb[0].mxu0
        %v3705 = vadd.f32 %v3386, %v3704
        %3706 = vmatprep.mubr.bf16.mxu0 %v1142
        %3707 = vmatmul.mubr.bf16.gmra.mrb[0].mxu0 %v1141
        %v3708 = vpop.f32.mrb[0].mxu0
        %v3709 = vadd.f32 %v3382, %v3708
        %v3710 = vpop.f32.mrb[0].mxu0
        %v3711 = vadd.f32 %v3386, %v3710
        %v3712 = vpop.f32.mrb[0].mxu0
        %v3713 = vadd.f32 %v3382, %v3712
        %v3714 = vpop.f32.mrb[0].mxu0
        %v3715 = vadd.f32 %v3386, %v3714
        %3716 = vmatprep.mubr.bf16.mxu0 %v1144
        %3717 = vmatmul.mubr.bf16.gmra.mrb[0].mxu0 %v1143
        %v3718 = vpop.f32.mrb[0].mxu0
        %v3719 = vadd.f32 %v3382, %v3718
        %v3720 = vpop.f32.mrb[0].mxu0
        %v3721 = vadd.f32 %v3386, %v3720
        %v3722 = vpop.f32.mrb[0].mxu0
        %v3723 = vadd.f32 %v3382, %v3722
        %v3724 = vpop.f32.mrb[0].mxu0
        %v3725 = vadd.f32 %v3386, %v3724
        %3726 = vmatprep.mubr.bf16.mxu0 %v1146
        %3727 = vmatmul.mubr.bf16.gmra.mrb[0].mxu0 %v1145
        %v3728 = vpop.f32.mrb[0].mxu0
        %v3729 = vadd.f32 %v3382, %v3728
        %v3730 = vpop.f32.mrb[0].mxu0
        %v3731 = vadd.f32 %v3386, %v3730
        %v3732 = vpop.f32.mrb[0].mxu0
        %v3733 = vadd.f32 %v3382, %v3732
        %v3734 = vpop.f32.mrb[0].mxu0
        %v3735 = vadd.f32 %v3386, %v3734
        %3736 = vmatprep.mubr.bf16.mxu0 %v1148
        %3737 = vmatmul.mubr.bf16.gmra.mrb[0].mxu0 %v1147
        %v3738 = vpop.f32.mrb[0].mxu0
        %v3739 = vadd.f32 %v3382, %v3738
        %v3740 = vpop.f32.mrb[0].mxu0
        %v3741 = vadd.f32 %v3386, %v3740
        %v3742 = vpop.f32.mrb[0].mxu0
        %v3743 = vadd.f32 %v3382, %v3742
        %v3744 = vpop.f32.mrb[0].mxu0
        %v3745 = vadd.f32 %v3386, %v3744
        %3746 = vmatprep.mubr.bf16.mxu0 %v1150
        %3747 = vmatmul.mubr.bf16.gmra.mrb[0].mxu0 %v1149
        %v3748 = vpop.f32.mrb[0].mxu0
        %v3749 = vadd.f32 %v3382, %v3748
        %v3750 = vpop.f32.mrb[0].mxu0
        %v3751 = vadd.f32 %v3386, %v3750
        %v3752 = vpop.f32.mrb[0].mxu0
        %v3753 = vadd.f32 %v3382, %v3752
        %v3754 = vpop.f32.mrb[0].mxu0
        %v3755 = vadd.f32 %v3386, %v3754
        %3756 = vmatprep.mubr.bf16.mxu0 %v1152
        %3757 = vmatmul.mubr.bf16.gmra.mrb[0].mxu0 %v1151
        %v3758 = vpop.f32.mrb[0].mxu0
        %v3759 = vadd.f32 %v3382, %v3758
        %v3760 = vpop.f32.mrb[0].mxu0
        %v3761 = vadd.f32 %v3386, %v3760
        %v3762 = vpop.f32.mrb[0].mxu0
        %v3763 = vadd.f32 %v3382, %v3762
        %v3764 = vpop.f32.mrb[0].mxu0
        %v3765 = vadd.f32 %v3386, %v3764
        %3766 = vmatprep.mubr.bf16.mxu0 %v1154
        %3767 = vmatmul.mubr.bf16.gmra.mrb[0].mxu0 %v1153
        %v3768 = vpop.f32.mrb[0].mxu0
        %v3769 = vadd.f32 %v3382, %v3768
        %v3770 = vpop.f32.mrb[0].mxu0
        %v3771 = vadd.f32 %v3386, %v3770
        %v3772 = vpop.f32.mrb[0].mxu0
        %v3773 = vadd.f32 %v3382, %v3772
        %v3774 = vpop.f32.mrb[0].mxu0
        %v3775 = vadd.f32 %v3386, %v3774
        %3776 = vdwg.mxu0
        %v3777 = vmax.f32 %v3426, 0.0
        %v3778 = vmax.f32 %v3428, 0.0
        %v3779 = vmax.f32 %v3619, 0.0
        %v3780 = vmax.f32 %v3621, 0.0
        %v3781 = vmax.f32 %v3430, 0.0
        %v3782 = vmax.f32 %v3432, 0.0
        %v3783 = vmax.f32 %v3623, 0.0
        %v3784 = vmax.f32 %v3625, 0.0
        %v3785 = vmax.f32 %v3436, 0.0
        %v3786 = vmax.f32 %v3438, 0.0
        %v3787 = vmax.f32 %v3629, 0.0
        %v3788 = vmax.f32 %v3631, 0.0
        %v3789 = vmax.f32 %v3440, 0.0
        %v3790 = vmax.f32 %v3442, 0.0
        %v3791 = vmax.f32 %v3633, 0.0
        %v3792 = vmax.f32 %v3635, 0.0
        %v3793 = vmax.f32 %v3446, 0.0
        %v3794 = vmax.f32 %v3448, 0.0
        %v3795 = vmax.f32 %v3639, 0.0
        %v3796 = vmax.f32 %v3641, 0.0
        %v3797 = vmax.f32 %v3450, 0.0
        %v3798 = vmax.f32 %v3452, 0.0
        %v3799 = vmax.f32 %v3643, 0.0
        %v3800 = vmax.f32 %v3645, 0.0
        %v3801 = vmax.f32 %v3456, 0.0
        %v3802 = vmax.f32 %v3458, 0.0
        %v3803 = vmax.f32 %v3649, 0.0
        %v3804 = vmax.f32 %v3651, 0.0
        %v3805 = vmax.f32 %v3460, 0.0
        %v3806 = vmax.f32 %v3462, 0.0
        %v3807 = vmax.f32 %v3653, 0.0
        %v3808 = vmax.f32 %v3655, 0.0
        %v3809 = vmax.f32 %v3466, 0.0
        %v3810 = vmax.f32 %v3468, 0.0
        %v3811 = vmax.f32 %v3659, 0.0
        %v3812 = vmax.f32 %v3661, 0.0
        %v3813 = vmax.f32 %v3470, 0.0
        %v3814 = vmax.f32 %v3472, 0.0
        %v3815 = vmax.f32 %v3663, 0.0
        %v3816 = vmax.f32 %v3665, 0.0
        %v3817 = vmax.f32 %v3476, 0.0
        %v3818 = vmax.f32 %v3478, 0.0
        %v3819 = vmax.f32 %v3669, 0.0
        %v3820 = vmax.f32 %v3671, 0.0
        %v3821 = vmax.f32 %v3480, 0.0
        %v3822 = vmax.f32 %v3482, 0.0
        %v3823 = vmax.f32 %v3673, 0.0
        %v3824 = vmax.f32 %v3675, 0.0
        %v3825 = vmax.f32 %v3486, 0.0
        %v3826 = vmax.f32 %v3488, 0.0
        %v3827 = vmax.f32 %v3679, 0.0
        %v3828 = vmax.f32 %v3681, 0.0
        %v3829 = vmax.f32 %v3490, 0.0
        %v3830 = vmax.f32 %v3492, 0.0
        %v3831 = vmax.f32 %v3683, 0.0
        %v3832 = vmax.f32 %v3685, 0.0
        %v3833 = vmax.f32 %v3496, 0.0
        %v3834 = vmax.f32 %v3498, 0.0
        %v3835 = vmax.f32 %v3689, 0.0
        %v3836 = vmax.f32 %v3691, 0.0
        %v3837 = vmax.f32 %v3500, 0.0
        %v3838 = vmax.f32 %v3502, 0.0
        %v3839 = vmax.f32 %v3693, 0.0
        %v3840 = vmax.f32 %v3695, 0.0
        %v3841 = vmax.f32 %v3506, 0.0
        %v3842 = vmax.f32 %v3508, 0.0
        %v3843 = vmax.f32 %v3699, 0.0
        %v3844 = vmax.f32 %v3701, 0.0
        %v3845 = vmax.f32 %v3510, 0.0
        %v3846 = vmax.f32 %v3512, 0.0
        %v3847 = vmax.f32 %v3703, 0.0
        %v3848 = vmax.f32 %v3705, 0.0
        %v3849 = vmax.f32 %v3516, 0.0
        %v3850 = vmax.f32 %v3518, 0.0
        %v3851 = vmax.f32 %v3709, 0.0
        %v3852 = vmax.f32 %v3711, 0.0
        %v3853 = vmax.f32 %v3520, 0.0
        %v3854 = vmax.f32 %v3522, 0.0
        %v3855 = vmax.f32 %v3713, 0.0
        %v3856 = vmax.f32 %v3715, 0.0
        %v3857 = vmax.f32 %v3526, 0.0
        %v3858 = vmax.f32 %v3528, 0.0
        %v3859 = vmax.f32 %v3719, 0.0
        %v3860 = vmax.f32 %v3721, 0.0
        %v3861 = vmax.f32 %v3530, 0.0
        %v3862 = vmax.f32 %v3532, 0.0
        %v3863 = vmax.f32 %v3723, 0.0
        %v3864 = vmax.f32 %v3725, 0.0
        %v3865 = vmax.f32 %v3536, 0.0
        %v3866 = vmax.f32 %v3538, 0.0
        %v3867 = vmax.f32 %v3729, 0.0
        %v3868 = vmax.f32 %v3731, 0.0
        %v3869 = vmax.f32 %v3540, 0.0
        %v3870 = vmax.f32 %v3542, 0.0
        %v3871 = vmax.f32 %v3733, 0.0
        %v3872 = vmax.f32 %v3735, 0.0
        %v3873 = vmax.f32 %v3546, 0.0
        %v3874 = vmax.f32 %v3548, 0.0
        %v3875 = vmax.f32 %v3739, 0.0
        %v3876 = vmax.f32 %v3741, 0.0
        %v3877 = vmax.f32 %v3550, 0.0
        %v3878 = vmax.f32 %v3552, 0.0
        %v3879 = vmax.f32 %v3743, 0.0
        %v3880 = vmax.f32 %v3745, 0.0
        %v3881 = vmax.f32 %v3556, 0.0
        %v3882 = vmax.f32 %v3558, 0.0
        %v3883 = vmax.f32 %v3749, 0.0
        %v3884 = vmax.f32 %v3751, 0.0
        %v3885 = vmax.f32 %v3560, 0.0
        %v3886 = vmax.f32 %v3562, 0.0
        %v3887 = vmax.f32 %v3753, 0.0
        %v3888 = vmax.f32 %v3755, 0.0
        %v3889 = vmax.f32 %v3566, 0.0
        %v3890 = vmax.f32 %v3568, 0.0
        %v3891 = vmax.f32 %v3759, 0.0
        %v3892 = vmax.f32 %v3761, 0.0
        %v3893 = vmax.f32 %v3570, 0.0
        %v3894 = vmax.f32 %v3572, 0.0
        %v3895 = vmax.f32 %v3763, 0.0
        %v3896 = vmax.f32 %v3765, 0.0
        %v3897 = vmax.f32 %v3576, 0.0
        %v3898 = vmax.f32 %v3578, 0.0
        %v3899 = vmax.f32 %v3769, 0.0
        %v3900 = vmax.f32 %v3771, 0.0
        %v3901 = vmax.f32 %v3580, 0.0
        %v3902 = vmax.f32 %v3582, 0.0
        %v3903 = vmax.f32 %v3773, 0.0
        %v3904 = vmax.f32 %v3775, 0.0
        %v3905 = vpack.c.bf16 %v3781, %v3777
        %v3906 = vpack.c.bf16 %v3782, %v3778
        %v3907 = vpack.c.bf16 %v3783, %v3779
        %v3908 = vpack.c.bf16 %v3784, %v3780
        %v3909 = vpack.c.bf16 %v3789, %v3785
        %v3910 = vpack.c.bf16 %v3790, %v3786
        %v3911 = vpack.c.bf16 %v3791, %v3787
        %v3912 = vpack.c.bf16 %v3792, %v3788
        %v3913 = vpack.c.bf16 %v3797, %v3793
        %v3914 = vpack.c.bf16 %v3798, %v3794
        %v3915 = vpack.c.bf16 %v3799, %v3795
        %v3916 = vpack.c.bf16 %v3800, %v3796
        %v3917 = vpack.c.bf16 %v3805, %v3801
        %v3918 = vpack.c.bf16 %v3806, %v3802
        %v3919 = vpack.c.bf16 %v3807, %v3803
        %v3920 = vpack.c.bf16 %v3808, %v3804
        %v3921 = vpack.c.bf16 %v3813, %v3809
        %v3922 = vpack.c.bf16 %v3814, %v3810
        %v3923 = vpack.c.bf16 %v3815, %v3811
        %v3924 = vpack.c.bf16 %v3816, %v3812
        %v3925 = vpack.c.bf16 %v3821, %v3817
        %v3926 = vpack.c.bf16 %v3822, %v3818
        %v3927 = vpack.c.bf16 %v3823, %v3819
        %v3928 = vpack.c.bf16 %v3824, %v3820
        %v3929 = vpack.c.bf16 %v3829, %v3825
        %v3930 = vpack.c.bf16 %v3830, %v3826
        %v3931 = vpack.c.bf16 %v3831, %v3827
        %v3932 = vpack.c.bf16 %v3832, %v3828
        %v3933 = vpack.c.bf16 %v3837, %v3833
        %v3934 = vpack.c.bf16 %v3838, %v3834
        %v3935 = vpack.c.bf16 %v3839, %v3835
        %v3936 = vpack.c.bf16 %v3840, %v3836
        %v3937 = vpack.c.bf16 %v3845, %v3841
        %v3938 = vpack.c.bf16 %v3846, %v3842
        %v3939 = vpack.c.bf16 %v3847, %v3843
        %v3940 = vpack.c.bf16 %v3848, %v3844
        %v3941 = vpack.c.bf16 %v3853, %v3849
        %v3942 = vpack.c.bf16 %v3854, %v3850
        %v3943 = vpack.c.bf16 %v3855, %v3851
        %v3944 = vpack.c.bf16 %v3856, %v3852
        %v3945 = vpack.c.bf16 %v3861, %v3857
        %v3946 = vpack.c.bf16 %v3862, %v3858
        %v3947 = vpack.c.bf16 %v3863, %v3859
        %v3948 = vpack.c.bf16 %v3864, %v3860
        %v3949 = vpack.c.bf16 %v3869, %v3865
        %v3950 = vpack.c.bf16 %v3870, %v3866
        %v3951 = vpack.c.bf16 %v3871, %v3867
        %v3952 = vpack.c.bf16 %v3872, %v3868
        %v3953 = vpack.c.bf16 %v3877, %v3873
        %v3954 = vpack.c.bf16 %v3878, %v3874
        %v3955 = vpack.c.bf16 %v3879, %v3875
        %v3956 = vpack.c.bf16 %v3880, %v3876
        %v3957 = vpack.c.bf16 %v3885, %v3881
        %v3958 = vpack.c.bf16 %v3886, %v3882
        %v3959 = vpack.c.bf16 %v3887, %v3883
        %v3960 = vpack.c.bf16 %v3888, %v3884
        %v3961 = vpack.c.bf16 %v3893, %v3889
        %v3962 = vpack.c.bf16 %v3894, %v3890
        %v3963 = vpack.c.bf16 %v3895, %v3891
        %v3964 = vpack.c.bf16 %v3896, %v3892
        %v3965 = vpack.c.bf16 %v3901, %v3897
        %v3966 = vpack.c.bf16 %v3902, %v3898
        %v3967 = vpack.c.bf16 %v3903, %v3899
        %v3968 = vpack.c.bf16 %v3904, %v3900
        %v3969 = vld [vmem:[#allocation5] sm:$0xf]
        %v3970 = vld [vmem:[#allocation5 + $0x4] sm:$0xf]
        %v3971 = vld [vmem:[#allocation5 + $0x8] sm:$0xf]
        %v3972 = vld [vmem:[#allocation5 + $0xc] sm:$0xf]
        %v3973 = vld [vmem:[#allocation5 + $0x10] sm:$0xf]
        %v3974 = vld [vmem:[#allocation5 + $0x14] sm:$0xf]
        %v3975 = vld [vmem:[#allocation5 + $0x18] sm:$0xf]
        %v3976 = vld [vmem:[#allocation5 + $0x1c] sm:$0xf]
        %v3977 = vld [vmem:[#allocation5 + $0x20] sm:$0xf]
        %v3978 = vld [vmem:[#allocation5 + $0x24] sm:$0xf]
        %v3979 = vld [vmem:[#allocation5 + $0x28] sm:$0xf]
        %v3980 = vld [vmem:[#allocation5 + $0x2c] sm:$0xf]
        %v3981 = vld [vmem:[#allocation5 + $0x30] sm:$0xf]
        %v3982 = vld [vmem:[#allocation5 + $0x34] sm:$0xf]
        %v3983 = vld [vmem:[#allocation5 + $0x38] sm:$0xf]
        %v3984 = vld [vmem:[#allocation5 + $0x3c] sm:$0xf]
        %v3985 = vld [vmem:[#allocation5 + $0x40] sm:$0xf]
        %v3986 = vld [vmem:[#allocation5 + $0x44] sm:$0xf]
        %v3987 = vld [vmem:[#allocation5 + $0x48] sm:$0xf]
        %v3988 = vld [vmem:[#allocation5 + $0x4c] sm:$0xf]
        %v3989 = vld [vmem:[#allocation5 + $0x50] sm:$0xf]
        %v3990 = vld [vmem:[#allocation5 + $0x54] sm:$0xf]
        %v3991 = vld [vmem:[#allocation5 + $0x58] sm:$0xf]
        %v3992 = vld [vmem:[#allocation5 + $0x5c] sm:$0xf]
        %v3993 = vld [vmem:[#allocation5 + $0x60] sm:$0xf]
        %v3994 = vld [vmem:[#allocation5 + $0x64] sm:$0xf]
        %v3995 = vld [vmem:[#allocation5 + $0x68] sm:$0xf]
        %v3996 = vld [vmem:[#allocation5 + $0x6c] sm:$0xf]
        %v3997 = vld [vmem:[#allocation5 + $0x70] sm:$0xf]
        %v3998 = vld [vmem:[#allocation5 + $0x74] sm:$0xf]
        %v3999 = vld [vmem:[#allocation5 + $0x78] sm:$0xf]
        %v4000 = vld [vmem:[#allocation5 + $0x7c] sm:$0xf]
        %v4001 = vld [vmem:[#allocation5 + $0x80] sm:$0xf]
        %v4002 = vld [vmem:[#allocation5 + $0x84] sm:$0xf]
        %v4003 = vld [vmem:[#allocation5 + $0x88] sm:$0xf]
        %v4004 = vld [vmem:[#allocation5 + $0x8c] sm:$0xf]
        %v4005 = vld [vmem:[#allocation5 + $0x90] sm:$0xf]
        %v4006 = vld [vmem:[#allocation5 + $0x94] sm:$0xf]
        %v4007 = vld [vmem:[#allocation5 + $0x98] sm:$0xf]
        %v4008 = vld [vmem:[#allocation5 + $0x9c] sm:$0xf]
        %v4009 = vld [vmem:[#allocation5 + $0xa0] sm:$0xf]
        %v4010 = vld [vmem:[#allocation5 + $0xa4] sm:$0xf]
        %v4011 = vld [vmem:[#allocation5 + $0xa8] sm:$0xf]
        %v4012 = vld [vmem:[#allocation5 + $0xac] sm:$0xf]
        %v4013 = vld [vmem:[#allocation5 + $0xb0] sm:$0xf]
        %v4014 = vld [vmem:[#allocation5 + $0xb4] sm:$0xf]
        %v4015 = vld [vmem:[#allocation5 + $0xb8] sm:$0xf]
        %v4016 = vld [vmem:[#allocation5 + $0xbc] sm:$0xf]
        %v4017 = vld [vmem:[#allocation5 + $0xc0] sm:$0xf]
        %v4018 = vld [vmem:[#allocation5 + $0xc4] sm:$0xf]
        %v4019 = vld [vmem:[#allocation5 + $0xc8] sm:$0xf]
        %v4020 = vld [vmem:[#allocation5 + $0xcc] sm:$0xf]
        %v4021 = vld [vmem:[#allocation5 + $0xd0] sm:$0xf]
        %v4022 = vld [vmem:[#allocation5 + $0xd4] sm:$0xf]
        %v4023 = vld [vmem:[#allocation5 + $0xd8] sm:$0xf]
        %v4024 = vld [vmem:[#allocation5 + $0xdc] sm:$0xf]
        %v4025 = vld [vmem:[#allocation5 + $0xe0] sm:$0xf]
        %v4026 = vld [vmem:[#allocation5 + $0xe4] sm:$0xf]
        %v4027 = vld [vmem:[#allocation5 + $0xe8] sm:$0xf]
        %v4028 = vld [vmem:[#allocation5 + $0xec] sm:$0xf]
        %v4029 = vld [vmem:[#allocation5 + $0xf0] sm:$0xf]
        %v4030 = vld [vmem:[#allocation5 + $0xf4] sm:$0xf]
        %v4031 = vld [vmem:[#allocation5 + $0xf8] sm:$0xf]
        %v4032 = vld [vmem:[#allocation5 + $0xfc] sm:$0xf]
        %v4097 = vunpack.c.l.b16 %v3969
        %v4098 = vunpack.c.l.b16 %v3970
        %v4099 = vunpack.c.l.b16 %v3971
        %v4100 = vunpack.c.l.b16 %v3972
        %v4101 = vunpack.c.l.b16 %v3973
        %v4102 = vunpack.c.l.b16 %v3974
        %v4103 = vunpack.c.l.b16 %v3975
        %v4104 = vunpack.c.l.b16 %v3976
        %v4105 = vunpack.c.l.b16 %v3977
        %v4106 = vunpack.c.l.b16 %v3978
        %v4107 = vunpack.c.l.b16 %v3979
        %v4108 = vunpack.c.l.b16 %v3980
        %v4109 = vunpack.c.l.b16 %v3981
        %v4110 = vunpack.c.l.b16 %v3982
        %v4111 = vunpack.c.l.b16 %v3983
        %v4112 = vunpack.c.l.b16 %v3984
        %v4113 = vunpack.c.l.b16 %v3985
        %v4114 = vunpack.c.l.b16 %v3986
        %v4115 = vunpack.c.l.b16 %v3987
        %v4116 = vunpack.c.l.b16 %v3988
        %v4117 = vunpack.c.l.b16 %v3989
        %v4118 = vunpack.c.l.b16 %v3990
        %v4119 = vunpack.c.l.b16 %v3991
        %v4120 = vunpack.c.l.b16 %v3992
        %v4121 = vunpack.c.l.b16 %v3993
        %v4122 = vunpack.c.l.b16 %v3994
        %v4123 = vunpack.c.l.b16 %v3995
        %v4124 = vunpack.c.l.b16 %v3996
        %v4125 = vunpack.c.l.b16 %v3997
        %v4126 = vunpack.c.l.b16 %v3998
        %v4127 = vunpack.c.l.b16 %v3999
        %v4128 = vunpack.c.l.b16 %v4000
        %v4129 = vunpack.c.l.b16 %v4001
        %v4130 = vunpack.c.l.b16 %v4002
        %v4131 = vunpack.c.l.b16 %v4003
        %v4132 = vunpack.c.l.b16 %v4004
        %v4133 = vunpack.c.l.b16 %v4005
        %v4134 = vunpack.c.l.b16 %v4006
        %v4135 = vunpack.c.l.b16 %v4007
        %v4136 = vunpack.c.l.b16 %v4008
        %v4137 = vunpack.c.l.b16 %v4009
        %v4138 = vunpack.c.l.b16 %v4010
        %v4139 = vunpack.c.l.b16 %v4011
        %v4140 = vunpack.c.l.b16 %v4012
        %v4141 = vunpack.c.l.b16 %v4013
        %v4142 = vunpack.c.l.b16 %v4014
        %v4143 = vunpack.c.l.b16 %v4015
        %v4144 = vunpack.c.l.b16 %v4016
        %v4145 = vunpack.c.l.b16 %v4017
        %v4146 = vunpack.c.l.b16 %v4018
        %v4147 = vunpack.c.l.b16 %v4019
        %v4148 = vunpack.c.l.b16 %v4020
        %v4149 = vunpack.c.l.b16 %v4021
        %v4150 = vunpack.c.l.b16 %v4022
        %v4151 = vunpack.c.l.b16 %v4023
        %v4152 = vunpack.c.l.b16 %v4024
        %v4153 = vunpack.c.l.b16 %v4025
        %v4154 = vunpack.c.l.b16 %v4026
        %v4155 = vunpack.c.l.b16 %v4027
        %v4156 = vunpack.c.l.b16 %v4028
        %v4157 = vunpack.c.l.b16 %v4029
        %v4158 = vunpack.c.l.b16 %v4030
        %v4159 = vunpack.c.l.b16 %v4031
        %v4160 = vunpack.c.l.b16 %v4032
        %v4161 = vpack.c.b16 %v4098, %v4097
        %v4162 = vpack.c.b16 %v4100, %v4099
        %v4163 = vpack.c.b16 %v4102, %v4101
        %v4164 = vpack.c.b16 %v4104, %v4103
        %v4165 = vpack.c.b16 %v4106, %v4105
        %v4166 = vpack.c.b16 %v4108, %v4107
        %v4167 = vpack.c.b16 %v4110, %v4109
        %v4168 = vpack.c.b16 %v4112, %v4111
        %v4169 = vpack.c.b16 %v4114, %v4113
        %v4170 = vpack.c.b16 %v4116, %v4115
        %v4171 = vpack.c.b16 %v4118, %v4117
        %v4172 = vpack.c.b16 %v4120, %v4119
        %v4173 = vpack.c.b16 %v4122, %v4121
        %v4174 = vpack.c.b16 %v4124, %v4123
        %v4175 = vpack.c.b16 %v4126, %v4125
        %v4176 = vpack.c.b16 %v4128, %v4127
        %v4177 = vpack.c.b16 %v4130, %v4129
        %v4178 = vpack.c.b16 %v4132, %v4131
        %v4179 = vpack.c.b16 %v4134, %v4133
        %v4180 = vpack.c.b16 %v4136, %v4135
        %v4181 = vpack.c.b16 %v4138, %v4137
        %v4182 = vpack.c.b16 %v4140, %v4139
        %v4183 = vpack.c.b16 %v4142, %v4141
        %v4184 = vpack.c.b16 %v4144, %v4143
        %v4185 = vpack.c.b16 %v4146, %v4145
        %v4186 = vpack.c.b16 %v4148, %v4147
        %v4187 = vpack.c.b16 %v4150, %v4149
        %v4188 = vpack.c.b16 %v4152, %v4151
        %v4189 = vpack.c.b16 %v4154, %v4153
        %v4190 = vpack.c.b16 %v4156, %v4155
        %v4191 = vpack.c.b16 %v4158, %v4157
        %v4192 = vpack.c.b16 %v4160, %v4159
        %4225 = vmatprep.subr.bf16.mxu0 0
        %4226 = vmatpush1.bf16.msra.mxu0 %v4161
        %4227 = vmatprep.subr.bf16.mxu0 0
        %4228 = vmatpush1.bf16.msra.mxu0 %v4162
        %4229 = vmatprep.subr.bf16.mxu0 0
        %4230 = vmatpush1.bf16.msra.mxu0 %v4163
        %4231 = vmatprep.subr.bf16.mxu0 0
        %4232 = vmatpush1.bf16.msra.mxu0 %v4164
        %4233 = vmatprep.subr.bf16.mxu0 0
        %4234 = vmatpush1.bf16.msra.mxu0 %v4165
        %4235 = vmatprep.subr.bf16.mxu0 0
        %4236 = vmatpush1.bf16.msra.mxu0 %v4166
        %4237 = vmatprep.subr.bf16.mxu0 0
        %4238 = vmatpush1.bf16.msra.mxu0 %v4167
        %4239 = vmatprep.subr.bf16.mxu0 0
        %4240 = vmatpush1.bf16.msra.mxu0 %v4168
        %4241 = vmatprep.subr.bf16.mxu0 0
        %4242 = vmatpush1.bf16.msra.mxu0 %v4169
        %4243 = vmatprep.subr.bf16.mxu0 0
        %4244 = vmatpush1.bf16.msra.mxu0 %v4170
        %4245 = vmatprep.subr.bf16.mxu0 0
        %4246 = vmatpush1.bf16.msra.mxu0 %v4171
        %4247 = vmatprep.subr.bf16.mxu0 0
        %4248 = vmatpush1.bf16.msra.mxu0 %v4172
        %4249 = vmatprep.subr.bf16.mxu0 0
        %4250 = vmatpush1.bf16.msra.mxu0 %v4173
        %4251 = vmatprep.subr.bf16.mxu0 0
        %4252 = vmatpush1.bf16.msra.mxu0 %v4174
        %4253 = vmatprep.subr.bf16.mxu0 0
        %4254 = vmatpush1.bf16.msra.mxu0 %v4175
        %4255 = vmatprep.subr.bf16.mxu0 0
        %4256 = vmatpush1.bf16.msra.mxu0 %v4176
        %4257 = vmatprep.mubr.bf16.mxu0 %v3906
        %4258 = vmatmul.mubr.bf16.gmra.mrb[0].mxu0 %v3905
        %v4259 = vpop.f32.mrb[0].mxu0
        %v4260 = vadd.f32 0.0, %v4259
        %v4261 = vpop.f32.mrb[0].mxu0
        %v4262 = vpop.f32.mrb[0].mxu0
        %v4263 = vadd.f32 0.0, %v4262
        %v4264 = vpop.f32.mrb[0].mxu0
        %4265 = vmatprep.mubr.bf16.mxu0 %v3910
        %4266 = vmatmul.mubr.bf16.gmra.mrb[0].mxu0 %v3909
        %v4267 = vpop.f32.mrb[0].mxu0
        %v4268 = vadd.f32 0.0, %v4267
        %v4269 = vpop.f32.mrb[0].mxu0
        %v4270 = vpop.f32.mrb[0].mxu0
        %v4271 = vadd.f32 0.0, %v4270
        %v4272 = vpop.f32.mrb[0].mxu0
        %4273 = vmatprep.mubr.bf16.mxu0 %v3914
        %4274 = vmatmul.mubr.bf16.gmra.mrb[0].mxu0 %v3913
        %v4275 = vpop.f32.mrb[0].mxu0
        %v4276 = vadd.f32 0.0, %v4275
        %v4277 = vpop.f32.mrb[0].mxu0
        %v4278 = vpop.f32.mrb[0].mxu0
        %v4279 = vadd.f32 0.0, %v4278
        %v4280 = vpop.f32.mrb[0].mxu0
        %4281 = vmatprep.mubr.bf16.mxu0 %v3918
        %4282 = vmatmul.mubr.bf16.gmra.mrb[0].mxu0 %v3917
        %v4283 = vpop.f32.mrb[0].mxu0
        %v4284 = vadd.f32 0.0, %v4283
        %v4285 = vpop.f32.mrb[0].mxu0
        %v4286 = vpop.f32.mrb[0].mxu0
        %v4287 = vadd.f32 0.0, %v4286
        %v4288 = vpop.f32.mrb[0].mxu0
        %4289 = vmatprep.mubr.bf16.mxu0 %v3922
        %4290 = vmatmul.mubr.bf16.gmra.mrb[0].mxu0 %v3921
        %v4291 = vpop.f32.mrb[0].mxu0
        %v4292 = vadd.f32 0.0, %v4291
        %v4293 = vpop.f32.mrb[0].mxu0
        %v4294 = vpop.f32.mrb[0].mxu0
        %v4295 = vadd.f32 0.0, %v4294
        %v4296 = vpop.f32.mrb[0].mxu0
        %4297 = vmatprep.mubr.bf16.mxu0 %v3926
        %4298 = vmatmul.mubr.bf16.gmra.mrb[0].mxu0 %v3925
        %v4299 = vpop.f32.mrb[0].mxu0
        %v4300 = vadd.f32 0.0, %v4299
        %v4301 = vpop.f32.mrb[0].mxu0
        %v4302 = vpop.f32.mrb[0].mxu0
        %v4303 = vadd.f32 0.0, %v4302
        %v4304 = vpop.f32.mrb[0].mxu0
        %4305 = vmatprep.mubr.bf16.mxu0 %v3930
        %4306 = vmatmul.mubr.bf16.gmra.mrb[0].mxu0 %v3929
        %v4307 = vpop.f32.mrb[0].mxu0
        %v4308 = vadd.f32 0.0, %v4307
        %v4309 = vpop.f32.mrb[0].mxu0
        %v4310 = vpop.f32.mrb[0].mxu0
        %v4311 = vadd.f32 0.0, %v4310
        %v4312 = vpop.f32.mrb[0].mxu0
        %4313 = vmatprep.mubr.bf16.mxu0 %v3934
        %4314 = vmatmul.mubr.bf16.gmra.mrb[0].mxu0 %v3933
        %v4315 = vpop.f32.mrb[0].mxu0
        %v4316 = vadd.f32 0.0, %v4315
        %v4317 = vpop.f32.mrb[0].mxu0
        %v4318 = vpop.f32.mrb[0].mxu0
        %v4319 = vadd.f32 0.0, %v4318
        %v4320 = vpop.f32.mrb[0].mxu0
        %4321 = vmatprep.mubr.bf16.mxu0 %v3938
        %4322 = vmatmul.mubr.bf16.gmra.mrb[0].mxu0 %v3937
        %v4323 = vpop.f32.mrb[0].mxu0
        %v4324 = vadd.f32 0.0, %v4323
        %v4325 = vpop.f32.mrb[0].mxu0
        %v4326 = vpop.f32.mrb[0].mxu0
        %v4327 = vadd.f32 0.0, %v4326
        %v4328 = vpop.f32.mrb[0].mxu0
        %4329 = vmatprep.mubr.bf16.mxu0 %v3942
        %4330 = vmatmul.mubr.bf16.gmra.mrb[0].mxu0 %v3941
        %v4331 = vpop.f32.mrb[0].mxu0
        %v4332 = vadd.f32 0.0, %v4331
        %v4333 = vpop.f32.mrb[0].mxu0
        %v4334 = vpop.f32.mrb[0].mxu0
        %v4335 = vadd.f32 0.0, %v4334
        %v4336 = vpop.f32.mrb[0].mxu0
        %4337 = vmatprep.mubr.bf16.mxu0 %v3946
        %4338 = vmatmul.mubr.bf16.gmra.mrb[0].mxu0 %v3945
        %v4339 = vpop.f32.mrb[0].mxu0
        %v4340 = vadd.f32 0.0, %v4339
        %v4341 = vpop.f32.mrb[0].mxu0
        %v4342 = vpop.f32.mrb[0].mxu0
        %v4343 = vadd.f32 0.0, %v4342
        %v4344 = vpop.f32.mrb[0].mxu0
        %4345 = vmatprep.mubr.bf16.mxu0 %v3950
        %4346 = vmatmul.mubr.bf16.gmra.mrb[0].mxu0 %v3949
        %v4347 = vpop.f32.mrb[0].mxu0
        %v4348 = vadd.f32 0.0, %v4347
        %v4349 = vpop.f32.mrb[0].mxu0
        %v4350 = vpop.f32.mrb[0].mxu0
        %v4351 = vadd.f32 0.0, %v4350
        %v4352 = vpop.f32.mrb[0].mxu0
        %4353 = vmatprep.mubr.bf16.mxu0 %v3954
        %4354 = vmatmul.mubr.bf16.gmra.mrb[0].mxu0 %v3953
        %v4355 = vpop.f32.mrb[0].mxu0
        %v4356 = vadd.f32 0.0, %v4355
        %v4357 = vpop.f32.mrb[0].mxu0
        %v4358 = vpop.f32.mrb[0].mxu0
        %v4359 = vadd.f32 0.0, %v4358
        %v4360 = vpop.f32.mrb[0].mxu0
        %4361 = vmatprep.mubr.bf16.mxu0 %v3958
        %4362 = vmatmul.mubr.bf16.gmra.mrb[0].mxu0 %v3957
        %v4363 = vpop.f32.mrb[0].mxu0
        %v4364 = vadd.f32 0.0, %v4363
        %v4365 = vpop.f32.mrb[0].mxu0
        %v4366 = vpop.f32.mrb[0].mxu0
        %v4367 = vadd.f32 0.0, %v4366
        %v4368 = vpop.f32.mrb[0].mxu0
        %4369 = vmatprep.mubr.bf16.mxu0 %v3962
        %4370 = vmatmul.mubr.bf16.gmra.mrb[0].mxu0 %v3961
        %v4371 = vpop.f32.mrb[0].mxu0
        %v4372 = vadd.f32 0.0, %v4371
        %v4373 = vpop.f32.mrb[0].mxu0
        %v4374 = vpop.f32.mrb[0].mxu0
        %v4375 = vadd.f32 0.0, %v4374
        %v4376 = vpop.f32.mrb[0].mxu0
        %4377 = vmatprep.mubr.bf16.mxu0 %v3966
        %4378 = vmatmul.mubr.bf16.gmra.mrb[0].mxu0 %v3965
        %v4379 = vpop.f32.mrb[0].mxu0
        %v4380 = vadd.f32 0.0, %v4379
        %v4381 = vpop.f32.mrb[0].mxu0
        %v4382 = vpop.f32.mrb[0].mxu0
        %v4383 = vadd.f32 0.0, %v4382
        %v4384 = vpop.f32.mrb[0].mxu0
        %4385 = vdwg.mxu0
        %4386 = vmatprep.subr.bf16.mxu0 0
        %4387 = vmatpush1.bf16.msra.mxu0 %v4177
        %4388 = vmatprep.subr.bf16.mxu0 0
        %4389 = vmatpush1.bf16.msra.mxu0 %v4178
        %4390 = vmatprep.subr.bf16.mxu0 0
        %4391 = vmatpush1.bf16.msra.mxu0 %v4179
        %4392 = vmatprep.subr.bf16.mxu0 0
        %4393 = vmatpush1.bf16.msra.mxu0 %v4180
        %4394 = vmatprep.subr.bf16.mxu0 0
        %4395 = vmatpush1.bf16.msra.mxu0 %v4181
        %4396 = vmatprep.subr.bf16.mxu0 0
        %4397 = vmatpush1.bf16.msra.mxu0 %v4182
        %4398 = vmatprep.subr.bf16.mxu0 0
        %4399 = vmatpush1.bf16.msra.mxu0 %v4183
        %4400 = vmatprep.subr.bf16.mxu0 0
        %4401 = vmatpush1.bf16.msra.mxu0 %v4184
        %4402 = vmatprep.subr.bf16.mxu0 0
        %4403 = vmatpush1.bf16.msra.mxu0 %v4185
        %4404 = vmatprep.subr.bf16.mxu0 0
        %4405 = vmatpush1.bf16.msra.mxu0 %v4186
        %4406 = vmatprep.subr.bf16.mxu0 0
        %4407 = vmatpush1.bf16.msra.mxu0 %v4187
        %4408 = vmatprep.subr.bf16.mxu0 0
        %4409 = vmatpush1.bf16.msra.mxu0 %v4188
        %4410 = vmatprep.subr.bf16.mxu0 0
        %4411 = vmatpush1.bf16.msra.mxu0 %v4189
        %4412 = vmatprep.subr.bf16.mxu0 0
        %4413 = vmatpush1.bf16.msra.mxu0 %v4190
        %4414 = vmatprep.subr.bf16.mxu0 0
        %4415 = vmatpush1.bf16.msra.mxu0 %v4191
        %4416 = vmatprep.subr.bf16.mxu0 0
        %4417 = vmatpush1.bf16.msra.mxu0 %v4192
        %4418 = vmatprep.mubr.bf16.mxu0 %v3908
        %4419 = vmatmul.mubr.bf16.gmra.mrb[0].mxu0 %v3907
        %v4420 = vpop.f32.mrb[0].mxu0
        %v4421 = vadd.f32 %v4260, %v4420
        %v4422 = vpop.f32.mrb[0].mxu0
        %v4423 = vpop.f32.mrb[0].mxu0
        %v4424 = vadd.f32 %v4263, %v4423
        %v4425 = vpop.f32.mrb[0].mxu0
        %4426 = vmatprep.mubr.bf16.mxu0 %v3912
        %4427 = vmatmul.mubr.bf16.gmra.mrb[0].mxu0 %v3911
        %v4428 = vpop.f32.mrb[0].mxu0
        %v4429 = vadd.f32 %v4268, %v4428
        %v4430 = vpop.f32.mrb[0].mxu0
        %v4431 = vpop.f32.mrb[0].mxu0
        %v4432 = vadd.f32 %v4271, %v4431
        %v4433 = vpop.f32.mrb[0].mxu0
        %4434 = vmatprep.mubr.bf16.mxu0 %v3916
        %4435 = vmatmul.mubr.bf16.gmra.mrb[0].mxu0 %v3915
        %v4436 = vpop.f32.mrb[0].mxu0
        %v4437 = vadd.f32 %v4276, %v4436
        %v4438 = vpop.f32.mrb[0].mxu0
        %v4439 = vpop.f32.mrb[0].mxu0
        %v4440 = vadd.f32 %v4279, %v4439
        %v4441 = vpop.f32.mrb[0].mxu0
        %4442 = vmatprep.mubr.bf16.mxu0 %v3920
        %4443 = vmatmul.mubr.bf16.gmra.mrb[0].mxu0 %v3919
        %v4444 = vpop.f32.mrb[0].mxu0
        %v4445 = vadd.f32 %v4284, %v4444
        %v4446 = vpop.f32.mrb[0].mxu0
        %v4447 = vpop.f32.mrb[0].mxu0
        %v4448 = vadd.f32 %v4287, %v4447
        %v4449 = vpop.f32.mrb[0].mxu0
        %4450 = vmatprep.mubr.bf16.mxu0 %v3924
        %4451 = vmatmul.mubr.bf16.gmra.mrb[0].mxu0 %v3923
        %v4452 = vpop.f32.mrb[0].mxu0
        %v4453 = vadd.f32 %v4292, %v4452
        %v4454 = vpop.f32.mrb[0].mxu0
        %v4455 = vpop.f32.mrb[0].mxu0
        %v4456 = vadd.f32 %v4295, %v4455
        %v4457 = vpop.f32.mrb[0].mxu0
        %4458 = vmatprep.mubr.bf16.mxu0 %v3928
        %4459 = vmatmul.mubr.bf16.gmra.mrb[0].mxu0 %v3927
        %v4460 = vpop.f32.mrb[0].mxu0
        %v4461 = vadd.f32 %v4300, %v4460
        %v4462 = vpop.f32.mrb[0].mxu0
        %v4463 = vpop.f32.mrb[0].mxu0
        %v4464 = vadd.f32 %v4303, %v4463
        %v4465 = vpop.f32.mrb[0].mxu0
        %4466 = vmatprep.mubr.bf16.mxu0 %v3932
        %4467 = vmatmul.mubr.bf16.gmra.mrb[0].mxu0 %v3931
        %v4468 = vpop.f32.mrb[0].mxu0
        %v4469 = vadd.f32 %v4308, %v4468
        %v4470 = vpop.f32.mrb[0].mxu0
        %v4471 = vpop.f32.mrb[0].mxu0
        %v4472 = vadd.f32 %v4311, %v4471
        %v4473 = vpop.f32.mrb[0].mxu0
        %4474 = vmatprep.mubr.bf16.mxu0 %v3936
        %4475 = vmatmul.mubr.bf16.gmra.mrb[0].mxu0 %v3935
        %v4476 = vpop.f32.mrb[0].mxu0
        %v4477 = vadd.f32 %v4316, %v4476
        %v4478 = vpop.f32.mrb[0].mxu0
        %v4479 = vpop.f32.mrb[0].mxu0
        %v4480 = vadd.f32 %v4319, %v4479
        %v4481 = vpop.f32.mrb[0].mxu0
        %4482 = vmatprep.mubr.bf16.mxu0 %v3940
        %4483 = vmatmul.mubr.bf16.gmra.mrb[0].mxu0 %v3939
        %v4484 = vpop.f32.mrb[0].mxu0
        %v4485 = vadd.f32 %v4324, %v4484
        %v4486 = vpop.f32.mrb[0].mxu0
        %v4487 = vpop.f32.mrb[0].mxu0
        %v4488 = vadd.f32 %v4327, %v4487
        %v4489 = vpop.f32.mrb[0].mxu0
        %4490 = vmatprep.mubr.bf16.mxu0 %v3944
        %4491 = vmatmul.mubr.bf16.gmra.mrb[0].mxu0 %v3943
        %v4492 = vpop.f32.mrb[0].mxu0
        %v4493 = vadd.f32 %v4332, %v4492
        %v4494 = vpop.f32.mrb[0].mxu0
        %v4495 = vpop.f32.mrb[0].mxu0
        %v4496 = vadd.f32 %v4335, %v4495
        %v4497 = vpop.f32.mrb[0].mxu0
        %4498 = vmatprep.mubr.bf16.mxu0 %v3948
        %4499 = vmatmul.mubr.bf16.gmra.mrb[0].mxu0 %v3947
        %v4500 = vpop.f32.mrb[0].mxu0
        %v4501 = vadd.f32 %v4340, %v4500
        %v4502 = vpop.f32.mrb[0].mxu0
        %v4503 = vpop.f32.mrb[0].mxu0
        %v4504 = vadd.f32 %v4343, %v4503
        %v4505 = vpop.f32.mrb[0].mxu0
        %4506 = vmatprep.mubr.bf16.mxu0 %v3952
        %4507 = vmatmul.mubr.bf16.gmra.mrb[0].mxu0 %v3951
        %v4508 = vpop.f32.mrb[0].mxu0
        %v4509 = vadd.f32 %v4348, %v4508
        %v4510 = vpop.f32.mrb[0].mxu0
        %v4511 = vpop.f32.mrb[0].mxu0
        %v4512 = vadd.f32 %v4351, %v4511
        %v4513 = vpop.f32.mrb[0].mxu0
        %4514 = vmatprep.mubr.bf16.mxu0 %v3956
        %4515 = vmatmul.mubr.bf16.gmra.mrb[0].mxu0 %v3955
        %v4516 = vpop.f32.mrb[0].mxu0
        %v4517 = vadd.f32 %v4356, %v4516
        %v4518 = vpop.f32.mrb[0].mxu0
        %v4519 = vpop.f32.mrb[0].mxu0
        %v4520 = vadd.f32 %v4359, %v4519
        %v4521 = vpop.f32.mrb[0].mxu0
        %4522 = vmatprep.mubr.bf16.mxu0 %v3960
        %4523 = vmatmul.mubr.bf16.gmra.mrb[0].mxu0 %v3959
        %v4524 = vpop.f32.mrb[0].mxu0
        %v4525 = vadd.f32 %v4364, %v4524
        %v4526 = vpop.f32.mrb[0].mxu0
        %v4527 = vpop.f32.mrb[0].mxu0
        %v4528 = vadd.f32 %v4367, %v4527
        %v4529 = vpop.f32.mrb[0].mxu0
        %4530 = vmatprep.mubr.bf16.mxu0 %v3964
        %4531 = vmatmul.mubr.bf16.gmra.mrb[0].mxu0 %v3963
        %v4532 = vpop.f32.mrb[0].mxu0
        %v4533 = vadd.f32 %v4372, %v4532
        %v4534 = vpop.f32.mrb[0].mxu0
        %v4535 = vpop.f32.mrb[0].mxu0
        %v4536 = vadd.f32 %v4375, %v4535
        %v4537 = vpop.f32.mrb[0].mxu0
        %4538 = vmatprep.mubr.bf16.mxu0 %v3968
        %4539 = vmatmul.mubr.bf16.gmra.mrb[0].mxu0 %v3967
        %v4540 = vpop.f32.mrb[0].mxu0
        %v4541 = vadd.f32 %v4380, %v4540
        %v4542 = vpop.f32.mrb[0].mxu0
        %v4543 = vpop.f32.mrb[0].mxu0
        %v4544 = vadd.f32 %v4383, %v4543
        %v4545 = vpop.f32.mrb[0].mxu0
        %4546 = vdwg.mxu0
        %v4547 = vpack.c.bf16 %v4424, %v4421
        %v4548 = vpack.c.bf16 %v4432, %v4429
        %v4549 = vpack.c.bf16 %v4440, %v4437
        %v4550 = vpack.c.bf16 %v4448, %v4445
        %v4551 = vpack.c.bf16 %v4456, %v4453
        %v4552 = vpack.c.bf16 %v4464, %v4461
        %v4553 = vpack.c.bf16 %v4472, %v4469
        %v4554 = vpack.c.bf16 %v4480, %v4477
        %v4555 = vpack.c.bf16 %v4488, %v4485
        %v4556 = vpack.c.bf16 %v4496, %v4493
        %v4557 = vpack.c.bf16 %v4504, %v4501
        %v4558 = vpack.c.bf16 %v4512, %v4509
        %v4559 = vpack.c.bf16 %v4520, %v4517
        %v4560 = vpack.c.bf16 %v4528, %v4525
        %v4561 = vpack.c.bf16 %v4536, %v4533
        %v4562 = vpack.c.bf16 %v4544, %v4541
        %v4563 = vld [vmem:[%s7] sm:$0x1]
        %v4565 = vlaneseq
        %v4566 = vshrl.u32 %v4565, 7
        %v4567 = vsub.s32 0, %v4566
        %v4568 = vrot.slane %v4563, %v4567
        %4570 = vmatprep.subr.bf16.mxu0 0
        %4571 = vmatpush1.bf16.msra.mxu0 %v4547
        %4572 = vmatprep.subr.bf16.mxu0 0
        %4573 = vmatpush1.bf16.msra.mxu0 %v4548
        %4574 = vmatprep.subr.bf16.mxu0 0
        %4575 = vmatpush1.bf16.msra.mxu0 %v4549
        %4576 = vmatprep.subr.bf16.mxu0 0
        %4577 = vmatpush1.bf16.msra.mxu0 %v4550
        %4578 = vmatprep.subr.bf16.mxu0 0
        %4579 = vmatpush1.bf16.msra.mxu0 %v4551
        %4580 = vmatprep.subr.bf16.mxu0 0
        %4581 = vmatpush1.bf16.msra.mxu0 %v4552
        %4582 = vmatprep.subr.bf16.mxu0 0
        %4583 = vmatpush1.bf16.msra.mxu0 %v4553
        %4584 = vmatprep.subr.bf16.mxu0 0
        %4585 = vmatpush1.bf16.msra.mxu0 %v4554
        %4586 = vmatprep.subr.bf16.mxu0 0
        %4587 = vmatpush1.bf16.msra.mxu0 %v4555
        %4588 = vmatprep.subr.bf16.mxu0 0
        %4589 = vmatpush1.bf16.msra.mxu0 %v4556
        %4590 = vmatprep.subr.bf16.mxu0 0
        %4591 = vmatpush1.bf16.msra.mxu0 %v4557
        %4592 = vmatprep.subr.bf16.mxu0 0
        %4593 = vmatpush1.bf16.msra.mxu0 %v4558
        %4594 = vmatprep.subr.bf16.mxu0 0
        %4595 = vmatpush1.bf16.msra.mxu0 %v4559
        %4596 = vmatprep.subr.bf16.mxu0 0
        %4597 = vmatpush1.bf16.msra.mxu0 %v4560
        %4598 = vmatprep.subr.bf16.mxu0 0
        %4599 = vmatpush1.bf16.msra.mxu0 %v4561
        %4600 = vmatprep.subr.bf16.mxu0 0
        %4601 = vmatpush1.bf16.msra.mxu0 %v4562
        %4602 = vmatprep.mubr.bf16.mxu0 %v1124
        %4603 = vmatmul.mubr.bf16.gmra.mrb[0].mxu0 %v1123
        %v4604 = vpop.f32.mrb[0].mxu0
        %v4605 = vadd.f32 %v4568, %v4604
        %v4606 = vpop.f32.mrb[0].mxu0
        %v4607 = vpop.f32.mrb[0].mxu0
        %v4608 = vadd.f32 %v4568, %v4607
        %v4609 = vpop.f32.mrb[0].mxu0
        %4610 = vmatprep.mubr.bf16.mxu0 %v1126
        %4611 = vmatmul.mubr.bf16.gmra.mrb[0].mxu0 %v1125
        %v4612 = vpop.f32.mrb[0].mxu0
        %v4613 = vadd.f32 %v4568, %v4612
        %v4614 = vpop.f32.mrb[0].mxu0
        %v4615 = vpop.f32.mrb[0].mxu0
        %v4616 = vadd.f32 %v4568, %v4615
        %v4617 = vpop.f32.mrb[0].mxu0
        %4618 = vmatprep.mubr.bf16.mxu0 %v1128
        %4619 = vmatmul.mubr.bf16.gmra.mrb[0].mxu0 %v1127
        %v4620 = vpop.f32.mrb[0].mxu0
        %v4621 = vadd.f32 %v4568, %v4620
        %v4622 = vpop.f32.mrb[0].mxu0
        %v4623 = vpop.f32.mrb[0].mxu0
        %v4624 = vadd.f32 %v4568, %v4623
        %v4625 = vpop.f32.mrb[0].mxu0
        %4626 = vmatprep.mubr.bf16.mxu0 %v1130
        %4627 = vmatmul.mubr.bf16.gmra.mrb[0].mxu0 %v1129
        %v4628 = vpop.f32.mrb[0].mxu0
        %v4629 = vadd.f32 %v4568, %v4628
        %v4630 = vpop.f32.mrb[0].mxu0
        %v4631 = vpop.f32.mrb[0].mxu0
        %v4632 = vadd.f32 %v4568, %v4631
        %v4633 = vpop.f32.mrb[0].mxu0
        %4634 = vmatprep.mubr.bf16.mxu0 %v1132
        %4635 = vmatmul.mubr.bf16.gmra.mrb[0].mxu0 %v1131
        %v4636 = vpop.f32.mrb[0].mxu0
        %v4637 = vadd.f32 %v4568, %v4636
        %v4638 = vpop.f32.mrb[0].mxu0
        %v4639 = vpop.f32.mrb[0].mxu0
        %v4640 = vadd.f32 %v4568, %v4639
        %v4641 = vpop.f32.mrb[0].mxu0
        %4642 = vmatprep.mubr.bf16.mxu0 %v1134
        %4643 = vmatmul.mubr.bf16.gmra.mrb[0].mxu0 %v1133
        %v4644 = vpop.f32.mrb[0].mxu0
        %v4645 = vadd.f32 %v4568, %v4644
        %v4646 = vpop.f32.mrb[0].mxu0
        %v4647 = vpop.f32.mrb[0].mxu0
        %v4648 = vadd.f32 %v4568, %v4647
        %v4649 = vpop.f32.mrb[0].mxu0
        %4650 = vmatprep.mubr.bf16.mxu0 %v1136
        %4651 = vmatmul.mubr.bf16.gmra.mrb[0].mxu0 %v1135
        %v4652 = vpop.f32.mrb[0].mxu0
        %v4653 = vadd.f32 %v4568, %v4652
        %v4654 = vpop.f32.mrb[0].mxu0
        %v4655 = vpop.f32.mrb[0].mxu0
        %v4656 = vadd.f32 %v4568, %v4655
        %v4657 = vpop.f32.mrb[0].mxu0
        %4658 = vmatprep.mubr.bf16.mxu0 %v1138
        %4659 = vmatmul.mubr.bf16.gmra.mrb[0].mxu0 %v1137
        %v4660 = vpop.f32.mrb[0].mxu0
        %v4661 = vadd.f32 %v4568, %v4660
        %v4662 = vpop.f32.mrb[0].mxu0
        %v4663 = vpop.f32.mrb[0].mxu0
        %v4664 = vadd.f32 %v4568, %v4663
        %v4665 = vpop.f32.mrb[0].mxu0
        %4666 = vmatprep.mubr.bf16.mxu0 %v1140
        %4667 = vmatmul.mubr.bf16.gmra.mrb[0].mxu0 %v1139
        %v4668 = vpop.f32.mrb[0].mxu0
        %v4669 = vadd.f32 %v4568, %v4668
        %v4670 = vpop.f32.mrb[0].mxu0
        %v4671 = vpop.f32.mrb[0].mxu0
        %v4672 = vadd.f32 %v4568, %v4671
        %v4673 = vpop.f32.mrb[0].mxu0
        %4674 = vmatprep.mubr.bf16.mxu0 %v1142
        %4675 = vmatmul.mubr.bf16.gmra.mrb[0].mxu0 %v1141
        %v4676 = vpop.f32.mrb[0].mxu0
        %v4677 = vadd.f32 %v4568, %v4676
        %v4678 = vpop.f32.mrb[0].mxu0
        %v4679 = vpop.f32.mrb[0].mxu0
        %v4680 = vadd.f32 %v4568, %v4679
        %v4681 = vpop.f32.mrb[0].mxu0
        %4682 = vmatprep.mubr.bf16.mxu0 %v1144
        %4683 = vmatmul.mubr.bf16.gmra.mrb[0].mxu0 %v1143
        %v4684 = vpop.f32.mrb[0].mxu0
        %v4685 = vadd.f32 %v4568, %v4684
        %v4686 = vpop.f32.mrb[0].mxu0
        %v4687 = vpop.f32.mrb[0].mxu0
        %v4688 = vadd.f32 %v4568, %v4687
        %v4689 = vpop.f32.mrb[0].mxu0
        %4690 = vmatprep.mubr.bf16.mxu0 %v1146
        %4691 = vmatmul.mubr.bf16.gmra.mrb[0].mxu0 %v1145
        %v4692 = vpop.f32.mrb[0].mxu0
        %v4693 = vadd.f32 %v4568, %v4692
        %v4694 = vpop.f32.mrb[0].mxu0
        %v4695 = vpop.f32.mrb[0].mxu0
        %v4696 = vadd.f32 %v4568, %v4695
        %v4697 = vpop.f32.mrb[0].mxu0
        %4698 = vmatprep.mubr.bf16.mxu0 %v1148
        %4699 = vmatmul.mubr.bf16.gmra.mrb[0].mxu0 %v1147
        %v4700 = vpop.f32.mrb[0].mxu0
        %v4701 = vadd.f32 %v4568, %v4700
        %v4702 = vpop.f32.mrb[0].mxu0
        %v4703 = vpop.f32.mrb[0].mxu0
        %v4704 = vadd.f32 %v4568, %v4703
        %v4705 = vpop.f32.mrb[0].mxu0
        %4706 = vmatprep.mubr.bf16.mxu0 %v1150
        %4707 = vmatmul.mubr.bf16.gmra.mrb[0].mxu0 %v1149
        %v4708 = vpop.f32.mrb[0].mxu0
        %v4709 = vadd.f32 %v4568, %v4708
        %v4710 = vpop.f32.mrb[0].mxu0
        %v4711 = vpop.f32.mrb[0].mxu0
        %v4712 = vadd.f32 %v4568, %v4711
        %v4713 = vpop.f32.mrb[0].mxu0
        %4714 = vmatprep.mubr.bf16.mxu0 %v1152
        %4715 = vmatmul.mubr.bf16.gmra.mrb[0].mxu0 %v1151
        %v4716 = vpop.f32.mrb[0].mxu0
        %v4717 = vadd.f32 %v4568, %v4716
        %v4718 = vpop.f32.mrb[0].mxu0
        %v4719 = vpop.f32.mrb[0].mxu0
        %v4720 = vadd.f32 %v4568, %v4719
        %v4721 = vpop.f32.mrb[0].mxu0
        %4722 = vmatprep.mubr.bf16.mxu0 %v1154
        %4723 = vmatmul.mubr.bf16.gmra.mrb[0].mxu0 %v1153
        %v4724 = vpop.f32.mrb[0].mxu0
        %v4725 = vadd.f32 %v4568, %v4724
        %v4726 = vpop.f32.mrb[0].mxu0
        %v4727 = vpop.f32.mrb[0].mxu0
        %v4728 = vadd.f32 %v4568, %v4727
        %v4729 = vpop.f32.mrb[0].mxu0
        %4730 = vdwg.mxu0
        %4731 = vst [vmem:[%s329] sm:$0xff] %v4605
        %4732 = vst [vmem:[%s329 + $0x8] sm:$0xff] %v4608
        %4733 = vst [vmem:[%s329 + $0x10] sm:$0xff] %v4613
        %4734 = vst [vmem:[%s329 + $0x18] sm:$0xff] %v4616
        %4735 = vst [vmem:[%s329 + $0x20] sm:$0xff] %v4621
        %4736 = vst [vmem:[%s329 + $0x28] sm:$0xff] %v4624
        %4737 = vst [vmem:[%s329 + $0x30] sm:$0xff] %v4629
        %4738 = vst [vmem:[%s329 + $0x38] sm:$0xff] %v4632
        %4739 = vst [vmem:[%s329 + $0x40] sm:$0xff] %v4637
        %4740 = vst [vmem:[%s329 + $0x48] sm:$0xff] %v4640
        %4741 = vst [vmem:[%s329 + $0x50] sm:$0xff] %v4645
        %4742 = vst [vmem:[%s329 + $0x58] sm:$0xff] %v4648
        %4743 = vst [vmem:[%s329 + $0x60] sm:$0xff] %v4653
        %4744 = vst [vmem:[%s329 + $0x68] sm:$0xff] %v4656
        %4745 = vst [vmem:[%s329 + $0x70] sm:$0xff] %v4661
        %4746 = vst [vmem:[%s329 + $0x78] sm:$0xff] %v4664
        %4747 = vst [vmem:[%s329 + $0x80] sm:$0xff] %v4669
        %4748 = vst [vmem:[%s329 + $0x88] sm:$0xff] %v4672
        %4749 = vst [vmem:[%s329 + $0x90] sm:$0xff] %v4677
        %4750 = vst [vmem:[%s329 + $0x98] sm:$0xff] %v4680
        %4751 = vst [vmem:[%s329 + $0xa0] sm:$0xff] %v4685
        %4752 = vst [vmem:[%s329 + $0xa8] sm:$0xff] %v4688
        %4753 = vst [vmem:[%s329 + $0xb0] sm:$0xff] %v4693
        %4754 = vst [vmem:[%s329 + $0xb8] sm:$0xff] %v4696
        %4755 = vst [vmem:[%s329 + $0xc0] sm:$0xff] %v4701
        %4756 = vst [vmem:[%s329 + $0xc8] sm:$0xff] %v4704
        %4757 = vst [vmem:[%s329 + $0xd0] sm:$0xff] %v4709
        %4758 = vst [vmem:[%s329 + $0xd8] sm:$0xff] %v4712
        %4759 = vst [vmem:[%s329 + $0xe0] sm:$0xff] %v4717
        %4760 = vst [vmem:[%s329 + $0xe8] sm:$0xff] %v4720
        %4761 = vst [vmem:[%s329 + $0xf0] sm:$0xff] %v4725
        %4762 = vst [vmem:[%s329 + $0xf8] sm:$0xff] %v4728
        %s4763 = sand.u32 %s205, 1
        %s4764 = scalar_lea.sflag [#allocation4], %s4763
        %s4765 = sand.u32 %s205, 1
        %s4766 = smul.addr %s4765, 256
        %s4767 = scalar_lea.vmem [#allocation7], %s4766
        // Predicated region
        $region61: #{tpu_custom_call.1} parent=51 // pred_check
          %p4768 = pneg %p215
        $region62: #{tpu_custom_call.1} parent=51 // pred_check_branch
          %4770 = sbr.rel (%p4768) target = $region64
        $region63: #{tpu_custom_call.1} parent=51 // pred_region
          %s4771 = smul.u32 32, %s24
          %s4773 = ssub.s32 4096, 4096
          %4774 = vsyncadd %s4764, %s4773
          %s4775 = smul.addr %s4771, 128
          %s4776 = scalar_lea.hbm %s8, %s4775
          %s4777 = sshll.u32 %s4767, 4
          %s4778 = int_to_ptr.vmem [resolvable:$true] %s4777
          %4783 = dma.vmem_to_hbm [thread:$0]  %s4778, 4096, %s4776, %s4764, 128, 128, 8
        $region64: #{tpu_custom_call.1} parent=51 // pred_fallthru
          _
      $region52: #{tpu_custom_call.1} parent=5 // pred_fallthru
        _
      %p4784 = scmp.le.s32.totalorder 2, %s19
      // Predicated region
      $region65: #{tpu_custom_call.1} parent=5 // pred_check
        %p4785 = pneg %p4784
      $region66: #{tpu_custom_call.1} parent=5 // pred_check_branch
        %4787 = sbr.rel (%p4785) target = $region68
      $region67: #{tpu_custom_call.1} parent=5 // pred_region
        %s4788 = ssub.s32 %s19, 2
        // Predicated region
        $region69: #{tpu_custom_call.1} parent=67 // pred_check
          %p4789 = pneg %p221
        $region70: #{tpu_custom_call.1} parent=67 // pred_check_branch
          %4791 = sbr.rel (%p4789) target = $region72
        $region71: #{tpu_custom_call.1} parent=67 // pred_region
          %s4792 = sand.u32 %s206, 1
          %s4793 = scalar_lea.sflag [#allocation4], %s4792
          %s4794 = sand.u32 %s206, 1
          %s4795 = smul.addr %s4794, 256
          %s4796 = scalar_lea.vmem [#allocation7], %s4795
          %4797 = dma.done %s4793, 4096
        $region72: #{tpu_custom_call.1} parent=67 // pred_fallthru
          _
      $region68: #{tpu_custom_call.1} parent=5 // pred_fallthru
        _
    $region6: #{tpu_custom_call.1} parent=1 // loop_footer
      %s23 = sadd.s32 1, %s19
    $region7: #{tpu_custom_call.1} parent=1 // loop_footer_branch
      %18 = sbr.rel target = $region3
    $region8: #{tpu_custom_call.1} parent=1 // loop_exit
      _
    %4798 = vsyncpa [#allocation3], 1
    %s4799 = scalar_lea.sflag [#allocation3], 1
    %4800 = vsyncpa %s4799, 1
    %4801 = vsyncpa [#allocation6], 1
    %4802 = vsyncpa [#allocation4], 1
    %s4803 = scalar_lea.sflag [#allocation4], 1
    %4804 = vsyncpa %s4803, 1

</llo_original>
